<compile_context>
chip_gen: v7x
topology: tpu7x:2x2x1
jax: 0.10.0
libtpu: 0.0.40
codegen_flags: <defaults>
</compile_context>

<pallas_src>
import jax
import jax.numpy as jnp
from jax import lax
from jax.experimental import pallas as pl
from jax.experimental.pallas import tpu as pltpu

MASK_INFTY_APPROX = 1e30


def _vq_attn_kernel(x_ref, wqkv_ref, cb_ref, wo_ref, out_ref, ctx_ref):
    """One grid step (= one batch element): out = x + VQAttention(x)."""
    f32 = jnp.float32
    bf16 = jnp.bfloat16
    hi = lax.Precision.HIGHEST

    x = x_ref[0]                                   # (L, D) f32
    L, D = x.shape
    H, S, dk = cb_ref.shape

    # ---- fused QKV projection: one (L,D)x(D,3D) bf16 MXU matmul -----------
    x_b = x.astype(bf16)
    qkv = jnp.dot(x_b, wqkv_ref[...], preferred_element_type=f32)   # (L, 3D)

    # ---- per-head VQ + causal attention (H is small/static: unrolled) -----
    # TODO(synk): for long sequences (esp. v7x with 64 MiB VMEM) tile queries
    # and KV flash-style with online softmax instead of materializing (L, L)
    # logits, and use a fori_loop over heads to bound vreg live ranges.
    for h in range(H):
        lo = h * dk
        q = qkv[:, lo:lo + dk]                     # (L, dk) f32
        k = qkv[:, D + lo:D + lo + dk]             # (L, dk) f32
        v = qkv[:, 2 * D + lo:2 * D + lo + dk]     # (L, dk) f32
        cb = cb_ref[h]                             # (S, dk) f32

        # LearnableVQ.get_shortcodes: squared distances + first-index argmin.
        # Kept f32/HIGHEST so the discrete codeword choice is stable; this
        # matmul is tiny (L x dk x S) next to the bf16 MXU work above.
        kc = lax.dot_general(k, cb, (((1,), (1,)), ((), ())),
                             preferred_element_type=f32, precision=hi)  # (L, S)
        dist2 = (jnp.sum(k * k, axis=-1, keepdims=True)
                 - 2.0 * kc
                 + jnp.sum(cb * cb, axis=-1)[None, :])                  # (L, S)
        dmin = jnp.min(dist2, axis=-1, keepdims=True)                   # (L, 1)
        col = lax.broadcasted_iota(jnp.int32, (L, S), 1)
        # first index achieving the minimum (matches torch.argmin tie-break)
        codes = jnp.min(jnp.where(dist2 <= dmin, col, S), axis=-1,
                        keepdims=True)                                  # (L, 1)
        one_hot = (col == codes).astype(f32)                            # (L, S)
        # get_codewords: exact row gather from the codebook.
        k_hat = jnp.dot(one_hot, cb, preferred_element_type=f32,
                        precision=hi)                                   # (L, dk)

        # Causal softmax attention against quantized keys: bf16 MXU operands,
        # f32 accumulation; transposed contraction via dimension_numbers
        # (no materialized k_hat transpose).
        logits = lax.dot_general(q.astype(bf16), k_hat.astype(bf16),
                                 (((1,), (1,)), ((), ())),
                                 preferred_element_type=f32) * (dk ** -0.5)
        row_i = lax.broadcasted_iota(jnp.int32, (L, L), 0)
        col_i = lax.broadcasted_iota(jnp.int32, (L, L), 1)
        logits = jnp.where(col_i <= row_i, logits, -MASK_INFTY_APPROX)
        m = jnp.max(logits, axis=-1, keepdims=True)
        p = jnp.exp(logits - m)
        attn = p / jnp.sum(p, axis=-1, keepdims=True)
        # TODO(synk): attention/residual dropout and the EMA codebook update /
        # commit loss are train-only (stochastic / buffer-mutating); identity
        # or zero in eval mode.
        ctx_h = jnp.dot(attn.astype(bf16), v.astype(bf16),
                        preferred_element_type=f32)                     # (L, dk)
        ctx_ref[:, lo:lo + dk] = ctx_h             # assemble (L, D) context

    # ---- fused output projection + residual: one write per batch ----------
    out = jnp.dot(ctx_ref[...].astype(bf16), wo_ref[...],
                  preferred_element_type=f32)                           # (L, D)
    out_ref[...] = (x + out)[None, :, :]


def vq_attention_block(x, wqkv, codebook, wo):
    """Computes x + VQAttention(x) in eval mode (all heads fused per batch)."""
    B, L, D = x.shape
    H, S, dk = codebook.shape
    return pl.pallas_call(
        _vq_attn_kernel,
        out_shape=jax.ShapeDtypeStruct((B, L, D), jnp.float32),
        grid_spec=pltpu.PrefetchScalarGridSpec(
            num_scalar_prefetch=0,
            grid=(B,),
            in_specs=[
                pl.BlockSpec((1, L, D), lambda b: (b, 0, 0)),
                # weights: full-array blocks, constant index_map -> resident,
                # fetched once (not re-DMA'd per grid step).
                pl.BlockSpec((D, 3 * D), lambda b: (0, 0)),
                pl.BlockSpec((H, S, dk), lambda b: (0, 0, 0)),
                pl.BlockSpec((D, D), lambda b: (0, 0)),
            ],
            out_specs=pl.BlockSpec((1, L, D), lambda b: (b, 0, 0)),
            scratch_shapes=[pltpu.VMEM((L, D), jnp.float32)],
        ),
        compiler_params=pltpu.CompilerParams(
            dimension_semantics=("parallel",),
            vmem_limit_bytes=48 * 1024 * 1024,
        ),
    )(x, wqkv, codebook, wo)


def vq_transformer_layer(x, params1, params2):
    """Eval-mode VQTransformerLayer.forward: x = x + attn1(x); x = x + attn2(x)."""
    x = vq_attention_block(x, *params1)
    x = vq_attention_block(x, *params2)
    # return_metrics=True yields an empty metrics dict; losses are 0 in eval.
    return x, dict(aux_loss=None, metrics={})


# --------------------------------------------------------------------------
# parameter construction + pure-JAX reference (for the self-test)
# --------------------------------------------------------------------------
def _snap(v, step):
    """Snap values to a power-of-two grid so they are exactly representable in
    bf16/f32; keeps the kernel-vs-reference check deterministic."""
    return jnp.round(v / step) * step


def init_attn_params(key, D, H, S):
    """Deterministic synthetic parameters for one VQAttention block."""
    dk = D // H
    kq, kk, kv, ko, kc = jax.random.split(key, 5)
    scale = 1.0 / (D ** 0.5)
    # PyTorch nn.Linear stores weight as (out, in); y = x @ W^T
    Wq = _snap(jax.random.normal(kq, (D, D), jnp.float32) * scale, 2.0 ** -6)
    Wk = _snap(jax.random.normal(kk, (D, D), jnp.float32) * scale, 2.0 ** -6)
    Wv = _snap(jax.random.normal(kv, (D, D), jnp.float32) * scale, 2.0 ** -6)
    Wo = _snap(jax.random.normal(ko, (D, D), jnp.float32) * scale, 2.0 ** -6)
    # LearnableVQ buffers (c_sum random instead of zeros to avoid a degenerate
    # all-zero codebook); codebook = c_sum / clamp(c_count, 0.01)
    c_sum = _snap(jax.random.normal(kc, (H, S, dk), jnp.float32), 2.0 ** -5)
    c_count = jnp.ones((H, S), jnp.float32)
    codebook = c_sum / jnp.maximum(c_count, 0.01)[..., None]

    # Fused weights.  Column block [h*dk:(h+1)*dk] of Wq.T/Wk.T/Wv.T matches
    # PyTorch's .view(B, L, H, dk) head split.  Stored bf16 (MXU operands).
    wqkv = jnp.concatenate([Wq.T, Wk.T, Wv.T], axis=1).astype(jnp.bfloat16)
    wo = Wo.T.astype(jnp.bfloat16)
    return (wqkv, codebook, wo)


def _mxu(t):
    """Mimic the kernel's MXU operand precision: bf16 operands, f32 math."""
    return t.astype(jnp.bfloat16).astype(jnp.float32)


def ref_attention_block(x, wqkv, codebook, wo):
    """Pure-JAX eval-mode reference of x + VQAttention(x), mirroring the
    kernel's mixed-precision policy (bf16 MXU operands, f32 accumulation /
    elementwise, f32 VQ distances)."""
    hi = lax.Precision.HIGHEST
    f32 = jnp.float32
    B, L, D = x.shape
    H, S, dk = codebook.shape

    qkv = jnp.einsum('bld,de->ble', _mxu(x), wqkv.astype(f32), precision=hi)

    def split_heads(t):   # (B, L, D) -> (B, H, L, dk), as in the PyTorch module
        return t.reshape(B, L, H, dk).transpose(0, 2, 1, 3)

    q = split_heads(qkv[..., 0 * D:1 * D])
    k = split_heads(qkv[..., 1 * D:2 * D])
    v = split_heads(qkv[..., 2 * D:3 * D])

    x_sq = jnp.sum(k * k, -1, keepdims=True)
    c_sq = jnp.sum(codebook * codebook, -1)
    xc = jnp.einsum('bhlk,hsk->bhls', k, codebook, precision=hi)
    dist2 = x_sq - 2.0 * xc + c_sq[None, :, None, :]
    codes = jnp.argmin(dist2, -1)
    one_hot = jax.nn.one_hot(codes, S, dtype=f32)
    k_hat = jnp.einsum('bhls,hsk->bhlk', one_hot, codebook, precision=hi)

    logits = jnp.einsum('bhlk,bhtk->bhlt', _mxu(q), _mxu(k_hat),
                        precision=hi) * (dk ** -0.5)
    mask = jnp.tril(jnp.ones((L, L), dtype=bool))
    logits = jnp.where(mask[None, None], logits, -MASK_INFTY_APPROX)
    attn = jax.nn.softmax(logits, axis=-1)
    ctx = jnp.einsum('bhlt,bhtk->bhlk', _mxu(attn), _mxu(v), precision=hi)
    ctx = ctx.transpose(0, 2, 1, 3).reshape(B, L, D)
    out = jnp.einsum('bld,de->ble', _mxu(ctx), wo.astype(f32), precision=hi)
    return x + out


if __name__ == "__main__":
    B, L, D, H, S = 2, 16, 32, 4, 16  # batch, seq, dim, heads, n_code (d_k = 8)
    key = jax.random.PRNGKey(0)
    kx, k1, k2 = jax.random.split(key, 3)
    # snap the demo input to a 2^-5 grid (exactly bf16-representable) so the
    # VQ argmin comparison against the reference is deterministic.
    x = _snap(jax.random.normal(kx, (B, L, D), jnp.float32), 2.0 ** -5)
    params1 = init_attn_params(k1, D, H, S)
    params2 = init_attn_params(k2, D, H, S)

    # Check each attention block against the pure-JAX reference.  Block 2 is
    # fed the kernel's block-1 output so numerical drift cannot cascade into
    # the discrete VQ codeword selection.
    y1 = jax.block_until_ready(vq_attention_block(x, *params1))
    y1_ref = ref_attention_block(x, *params1)
    err1 = float(jnp.max(jnp.abs(y1 - y1_ref)))
    assert jnp.allclose(y1, y1_ref, atol=2e-3, rtol=2e-3), f"block1 err {err1}"

    y2 = jax.block_until_ready(vq_attention_block(y1, *params2))
    y2_ref = ref_attention_block(y1, *params2)
    err2 = float(jnp.max(jnp.abs(y2 - y2_ref)))
    assert jnp.allclose(y2, y2_ref, atol=2e-3, rtol=2e-3), f"block2 err {err2}"

    # Full layer wrapper (same computation end-to-end).
    y, aux = vq_transformer_layer(x, params1, params2)
    y = jax.block_until_ready(y)
    assert jnp.allclose(y, y2, atol=1e-6, rtol=1e-6)

    print("KERNEL_OK")
</pallas_src>

<mosaic_0001>
module attributes {stable_mosaic.version = 11 : i64} {
  func.func @_vq_attn_kernel(%arg0: i32, %arg1: memref<1x16x32xf32, #tpu.memory_space<vmem>>, %arg2: memref<32x96xbf16, #tpu.memory_space<vmem>>, %arg3: memref<4x16x8xf32, #tpu.memory_space<vmem>>, %arg4: memref<32x32xbf16, #tpu.memory_space<vmem>>, %arg5: memref<1x16x32xf32, #tpu.memory_space<vmem>>, %arg6: memref<16x32xf32, #tpu.memory_space<vmem>>) attributes {dimension_semantics = [#tpu.dimension_semantics<parallel>], iteration_bounds = array<i64: 2>, scalar_prefetch = 0 : i64, scratch_operands = 1 : i64, tpu.core_type = #tpu.core_type<tc>, window_params = [{transform_indices = @transform_0, window_bounds = array<i64: 1, 16, 32>}, {pipeline_mode = #tpu.pipeline_mode<synchronous>, transform_indices = @transform_1, window_bounds = array<i64: 32, 96>}, {pipeline_mode = #tpu.pipeline_mode<synchronous>, transform_indices = @transform_2, window_bounds = array<i64: 4, 16, 8>}, {pipeline_mode = #tpu.pipeline_mode<synchronous>, transform_indices = @transform_3, window_bounds = array<i64: 32, 32>}, {transform_indices = @transform_4, window_bounds = array<i64: 1, 16, 32>}]} {
    %c0 = arith.constant 0 : index
    %c0_0 = arith.constant 0 : index
    %c0_1 = arith.constant 0 : index
    %0 = vector.load %arg1[%c0, %c0_0, %c0_1] : memref<1x16x32xf32, #tpu.memory_space<vmem>>, vector<1x16x32xf32>
    %1 = vector.shape_cast %0 : vector<1x16x32xf32> to vector<16x32xf32>
    %2 = arith.truncf %1 : vector<16x32xf32> to vector<16x32xbf16>
    %c0_2 = arith.constant 0 : index
    %c0_3 = arith.constant 0 : index
    %3 = vector.load %arg2[%c0_2, %c0_3] : memref<32x96xbf16, #tpu.memory_space<vmem>>, vector<32x96xbf16>
    %cst = arith.constant dense<0.000000e+00> : vector<16x96xf32>
    %4 = tpu.matmul %2, %3, %cst {dimension_numbers = #tpu.dot_dimension_numbers<[1], [0], [0], [1], [0, 0, 1, 1], [], []>} : vector<16x32xbf16>, vector<32x96xbf16>, vector<16x96xf32> -> vector<16x96xf32>
    %5 = vector.extract_strided_slice %4 {offsets = [0, 0], sizes = [16, 8], strides = [1, 1]} : vector<16x96xf32> to vector<16x8xf32>
    %6 = vector.extract_strided_slice %4 {offsets = [0, 32], sizes = [16, 8], strides = [1, 1]} : vector<16x96xf32> to vector<16x8xf32>
    %7 = vector.extract_strided_slice %4 {offsets = [0, 64], sizes = [16, 8], strides = [1, 1]} : vector<16x96xf32> to vector<16x8xf32>
    %c0_4 = arith.constant 0 : index
    %c0_5 = arith.constant 0 : index
    %c0_6 = arith.constant 0 : index
    %8 = vector.load %arg3[%c0_4, %c0_5, %c0_6] : memref<4x16x8xf32, #tpu.memory_space<vmem>>, vector<1x16x8xf32>
    %9 = vector.shape_cast %8 : vector<1x16x8xf32> to vector<16x8xf32>
    %cst_7 = arith.constant dense<0.000000e+00> : vector<16x16xf32>
    %10 = tpu.matmul %6, %9, %cst_7 {dimension_numbers = #tpu.dot_dimension_numbers<[1], [1], [0], [0], [0, 0, 1, 0], [], []>, precision = #tpu.contract_precision<fp32>} : vector<16x8xf32>, vector<16x8xf32>, vector<16x16xf32> -> vector<16x16xf32>
    %11 = arith.mulf %6, %6 : vector<16x8xf32>
    %cst_8 = arith.constant dense<0.000000e+00> : vector<16xf32>
    %12 = vector.multi_reduction <add>, %11, %cst_8 [1] : vector<16x8xf32> to vector<16xf32>
    %13 = vector.shape_cast %12 : vector<16xf32> to vector<16x1xf32>
    %cst_9 = arith.constant 2.000000e+00 : f32
    %14 = vector.broadcast %cst_9 : f32 to vector<16x16xf32>
    %15 = arith.mulf %14, %10 : vector<16x16xf32>
    %16 = vector.broadcast %13 : vector<16x1xf32> to vector<16x16xf32>
    %17 = arith.subf %16, %15 : vector<16x16xf32>
    %18 = arith.mulf %9, %9 : vector<16x8xf32>
    %cst_10 = arith.constant dense<0.000000e+00> : vector<16xf32>
    %19 = vector.multi_reduction <add>, %18, %cst_10 [1] : vector<16x8xf32> to vector<16xf32>
    %20 = vector.shape_cast %19 : vector<16xf32> to vector<1x16xf32>
    %21 = vector.broadcast %20 : vector<1x16xf32> to vector<16x16xf32>
    %22 = arith.addf %17, %21 : vector<16x16xf32>
    %cst_11 = arith.constant dense<0x7F800000> : vector<16xf32>
    %23 = vector.multi_reduction <minimumf>, %22, %cst_11 [1] : vector<16x16xf32> to vector<16xf32>
    %24 = vector.shape_cast %23 : vector<16xf32> to vector<16x1xf32>
    %25 = tpu.iota {dimensions = array<i32: 1>} : vector<16x16xi32>
    %26 = vector.broadcast %24 : vector<16x1xf32> to vector<16x16xf32>
    %27 = arith.cmpf ole, %22, %26 : vector<16x16xf32>
    %c16_i32 = arith.constant 16 : i32
    %28 = vector.broadcast %c16_i32 : i32 to vector<16x16xi32>
    %29 = arith.select %27, %25, %28 : vector<16x16xi1>, vector<16x16xi32>
    %cst_12 = arith.constant dense<2147483647> : vector<16xi32>
    %30 = vector.multi_reduction <minsi>, %29, %cst_12 [1] : vector<16x16xi32> to vector<16xi32>
    %31 = vector.shape_cast %30 : vector<16xi32> to vector<16x1xi32>
    %32 = vector.broadcast %31 : vector<16x1xi32> to vector<16x16xi32>
    %33 = arith.cmpi eq, %25, %32 : vector<16x16xi32>
    %34 = arith.extui %33 : vector<16x16xi1> to vector<16x16xi32>
    %35 = arith.sitofp %34 : vector<16x16xi32> to vector<16x16xf32>
    %cst_13 = arith.constant dense<0.000000e+00> : vector<16x8xf32>
    %36 = tpu.matmul %35, %9, %cst_13 {dimension_numbers = #tpu.dot_dimension_numbers<[1], [0], [0], [1], [0, 0, 1, 1], [], []>, precision = #tpu.contract_precision<fp32>} : vector<16x16xf32>, vector<16x8xf32>, vector<16x8xf32> -> vector<16x8xf32>
    %37 = arith.truncf %5 : vector<16x8xf32> to vector<16x8xbf16>
    %38 = arith.truncf %36 : vector<16x8xf32> to vector<16x8xbf16>
    %cst_14 = arith.constant dense<0.000000e+00> : vector<16x16xf32>
    %39 = tpu.matmul %37, %38, %cst_14 {dimension_numbers = #tpu.dot_dimension_numbers<[1], [1], [0], [0], [0, 0, 1, 0], [], []>} : vector<16x8xbf16>, vector<16x8xbf16>, vector<16x16xf32> -> vector<16x16xf32>
    %cst_15 = arith.constant 0.353553385 : f32
    %40 = vector.broadcast %cst_15 : f32 to vector<16x16xf32>
    %41 = arith.mulf %39, %40 : vector<16x16xf32>
    %42 = tpu.iota {dimensions = array<i32: 0>} : vector<16x16xi32>
    %43 = tpu.iota {dimensions = array<i32: 1>} : vector<16x16xi32>
    %44 = arith.cmpi sle, %43, %42 : vector<16x16xi32>
    %cst_16 = arith.constant -1.000000e+30 : f32
    %45 = vector.broadcast %cst_16 : f32 to vector<16x16xf32>
    %46 = arith.select %44, %41, %45 : vector<16x16xi1>, vector<16x16xf32>
    %cst_17 = arith.constant dense<0xFF800000> : vector<16xf32>
    %47 = vector.multi_reduction <maximumf>, %46, %cst_17 [1] : vector<16x16xf32> to vector<16xf32>
    %48 = vector.shape_cast %47 : vector<16xf32> to vector<16x1xf32>
    %49 = vector.broadcast %48 : vector<16x1xf32> to vector<16x16xf32>
    %50 = arith.subf %46, %49 : vector<16x16xf32>
    %51 = math.exp %50 : vector<16x16xf32>
    %cst_18 = arith.constant dense<0.000000e+00> : vector<16xf32>
    %52 = vector.multi_reduction <add>, %51, %cst_18 [1] : vector<16x16xf32> to vector<16xf32>
    %53 = vector.shape_cast %52 : vector<16xf32> to vector<16x1xf32>
    %54 = vector.broadcast %53 : vector<16x1xf32> to vector<16x16xf32>
    %55 = arith.divf %51, %54 : vector<16x16xf32>
    %56 = arith.truncf %55 : vector<16x16xf32> to vector<16x16xbf16>
    %57 = arith.truncf %7 : vector<16x8xf32> to vector<16x8xbf16>
    %cst_19 = arith.constant dense<0.000000e+00> : vector<16x8xf32>
    %58 = tpu.matmul %56, %57, %cst_19 {dimension_numbers = #tpu.dot_dimension_numbers<[1], [0], [0], [1], [0, 0, 1, 1], [], []>} : vector<16x16xbf16>, vector<16x8xbf16>, vector<16x8xf32> -> vector<16x8xf32>
    %c0_20 = arith.constant 0 : index
    %c0_21 = arith.constant 0 : index
    %59 = vector.load %arg6[%c0_20, %c0_21] : memref<16x32xf32, #tpu.memory_space<vmem>>, vector<16x8xf32>
    tpu.vector_store %arg6[%c0_20, %c0_21], %58 {strides = array<i32>} : memref<16x32xf32, #tpu.memory_space<vmem>>, vector<16x8xf32>,
    %60 = vector.extract_strided_slice %4 {offsets = [0, 8], sizes = [16, 8], strides = [1, 1]} : vector<16x96xf32> to vector<16x8xf32>
    %61 = vector.extract_strided_slice %4 {offsets = [0, 40], sizes = [16, 8], strides = [1, 1]} : vector<16x96xf32> to vector<16x8xf32>
    %62 = vector.extract_strided_slice %4 {offsets = [0, 72], sizes = [16, 8], strides = [1, 1]} : vector<16x96xf32> to vector<16x8xf32>
    %c1 = arith.constant 1 : index
    %c0_22 = arith.constant 0 : index
    %c0_23 = arith.constant 0 : index
    %63 = vector.load %arg3[%c1, %c0_22, %c0_23] : memref<4x16x8xf32, #tpu.memory_space<vmem>>, vector<1x16x8xf32>
    %64 = vector.shape_cast %63 : vector<1x16x8xf32> to vector<16x8xf32>
    %cst_24 = arith.constant dense<0.000000e+00> : vector<16x16xf32>
    %65 = tpu.matmul %61, %64, %cst_24 {dimension_numbers = #tpu.dot_dimension_numbers<[1], [1], [0], [0], [0, 0, 1, 0], [], []>, precision = #tpu.contract_precision<fp32>} : vector<16x8xf32>, vector<16x8xf32>, vector<16x16xf32> -> vector<16x16xf32>
    %66 = arith.mulf %61, %61 : vector<16x8xf32>
    %cst_25 = arith.constant dense<0.000000e+00> : vector<16xf32>
    %67 = vector.multi_reduction <add>, %66, %cst_25 [1] : vector<16x8xf32> to vector<16xf32>
    %68 = vector.shape_cast %67 : vector<16xf32> to vector<16x1xf32>
    %cst_26 = arith.constant 2.000000e+00 : f32
    %69 = vector.broadcast %cst_26 : f32 to vector<16x16xf32>
    %70 = arith.mulf %69, %65 : vector<16x16xf32>
    %71 = vector.broadcast %68 : vector<16x1xf32> to vector<16x16xf32>
    %72 = arith.subf %71, %70 : vector<16x16xf32>
    %73 = arith.mulf %64, %64 : vector<16x8xf32>
    %cst_27 = arith.constant dense<0.000000e+00> : vector<16xf32>
    %74 = vector.multi_reduction <add>, %73, %cst_27 [1] : vector<16x8xf32> to vector<16xf32>
    %75 = vector.shape_cast %74 : vector<16xf32> to vector<1x16xf32>
    %76 = vector.broadcast %75 : vector<1x16xf32> to vector<16x16xf32>
    %77 = arith.addf %72, %76 : vector<16x16xf32>
    %cst_28 = arith.constant dense<0x7F800000> : vector<16xf32>
    %78 = vector.multi_reduction <minimumf>, %77, %cst_28 [1] : vector<16x16xf32> to vector<16xf32>
    %79 = vector.shape_cast %78 : vector<16xf32> to vector<16x1xf32>
    %80 = tpu.iota {dimensions = array<i32: 1>} : vector<16x16xi32>
    %81 = vector.broadcast %79 : vector<16x1xf32> to vector<16x16xf32>
    %82 = arith.cmpf ole, %77, %81 : vector<16x16xf32>
    %c16_i32_29 = arith.constant 16 : i32
    %83 = vector.broadcast %c16_i32_29 : i32 to vector<16x16xi32>
    %84 = arith.select %82, %80, %83 : vector<16x16xi1>, vector<16x16xi32>
    %cst_30 = arith.constant dense<2147483647> : vector<16xi32>
    %85 = vector.multi_reduction <minsi>, %84, %cst_30 [1] : vector<16x16xi32> to vector<16xi32>
    %86 = vector.shape_cast %85 : vector<16xi32> to vector<16x1xi32>
    %87 = vector.broadcast %86 : vector<16x1xi32> to vector<16x16xi32>
    %88 = arith.cmpi eq, %80, %87 : vector<16x16xi32>
    %89 = arith.extui %88 : vector<16x16xi1> to vector<16x16xi32>
    %90 = arith.sitofp %89 : vector<16x16xi32> to vector<16x16xf32>
    %cst_31 = arith.constant dense<0.000000e+00> : vector<16x8xf32>
    %91 = tpu.matmul %90, %64, %cst_31 {dimension_numbers = #tpu.dot_dimension_numbers<[1], [0], [0], [1], [0, 0, 1, 1], [], []>, precision = #tpu.contract_precision<fp32>} : vector<16x16xf32>, vector<16x8xf32>, vector<16x8xf32> -> vector<16x8xf32>
    %92 = arith.truncf %60 : vector<16x8xf32> to vector<16x8xbf16>
    %93 = arith.truncf %91 : vector<16x8xf32> to vector<16x8xbf16>
    %cst_32 = arith.constant dense<0.000000e+00> : vector<16x16xf32>
    %94 = tpu.matmul %92, %93, %cst_32 {dimension_numbers = #tpu.dot_dimension_numbers<[1], [1], [0], [0], [0, 0, 1, 0], [], []>} : vector<16x8xbf16>, vector<16x8xbf16>, vector<16x16xf32> -> vector<16x16xf32>
    %cst_33 = arith.constant 0.353553385 : f32
    %95 = vector.broadcast %cst_33 : f32 to vector<16x16xf32>
    %96 = arith.mulf %94, %95 : vector<16x16xf32>
    %97 = tpu.iota {dimensions = array<i32: 0>} : vector<16x16xi32>
    %98 = tpu.iota {dimensions = array<i32: 1>} : vector<16x16xi32>
    %99 = arith.cmpi sle, %98, %97 : vector<16x16xi32>
    %cst_34 = arith.constant -1.000000e+30 : f32
    %100 = vector.broadcast %cst_34 : f32 to vector<16x16xf32>
    %101 = arith.select %99, %96, %100 : vector<16x16xi1>, vector<16x16xf32>
    %cst_35 = arith.constant dense<0xFF800000> : vector<16xf32>
    %102 = vector.multi_reduction <maximumf>, %101, %cst_35 [1] : vector<16x16xf32> to vector<16xf32>
    %103 = vector.shape_cast %102 : vector<16xf32> to vector<16x1xf32>
    %104 = vector.broadcast %103 : vector<16x1xf32> to vector<16x16xf32>
    %105 = arith.subf %101, %104 : vector<16x16xf32>
    %106 = math.exp %105 : vector<16x16xf32>
    %cst_36 = arith.constant dense<0.000000e+00> : vector<16xf32>
    %107 = vector.multi_reduction <add>, %106, %cst_36 [1] : vector<16x16xf32> to vector<16xf32>
    %108 = vector.shape_cast %107 : vector<16xf32> to vector<16x1xf32>
    %109 = vector.broadcast %108 : vector<16x1xf32> to vector<16x16xf32>
    %110 = arith.divf %106, %109 : vector<16x16xf32>
    %111 = arith.truncf %110 : vector<16x16xf32> to vector<16x16xbf16>
    %112 = arith.truncf %62 : vector<16x8xf32> to vector<16x8xbf16>
    %cst_37 = arith.constant dense<0.000000e+00> : vector<16x8xf32>
    %113 = tpu.matmul %111, %112, %cst_37 {dimension_numbers = #tpu.dot_dimension_numbers<[1], [0], [0], [1], [0, 0, 1, 1], [], []>} : vector<16x16xbf16>, vector<16x8xbf16>, vector<16x8xf32> -> vector<16x8xf32>
    %c0_38 = arith.constant 0 : index
    %c8 = arith.constant 8 : index
    %114 = vector.load %arg6[%c0_38, %c8] : memref<16x32xf32, #tpu.memory_space<vmem>>, vector<16x8xf32>
    tpu.vector_store %arg6[%c0_38, %c8], %113 {strides = array<i32>} : memref<16x32xf32, #tpu.memory_space<vmem>>, vector<16x8xf32>,
    %115 = vector.extract_strided_slice %4 {offsets = [0, 16], sizes = [16, 8], strides = [1, 1]} : vector<16x96xf32> to vector<16x8xf32>
    %116 = vector.extract_strided_slice %4 {offsets = [0, 48], sizes = [16, 8], strides = [1, 1]} : vector<16x96xf32> to vector<16x8xf32>
    %117 = vector.extract_strided_slice %4 {offsets = [0, 80], sizes = [16, 8], strides = [1, 1]} : vector<16x96xf32> to vector<16x8xf32>
    %c2 = arith.constant 2 : index
    %c0_39 = arith.constant 0 : index
    %c0_40 = arith.constant 0 : index
    %118 = vector.load %arg3[%c2, %c0_39, %c0_40] : memref<4x16x8xf32, #tpu.memory_space<vmem>>, vector<1x16x8xf32>
    %119 = vector.shape_cast %118 : vector<1x16x8xf32> to vector<16x8xf32>
    %cst_41 = arith.constant dense<0.000000e+00> : vector<16x16xf32>
    %120 = tpu.matmul %116, %119, %cst_41 {dimension_numbers = #tpu.dot_dimension_numbers<[1], [1], [0], [0], [0, 0, 1, 0], [], []>, precision = #tpu.contract_precision<fp32>} : vector<16x8xf32>, vector<16x8xf32>, vector<16x16xf32> -> vector<16x16xf32>
    %121 = arith.mulf %116, %116 : vector<16x8xf32>
    %cst_42 = arith.constant dense<0.000000e+00> : vector<16xf32>
    %122 = vector.multi_reduction <add>, %121, %cst_42 [1] : vector<16x8xf32> to vector<16xf32>
    %123 = vector.shape_cast %122 : vector<16xf32> to vector<16x1xf32>
    %cst_43 = arith.constant 2.000000e+00 : f32
    %124 = vector.broadcast %cst_43 : f32 to vector<16x16xf32>
    %125 = arith.mulf %124, %120 : vector<16x16xf32>
    %126 = vector.broadcast %123 : vector<16x1xf32> to vector<16x16xf32>
    %127 = arith.subf %126, %125 : vector<16x16xf32>
    %128 = arith.mulf %119, %119 : vector<16x8xf32>
    %cst_44 = arith.constant dense<0.000000e+00> : vector<16xf32>
    %129 = vector.multi_reduction <add>, %128, %cst_44 [1] : vector<16x8xf32> to vector<16xf32>
    %130 = vector.shape_cast %129 : vector<16xf32> to vector<1x16xf32>
    %131 = vector.broadcast %130 : vector<1x16xf32> to vector<16x16xf32>
    %132 = arith.addf %127, %131 : vector<16x16xf32>
    %cst_45 = arith.constant dense<0x7F800000> : vector<16xf32>
    %133 = vector.multi_reduction <minimumf>, %132, %cst_45 [1] : vector<16x16xf32> to vector<16xf32>
    %134 = vector.shape_cast %133 : vector<16xf32> to vector<16x1xf32>
    %135 = tpu.iota {dimensions = array<i32: 1>} : vector<16x16xi32>
    %136 = vector.broadcast %134 : vector<16x1xf32> to vector<16x16xf32>
    %137 = arith.cmpf ole, %132, %136 : vector<16x16xf32>
    %c16_i32_46 = arith.constant 16 : i32
    %138 = vector.broadcast %c16_i32_46 : i32 to vector<16x16xi32>
    %139 = arith.select %137, %135, %138 : vector<16x16xi1>, vector<16x16xi32>
    %cst_47 = arith.constant dense<2147483647> : vector<16xi32>
    %140 = vector.multi_reduction <minsi>, %139, %cst_47 [1] : vector<16x16xi32> to vector<16xi32>
    %141 = vector.shape_cast %140 : vector<16xi32> to vector<16x1xi32>
    %142 = vector.broadcast %141 : vector<16x1xi32> to vector<16x16xi32>
    %143 = arith.cmpi eq, %135, %142 : vector<16x16xi32>
    %144 = arith.extui %143 : vector<16x16xi1> to vector<16x16xi32>
    %145 = arith.sitofp %144 : vector<16x16xi32> to vector<16x16xf32>
    %cst_48 = arith.constant dense<0.000000e+00> : vector<16x8xf32>
    %146 = tpu.matmul %145, %119, %cst_48 {dimension_numbers = #tpu.dot_dimension_numbers<[1], [0], [0], [1], [0, 0, 1, 1], [], []>, precision = #tpu.contract_precision<fp32>} : vector<16x16xf32>, vector<16x8xf32>, vector<16x8xf32> -> vector<16x8xf32>
    %147 = arith.truncf %115 : vector<16x8xf32> to vector<16x8xbf16>
    %148 = arith.truncf %146 : vector<16x8xf32> to vector<16x8xbf16>
    %cst_49 = arith.constant dense<0.000000e+00> : vector<16x16xf32>
    %149 = tpu.matmul %147, %148, %cst_49 {dimension_numbers = #tpu.dot_dimension_numbers<[1], [1], [0], [0], [0, 0, 1, 0], [], []>} : vector<16x8xbf16>, vector<16x8xbf16>, vector<16x16xf32> -> vector<16x16xf32>
    %cst_50 = arith.constant 0.353553385 : f32
    %150 = vector.broadcast %cst_50 : f32 to vector<16x16xf32>
    %151 = arith.mulf %149, %150 : vector<16x16xf32>
    %152 = tpu.iota {dimensions = array<i32: 0>} : vector<16x16xi32>
    %153 = tpu.iota {dimensions = array<i32: 1>} : vector<16x16xi32>
    %154 = arith.cmpi sle, %153, %152 : vector<16x16xi32>
    %cst_51 = arith.constant -1.000000e+30 : f32
    %155 = vector.broadcast %cst_51 : f32 to vector<16x16xf32>
    %156 = arith.select %154, %151, %155 : vector<16x16xi1>, vector<16x16xf32>
    %cst_52 = arith.constant dense<0xFF800000> : vector<16xf32>
    %157 = vector.multi_reduction <maximumf>, %156, %cst_52 [1] : vector<16x16xf32> to vector<16xf32>
    %158 = vector.shape_cast %157 : vector<16xf32> to vector<16x1xf32>
    %159 = vector.broadcast %158 : vector<16x1xf32> to vector<16x16xf32>
    %160 = arith.subf %156, %159 : vector<16x16xf32>
    %161 = math.exp %160 : vector<16x16xf32>
    %cst_53 = arith.constant dense<0.000000e+00> : vector<16xf32>
    %162 = vector.multi_reduction <add>, %161, %cst_53 [1] : vector<16x16xf32> to vector<16xf32>
    %163 = vector.shape_cast %162 : vector<16xf32> to vector<16x1xf32>
    %164 = vector.broadcast %163 : vector<16x1xf32> to vector<16x16xf32>
    %165 = arith.divf %161, %164 : vector<16x16xf32>
    %166 = arith.truncf %165 : vector<16x16xf32> to vector<16x16xbf16>
    %167 = arith.truncf %117 : vector<16x8xf32> to vector<16x8xbf16>
    %cst_54 = arith.constant dense<0.000000e+00> : vector<16x8xf32>
    %168 = tpu.matmul %166, %167, %cst_54 {dimension_numbers = #tpu.dot_dimension_numbers<[1], [0], [0], [1], [0, 0, 1, 1], [], []>} : vector<16x16xbf16>, vector<16x8xbf16>, vector<16x8xf32> -> vector<16x8xf32>
    %c0_55 = arith.constant 0 : index
    %c16 = arith.constant 16 : index
    %169 = vector.load %arg6[%c0_55, %c16] : memref<16x32xf32, #tpu.memory_space<vmem>>, vector<16x8xf32>
    tpu.vector_store %arg6[%c0_55, %c16], %168 {strides = array<i32>} : memref<16x32xf32, #tpu.memory_space<vmem>>, vector<16x8xf32>,
    %170 = vector.extract_strided_slice %4 {offsets = [0, 24], sizes = [16, 8], strides = [1, 1]} : vector<16x96xf32> to vector<16x8xf32>
    %171 = vector.extract_strided_slice %4 {offsets = [0, 56], sizes = [16, 8], strides = [1, 1]} : vector<16x96xf32> to vector<16x8xf32>
    %172 = vector.extract_strided_slice %4 {offsets = [0, 88], sizes = [16, 8], strides = [1, 1]} : vector<16x96xf32> to vector<16x8xf32>
    %c3 = arith.constant 3 : index
    %c0_56 = arith.constant 0 : index
    %c0_57 = arith.constant 0 : index
    %173 = vector.load %arg3[%c3, %c0_56, %c0_57] : memref<4x16x8xf32, #tpu.memory_space<vmem>>, vector<1x16x8xf32>
    %174 = vector.shape_cast %173 : vector<1x16x8xf32> to vector<16x8xf32>
    %cst_58 = arith.constant dense<0.000000e+00> : vector<16x16xf32>
    %175 = tpu.matmul %171, %174, %cst_58 {dimension_numbers = #tpu.dot_dimension_numbers<[1], [1], [0], [0], [0, 0, 1, 0], [], []>, precision = #tpu.contract_precision<fp32>} : vector<16x8xf32>, vector<16x8xf32>, vector<16x16xf32> -> vector<16x16xf32>
    %176 = arith.mulf %171, %171 : vector<16x8xf32>
    %cst_59 = arith.constant dense<0.000000e+00> : vector<16xf32>
    %177 = vector.multi_reduction <add>, %176, %cst_59 [1] : vector<16x8xf32> to vector<16xf32>
    %178 = vector.shape_cast %177 : vector<16xf32> to vector<16x1xf32>
    %cst_60 = arith.constant 2.000000e+00 : f32
    %179 = vector.broadcast %cst_60 : f32 to vector<16x16xf32>
    %180 = arith.mulf %179, %175 : vector<16x16xf32>
    %181 = vector.broadcast %178 : vector<16x1xf32> to vector<16x16xf32>
    %182 = arith.subf %181, %180 : vector<16x16xf32>
    %183 = arith.mulf %174, %174 : vector<16x8xf32>
    %cst_61 = arith.constant dense<0.000000e+00> : vector<16xf32>
    %184 = vector.multi_reduction <add>, %183, %cst_61 [1] : vector<16x8xf32> to vector<16xf32>
    %185 = vector.shape_cast %184 : vector<16xf32> to vector<1x16xf32>
    %186 = vector.broadcast %185 : vector<1x16xf32> to vector<16x16xf32>
    %187 = arith.addf %182, %186 : vector<16x16xf32>
    %cst_62 = arith.constant dense<0x7F800000> : vector<16xf32>
    %188 = vector.multi_reduction <minimumf>, %187, %cst_62 [1] : vector<16x16xf32> to vector<16xf32>
    %189 = vector.shape_cast %188 : vector<16xf32> to vector<16x1xf32>
    %190 = tpu.iota {dimensions = array<i32: 1>} : vector<16x16xi32>
    %191 = vector.broadcast %189 : vector<16x1xf32> to vector<16x16xf32>
    %192 = arith.cmpf ole, %187, %191 : vector<16x16xf32>
    %c16_i32_63 = arith.constant 16 : i32
    %193 = vector.broadcast %c16_i32_63 : i32 to vector<16x16xi32>
    %194 = arith.select %192, %190, %193 : vector<16x16xi1>, vector<16x16xi32>
    %cst_64 = arith.constant dense<2147483647> : vector<16xi32>
    %195 = vector.multi_reduction <minsi>, %194, %cst_64 [1] : vector<16x16xi32> to vector<16xi32>
    %196 = vector.shape_cast %195 : vector<16xi32> to vector<16x1xi32>
    %197 = vector.broadcast %196 : vector<16x1xi32> to vector<16x16xi32>
    %198 = arith.cmpi eq, %190, %197 : vector<16x16xi32>
    %199 = arith.extui %198 : vector<16x16xi1> to vector<16x16xi32>
    %200 = arith.sitofp %199 : vector<16x16xi32> to vector<16x16xf32>
    %cst_65 = arith.constant dense<0.000000e+00> : vector<16x8xf32>
    %201 = tpu.matmul %200, %174, %cst_65 {dimension_numbers = #tpu.dot_dimension_numbers<[1], [0], [0], [1], [0, 0, 1, 1], [], []>, precision = #tpu.contract_precision<fp32>} : vector<16x16xf32>, vector<16x8xf32>, vector<16x8xf32> -> vector<16x8xf32>
    %202 = arith.truncf %170 : vector<16x8xf32> to vector<16x8xbf16>
    %203 = arith.truncf %201 : vector<16x8xf32> to vector<16x8xbf16>
    %cst_66 = arith.constant dense<0.000000e+00> : vector<16x16xf32>
    %204 = tpu.matmul %202, %203, %cst_66 {dimension_numbers = #tpu.dot_dimension_numbers<[1], [1], [0], [0], [0, 0, 1, 0], [], []>} : vector<16x8xbf16>, vector<16x8xbf16>, vector<16x16xf32> -> vector<16x16xf32>
    %cst_67 = arith.constant 0.353553385 : f32
    %205 = vector.broadcast %cst_67 : f32 to vector<16x16xf32>
    %206 = arith.mulf %204, %205 : vector<16x16xf32>
    %207 = tpu.iota {dimensions = array<i32: 0>} : vector<16x16xi32>
    %208 = tpu.iota {dimensions = array<i32: 1>} : vector<16x16xi32>
    %209 = arith.cmpi sle, %208, %207 : vector<16x16xi32>
    %cst_68 = arith.constant -1.000000e+30 : f32
    %210 = vector.broadcast %cst_68 : f32 to vector<16x16xf32>
    %211 = arith.select %209, %206, %210 : vector<16x16xi1>, vector<16x16xf32>
    %cst_69 = arith.constant dense<0xFF800000> : vector<16xf32>
    %212 = vector.multi_reduction <maximumf>, %211, %cst_69 [1] : vector<16x16xf32> to vector<16xf32>
    %213 = vector.shape_cast %212 : vector<16xf32> to vector<16x1xf32>
    %214 = vector.broadcast %213 : vector<16x1xf32> to vector<16x16xf32>
    %215 = arith.subf %211, %214 : vector<16x16xf32>
    %216 = math.exp %215 : vector<16x16xf32>
    %cst_70 = arith.constant dense<0.000000e+00> : vector<16xf32>
    %217 = vector.multi_reduction <add>, %216, %cst_70 [1] : vector<16x16xf32> to vector<16xf32>
    %218 = vector.shape_cast %217 : vector<16xf32> to vector<16x1xf32>
    %219 = vector.broadcast %218 : vector<16x1xf32> to vector<16x16xf32>
    %220 = arith.divf %216, %219 : vector<16x16xf32>
    %221 = arith.truncf %220 : vector<16x16xf32> to vector<16x16xbf16>
    %222 = arith.truncf %172 : vector<16x8xf32> to vector<16x8xbf16>
    %cst_71 = arith.constant dense<0.000000e+00> : vector<16x8xf32>
    %223 = tpu.matmul %221, %222, %cst_71 {dimension_numbers = #tpu.dot_dimension_numbers<[1], [0], [0], [1], [0, 0, 1, 1], [], []>} : vector<16x16xbf16>, vector<16x8xbf16>, vector<16x8xf32> -> vector<16x8xf32>
    %c0_72 = arith.constant 0 : index
    %c24 = arith.constant 24 : index
    %224 = vector.load %arg6[%c0_72, %c24] : memref<16x32xf32, #tpu.memory_space<vmem>>, vector<16x8xf32>
    tpu.vector_store %arg6[%c0_72, %c24], %223 {strides = array<i32>} : memref<16x32xf32, #tpu.memory_space<vmem>>, vector<16x8xf32>,
    %c0_73 = arith.constant 0 : index
    %c0_74 = arith.constant 0 : index
    %225 = vector.load %arg6[%c0_73, %c0_74] : memref<16x32xf32, #tpu.memory_space<vmem>>, vector<16x32xf32>
    %226 = arith.truncf %225 : vector<16x32xf32> to vector<16x32xbf16>
    %c0_75 = arith.constant 0 : index
    %c0_76 = arith.constant 0 : index
    %227 = vector.load %arg4[%c0_75, %c0_76] : memref<32x32xbf16, #tpu.memory_space<vmem>>, vector<32x32xbf16>
    %cst_77 = arith.constant dense<0.000000e+00> : vector<16x32xf32>
    %228 = tpu.matmul %226, %227, %cst_77 {dimension_numbers = #tpu.dot_dimension_numbers<[1], [0], [0], [1], [0, 0, 1, 1], [], []>} : vector<16x32xbf16>, vector<32x32xbf16>, vector<16x32xf32> -> vector<16x32xf32>
    %229 = arith.addf %1, %228 : vector<16x32xf32>
    %230 = vector.shape_cast %229 : vector<16x32xf32> to vector<1x16x32xf32>
    %c0_78 = arith.constant 0 : index
    %c0_79 = arith.constant 0 : index
    %c0_80 = arith.constant 0 : index
    %231 = vector.load %arg5[%c0_78, %c0_79, %c0_80] : memref<1x16x32xf32, #tpu.memory_space<vmem>>, vector<1x16x32xf32>
    tpu.vector_store %arg5[%c0_78, %c0_79, %c0_80], %230 {strides = array<i32>} : memref<1x16x32xf32, #tpu.memory_space<vmem>>, vector<1x16x32xf32>,
    return
  }
  func.func @transform_0(%arg0: i32) -> (i32, i32, i32) {
    %c0_i32 = arith.constant 0 : i32
    %c0_i32_0 = arith.constant 0 : i32
    %c0_i32_1 = arith.constant 0 : i32
    return %arg0, %c0_i32, %c0_i32_0 : i32, i32, i32
  }
  func.func @transform_1(%arg0: i32) -> (i32, i32) {
    %c0_i32 = arith.constant 0 : i32
    %c0_i32_0 = arith.constant 0 : i32
    %c0_i32_1 = arith.constant 0 : i32
    return %c0_i32, %c0_i32_0 : i32, i32
  }
  func.func @transform_2(%arg0: i32) -> (i32, i32, i32) {
    %c0_i32 = arith.constant 0 : i32
    %c0_i32_0 = arith.constant 0 : i32
    %c0_i32_1 = arith.constant 0 : i32
    %c0_i32_2 = arith.constant 0 : i32
    return %c0_i32, %c0_i32_0, %c0_i32_1 : i32, i32, i32
  }
  func.func @transform_3(%arg0: i32) -> (i32, i32) {
    %c0_i32 = arith.constant 0 : i32
    %c0_i32_0 = arith.constant 0 : i32
    %c0_i32_1 = arith.constant 0 : i32
    return %c0_i32, %c0_i32_0 : i32, i32
  }
  func.func @transform_4(%arg0: i32) -> (i32, i32, i32) {
    %c0_i32 = arith.constant 0 : i32
    %c0_i32_0 = arith.constant 0 : i32
    %c0_i32_1 = arith.constant 0 : i32
    return %arg0, %c0_i32, %c0_i32_0 : i32, i32, i32
  }
}

</mosaic_0001>

<llo_original>
// kernel: tpu_custom_call.1
$region0: #{tpu_custom_call.1}
  #allocation0 [shape = 'u32[]', space=smem, size = 0x4, offset = 0x4, fixed_abs, tag = 'smem constant byte address 0x4 - core index']
  #allocation1 [shape = 'u32[144,128]{1,0:T(1,128)}', space=vmem, size = 0x12000, scoped, tag = 'internal scratch']
  #allocation2 [shape = 'f32[16,32]{1,0:T(8,128)}', space=vmem, size = 0x2000, scoped, tag = 'scratch operand']
  %s0 = inlined_call_operand.vmem [shape: f32[2,16,32], index: 0, kind: input, shape index: {}]
  %s1 = inlined_call_operand.vmem [shape: bf16[32,96], index: 1, kind: input, shape index: {}]
  %s2 = inlined_call_operand.vmem [shape: f32[4,16,8], index: 2, kind: input, shape index: {}]
  %s3 = inlined_call_operand.vmem [shape: bf16[32,32], index: 3, kind: input, shape index: {}]
  %s4 = inlined_call_operand.hbm [shape: f32[2,16,32], index: 4, kind: output, shape index: {}]
  %s5 = sld [smem:[#allocation0]]
  $region49: #{tpu_custom_call.1} parent=0
    _
  %s7 = ssub.s32 1, %s5
  %s8 = scalar_select 0, %s7, %s5
  $region1: #{tpu_custom_call.1} parent=0
    #allocation3 [shape = 'u8[16384]{0}', space=vmem, size = 0x4000, scoped, tag = 'output window, operand 0']
    #allocation4 [shape = 's32[2]{0}', space=sflag, size = 0x8, scoped, tag = 'scoped memory for tpu_custom_call.1']
    %9 = vsyncpa [#allocation4], 0
    %s10 = scalar_lea.sflag [#allocation4], 1
    %11 = vsyncpa %s10, 0
    loop: start=0, step=1, limit=4
    $region2: #{tpu_custom_call.1} parent=1 // loop_pre_header
      _
    $region3: #{tpu_custom_call.1} parent=1 // loop_header
      %s13 = sphi 0, %s17
      %p14 = scmp.ge.s32.totalorder %s13, 4
      %s23 = sphi 0, %s25
      %s26 = sphi 0, %s23
      %s27 = sphi 0, %s26
      %s43 = sphi 0, %s27
      %s47 = sphi 0, %s47
      %s49 = sphi 0, %s47
      %s50 = sphi 0, %s49
      %s64 = sphi 0, %s50
      %s68 = sphi 0, %s68
      %s70 = sphi 0, %s68
      %s71 = sphi 0, %s70
      %s85 = sphi 0, %s71
      %s89 = sphi 0, %s89
      %s91 = sphi 0, %s89
      %s92 = sphi 0, %s91
      %s106 = sphi 0, %s92
      %s112 = sphi 0, %s114
      %s115 = sphi 0, %s112
      %s116 = sphi 0, %s115
      %s132 = sphi 0, %s116
    $region4: #{tpu_custom_call.1} parent=1 // loop_header_branch
      %16 = sbr.rel (%p14) target = $region8
    $region5: #{tpu_custom_call.1} parent=1 // loop_body
      %s18 = ssub.s32 %s13, 1
      %s19 = ssub.s32 %s13, 2
      %s20 = sadd.s32 %s13, 1
      %s21 = ssub.s32 %s13, %s20
      %p22 = scmp.eq.s32.totalorder %s21, 0
      %s24 = sadd.s32 %s23, 1
      %s25 = scalar_select %p22, %s23, %s24
      %p28 = pneg %p22
      %p29 = scmp.eq.s32.totalorder %s13, 1
      %p30 = por %p28, %p29
      %p31 = scmp.ne.s32.totalorder %s23, %s26
      %p32 = scmp.eq.s32.totalorder %s13, 0
      %p33 = por %p31, %p32
      %p34 = scmp.ne.s32.totalorder %s23, %s26
      %p35 = scmp.eq.s32.totalorder %s18, 1
      %p36 = por %p34, %p35
      %p37 = scmp.ne.s32.totalorder %s26, %s27
      %p38 = scmp.eq.s32.totalorder %s18, 0
      %p39 = por %p37, %p38
      %p40 = scmp.ne.s32.totalorder %s26, %s27
      %p41 = scmp.eq.s32.totalorder %s19, 1
      %p42 = por %p40, %p41
      %p44 = scmp.ne.s32.totalorder %s27, %s43
      %p45 = scmp.eq.s32.totalorder %s19, 0
      %p46 = por %p44, %p45
      %s48 = sadd.s32 %s47, 1
      %p51 = scmp.eq.s32.totalorder %s13, 1
      %p52 = scmp.ne.s32.totalorder %s47, %s49
      %p53 = scmp.eq.s32.totalorder %s13, 0
      %p54 = por %p52, %p53
      %p55 = scmp.ne.s32.totalorder %s47, %s49
      %p56 = scmp.eq.s32.totalorder %s18, 1
      %p57 = por %p55, %p56
      %p58 = scmp.ne.s32.totalorder %s49, %s50
      %p59 = scmp.eq.s32.totalorder %s18, 0
      %p60 = por %p58, %p59
      %p61 = scmp.ne.s32.totalorder %s49, %s50
      %p62 = scmp.eq.s32.totalorder %s19, 1
      %p63 = por %p61, %p62
      %p65 = scmp.ne.s32.totalorder %s50, %s64
      %p66 = scmp.eq.s32.totalorder %s19, 0
      %p67 = por %p65, %p66
      %s69 = sadd.s32 %s68, 1
      %p72 = scmp.eq.s32.totalorder %s13, 1
      %p73 = scmp.ne.s32.totalorder %s68, %s70
      %p74 = scmp.eq.s32.totalorder %s13, 0
      %p75 = por %p73, %p74
      %p76 = scmp.ne.s32.totalorder %s68, %s70
      %p77 = scmp.eq.s32.totalorder %s18, 1
      %p78 = por %p76, %p77
      %p79 = scmp.ne.s32.totalorder %s70, %s71
      %p80 = scmp.eq.s32.totalorder %s18, 0
      %p81 = por %p79, %p80
      %p82 = scmp.ne.s32.totalorder %s70, %s71
      %p83 = scmp.eq.s32.totalorder %s19, 1
      %p84 = por %p82, %p83
      %p86 = scmp.ne.s32.totalorder %s71, %s85
      %p87 = scmp.eq.s32.totalorder %s19, 0
      %p88 = por %p86, %p87
      %s90 = sadd.s32 %s89, 1
      %p93 = scmp.eq.s32.totalorder %s13, 1
      %p94 = scmp.ne.s32.totalorder %s89, %s91
      %p95 = scmp.eq.s32.totalorder %s13, 0
      %p96 = por %p94, %p95
      %p97 = scmp.ne.s32.totalorder %s89, %s91
      %p98 = scmp.eq.s32.totalorder %s18, 1
      %p99 = por %p97, %p98
      %p100 = scmp.ne.s32.totalorder %s91, %s92
      %p101 = scmp.eq.s32.totalorder %s18, 0
      %p102 = por %p100, %p101
      %p103 = scmp.ne.s32.totalorder %s91, %s92
      %p104 = scmp.eq.s32.totalorder %s19, 1
      %p105 = por %p103, %p104
      %p107 = scmp.ne.s32.totalorder %s92, %s106
      %p108 = scmp.eq.s32.totalorder %s19, 0
      %p109 = por %p107, %p108
      %s110 = ssub.s32 %s13, %s20
      %p111 = scmp.eq.s32.totalorder %s110, 0
      %s113 = sadd.s32 %s112, 1
      %s114 = scalar_select %p111, %s112, %s113
      %p117 = pneg %p111
      %p118 = scmp.eq.s32.totalorder %s13, 1
      %p119 = por %p117, %p118
      %p120 = scmp.ne.s32.totalorder %s112, %s115
      %p121 = scmp.eq.s32.totalorder %s13, 0
      %p122 = por %p120, %p121
      %p123 = scmp.ne.s32.totalorder %s112, %s115
      %p124 = scmp.eq.s32.totalorder %s18, 1
      %p125 = por %p123, %p124
      %p126 = scmp.ne.s32.totalorder %s115, %s116
      %p127 = scmp.eq.s32.totalorder %s18, 0
      %p128 = por %p126, %p127
      %p129 = scmp.ne.s32.totalorder %s115, %s116
      %p130 = scmp.eq.s32.totalorder %s19, 1
      %p131 = por %p129, %p130
      %p133 = scmp.ne.s32.totalorder %s116, %s132
      %p134 = scmp.eq.s32.totalorder %s19, 0
      %p135 = por %p133, %p134
      %p136 = scmp.le.s32.totalorder 1, %s13
      %p137 = scmp.lt.s32.totalorder %s13, 3
      %p138 = pnand %p136, %p137
      %p139 = pneg %p138
      // Predicated region
      $region9: #{tpu_custom_call.1} parent=5 // pred_check
        _
      $region10: #{tpu_custom_call.1} parent=5 // pred_check_branch
        %141 = sbr.rel (%p138) target = $region12
      $region11: #{tpu_custom_call.1} parent=5 // pred_region
        %s142 = ssub.s32 %s13, 1
        // Predicated region
        $region13: #{tpu_custom_call.1} parent=11 // pred_check
          %p143 = pneg %p60
        $region14: #{tpu_custom_call.1} parent=11 // pred_check_branch
          %145 = sbr.rel (%p143) target = $region16
        $region15: #{tpu_custom_call.1} parent=11 // pred_region
          _
        $region16: #{tpu_custom_call.1} parent=11 // pred_fallthru
          _
        // Predicated region
        $region17: #{tpu_custom_call.1} parent=11 // pred_check
          %p146 = pneg %p81
        $region18: #{tpu_custom_call.1} parent=11 // pred_check_branch
          %148 = sbr.rel (%p146) target = $region20
        $region19: #{tpu_custom_call.1} parent=11 // pred_region
          _
        $region20: #{tpu_custom_call.1} parent=11 // pred_fallthru
          _
        // Predicated region
        $region21: #{tpu_custom_call.1} parent=11 // pred_check
          %p149 = pneg %p102
        $region22: #{tpu_custom_call.1} parent=11 // pred_check_branch
          %151 = sbr.rel (%p149) target = $region24
        $region23: #{tpu_custom_call.1} parent=11 // pred_region
          _
        $region24: #{tpu_custom_call.1} parent=11 // pred_fallthru
          _
      $region12: #{tpu_custom_call.1} parent=5 // pred_fallthru
        _
      %p152 = scmp.lt.s32.totalorder %s13, 2
      // Predicated region
      $region25: #{tpu_custom_call.1} parent=5 // pred_check
        %p153 = pneg %p152
      $region26: #{tpu_custom_call.1} parent=5 // pred_check_branch
        %155 = sbr.rel (%p153) target = $region28
      $region27: #{tpu_custom_call.1} parent=5 // pred_region
        // Predicated region
        $region29: #{tpu_custom_call.1} parent=27 // pred_check
          %p156 = pneg %p33
        $region30: #{tpu_custom_call.1} parent=27 // pred_check_branch
          %158 = sbr.rel (%p156) target = $region32
        $region31: #{tpu_custom_call.1} parent=27 // pred_region
          %p159 = scmp.lt.s32.totalorder %s13, 1
          %s160 = scalar_select %p159, %s13, 1
          %s161 = smul.addr %s160, 2
          %s162 = smul.addr %s161, 8
          %s163 = scalar_lea.vmem %s0, %s162
        $region32: #{tpu_custom_call.1} parent=27 // pred_fallthru
          _
      $region28: #{tpu_custom_call.1} parent=5 // pred_fallthru
        _
      %p164 = scmp.le.s32.totalorder 1, %s13
      %p165 = scmp.lt.s32.totalorder %s13, 3
      %p166 = pnand %p164, %p165
      %p167 = pneg %p166
      // Predicated region
      $region33: #{tpu_custom_call.1} parent=5 // pred_check
        _
      $region34: #{tpu_custom_call.1} parent=5 // pred_check_branch
        %169 = sbr.rel (%p166) target = $region36
      $region35: #{tpu_custom_call.1} parent=5 // pred_region
        %s170 = ssub.s32 %s13, 1
        %p171 = scmp.lt.s32.totalorder %s18, 1
        %s172 = scalar_select %p171, %s18, 1
        %s173 = smul.addr %s172, 2
        %s174 = smul.addr %s173, 8
        %s175 = scalar_lea.vmem %s0, %s174
        %p176 = pneg %p39
        %p177 = pneg %p36
        %p178 = pneg %p60
        %p179 = pneg %p57
        %p180 = pneg %p81
        %p181 = pneg %p78
        %p182 = pneg %p102
        %p183 = pneg %p99
        %p184 = pneg %p128
        %p185 = pneg %p125
        %s186 = sand.u32 %s115, 1
        %s187 = scalar_lea.sflag [#allocation4], %s186
        %s188 = sand.u32 %s115, 1
        %s189 = smul.addr %s188, 16
        %s190 = scalar_lea.vmem [#allocation3], %s189
        %p191 = scmp.lt.s32.totalorder %s18, 1
        %s192 = scalar_select %p191, %s18, 1
        %s193 = smul.addr %s192, 2
        %s194 = smul.addr %s193, 8
        %s195 = scalar_lea.vmem %s0, %s194
        %v197 = vld [vmem:[%s195] sm:$0xff]
        %v198 = vld [vmem:[%s195 + $0x8] sm:$0xff]
        %v199 = vpack.c.bf16 %v198, %v197
        %v200 = vld [vmem:[%s1] sm:$0xf]
        %v201 = vld [vmem:[%s1 + $0x4] sm:$0xf]
        %v202 = vld [vmem:[%s1 + $0x8] sm:$0xf]
        %v203 = vld [vmem:[%s1 + $0xc] sm:$0xf]
        %v208 = vunpack.c.l.b16 %v200
        %v209 = vunpack.c.l.b16 %v201
        %v210 = vunpack.c.l.b16 %v202
        %v211 = vunpack.c.l.b16 %v203
        %v212 = vpack.c.b16 %v209, %v208
        %v213 = vpack.c.b16 %v211, %v210
        %vm216 = vcmask 261120
        %v218 = vsel %vm216, %v199, 0
        %220 = vmatprep.subr.bf16.mxu0 0
        %221 = vmatpush1.bf16.msra.mxu0 %v212
        %222 = vmatprep.subr.bf16.mxu0 0
        %223 = vmatpush1.bf16.msra.mxu0 %v213
        %224 = vmatprep.subr.bf16.mxu0 0
        %225 = vmatpush1.bf16.msra.mxu0 0
        %226 = vmatprep.subr.bf16.mxu0 0
        %227 = vmatpush1.bf16.msra.mxu0 0
        %228 = vmatprep.subr.bf16.mxu0 0
        %229 = vmatpush1.bf16.msra.mxu0 0
        %230 = vmatprep.subr.bf16.mxu0 0
        %231 = vmatpush1.bf16.msra.mxu0 0
        %232 = vmatprep.subr.bf16.mxu0 0
        %233 = vmatpush1.bf16.msra.mxu0 0
        %234 = vmatprep.subr.bf16.mxu0 0
        %235 = vmatpush1.bf16.msra.mxu0 0
        %236 = vmatprep.subr.bf16.mxu0 0
        %237 = vmatpush1.bf16.msra.mxu0 0
        %238 = vmatprep.subr.bf16.mxu0 0
        %239 = vmatpush1.bf16.msra.mxu0 0
        %240 = vmatprep.subr.bf16.mxu0 0
        %241 = vmatpush1.bf16.msra.mxu0 0
        %242 = vmatprep.subr.bf16.mxu0 0
        %243 = vmatpush1.bf16.msra.mxu0 0
        %244 = vmatprep.subr.bf16.mxu0 0
        %245 = vmatpush1.bf16.msra.mxu0 0
        %246 = vmatprep.subr.bf16.mxu0 0
        %247 = vmatpush1.bf16.msra.mxu0 0
        %248 = vmatprep.subr.bf16.mxu0 0
        %249 = vmatpush1.bf16.msra.mxu0 0
        %250 = vmatprep.subr.bf16.mxu0 0
        %251 = vmatpush1.bf16.msra.mxu0 0
        %252 = vmatprep.mubr.bf16.mxu0 0
        %253 = vmatmul.mubr.bf16.gmra.mrb[0].mxu0 %v218
        %v254 = vpop.f32.mrb[0].mxu0
        %v255 = vadd.f32 0.0, %v254
        %v256 = vpop.f32.mrb[0].mxu0
        %v257 = vpop.f32.mrb[0].mxu0
        %v258 = vadd.f32 0.0, %v257
        %v259 = vpop.f32.mrb[0].mxu0
        %260 = vdwg.mxu0
        %v261 = vld [vmem:[%s2] sm:$0xff]
        %v262 = vld [vmem:[%s2 + $0x8] sm:$0xff]
        %265 = vrot.lane.b32.xlu0 %v255, 96
        %v266 = vpop.permute.xlu0 %265
        %267 = vrot.lane.b32.xlu0 %v258, 96
        %v268 = vpop.permute.xlu0 %267
        %vm269 = vcmask 64512
        %v270 = vsel %vm269, %v266, 0
        %v272 = vsel %vm269, %v268, 0
        %v275 = vsel %vm269, %v261, 0
        %v278 = vsel %vm269, %v262, 0
        %280 = vmatprep.subr.mxu0 0.0
        %v281 = vand.u32 %v275, 4294901760
        %282 = vmatpush1.xpose.msra.mxu0 %v281
        %283 = vmatprep.subr.mxu0 0.0
        %v284 = vand.u32 %v278, 4294901760
        %285 = vmatpush1.xpose.msra.mxu0 %v284
        %286 = vmatprep.subr.mxu0 0.0
        %287 = vmatpush1.xpose.msra.mxu0 0.0
        %288 = vmatprep.subr.mxu0 0.0
        %289 = vmatpush1.xpose.msra.mxu0 0.0
        %290 = vmatprep.subr.mxu0 0.0
        %291 = vmatpush1.xpose.msra.mxu0 0.0
        %292 = vmatprep.subr.mxu0 0.0
        %293 = vmatpush1.xpose.msra.mxu0 0.0
        %294 = vmatprep.subr.mxu0 0.0
        %295 = vmatpush1.xpose.msra.mxu0 0.0
        %296 = vmatprep.subr.mxu0 0.0
        %297 = vmatpush1.xpose.msra.mxu0 0.0
        %298 = vmatprep.subr.mxu0 0.0
        %299 = vmatpush1.xpose.msra.mxu0 0.0
        %300 = vmatprep.subr.mxu0 0.0
        %301 = vmatpush1.xpose.msra.mxu0 0.0
        %302 = vmatprep.subr.mxu0 0.0
        %303 = vmatpush1.xpose.msra.mxu0 0.0
        %304 = vmatprep.subr.mxu0 0.0
        %305 = vmatpush1.xpose.msra.mxu0 0.0
        %306 = vmatprep.subr.mxu0 0.0
        %307 = vmatpush1.xpose.msra.mxu0 0.0
        %308 = vmatprep.subr.mxu0 0.0
        %309 = vmatpush1.xpose.msra.mxu0 0.0
        %310 = vmatprep.subr.mxu0 0.0
        %311 = vmatpush1.xpose.msra.mxu0 0.0
        %312 = vmatprep.subr.mxu0 0.0
        %313 = vmatpush1.xpose.msra.mxu0 0.0
        %314 = vmatprep.subr.mxu0 0.0
        %315 = vmatpush1.xpose.msra.mxu0 0.0
        %316 = vmatprep.subr.mxu0 0.0
        %317 = vmatpush1.xpose.msra.mxu0 0.0
        %318 = vmatprep.subr.mxu0 0.0
        %319 = vmatpush1.xpose.msra.mxu0 0.0
        %320 = vmatprep.subr.mxu0 0.0
        %321 = vmatpush1.xpose.msra.mxu0 0.0
        %322 = vmatprep.subr.mxu0 0.0
        %323 = vmatpush1.xpose.msra.mxu0 0.0
        %324 = vmatprep.subr.mxu0 0.0
        %325 = vmatpush1.xpose.msra.mxu0 0.0
        %326 = vmatprep.subr.mxu0 0.0
        %327 = vmatpush1.xpose.msra.mxu0 0.0
        %328 = vmatprep.subr.mxu0 0.0
        %329 = vmatpush1.xpose.msra.mxu0 0.0
        %330 = vmatprep.subr.mxu0 0.0
        %331 = vmatpush1.xpose.msra.mxu0 0.0
        %332 = vmatprep.subr.mxu0 0.0
        %333 = vmatpush1.xpose.msra.mxu0 0.0
        %334 = vmatprep.subr.mxu0 0.0
        %335 = vmatpush1.xpose.msra.mxu0 0.0
        %336 = vmatprep.subr.mxu0 0.0
        %337 = vmatpush1.xpose.msra.mxu0 0.0
        %338 = vmatprep.subr.mxu0 0.0
        %339 = vmatpush1.xpose.msra.mxu0 0.0
        %340 = vmatprep.subr.mxu0 0.0
        %341 = vmatpush1.xpose.msra.mxu0 0.0
        %342 = vmatprep.subr.mxu0 0.0
        %343 = vmatpush1.xpose.msra.mxu0 0.0
        %344 = vmatprep.subr.mxu0 0.0
        %345 = vmatpush1.xpose.msra.mxu0 0.0
        %346 = vmatprep.mubr.f32.mxu0 0.0
        %v347 = vand.u32 %v270, 4294901760
        %v348 = vsub.f32 %v270, %v347
        %v349 = vand.u32 %v348, 4294901760
        %v350 = vsub.f32 %v348, %v349
        %v351 = vand.u32 %v350, 4294901760
        %352 = vmatmul.mubr.f32.gmra.mrb[0].mxu0 %v351
        %v353 = vpop.f32.mrb[0].mxu0
        %v354 = vadd.f32 0.0, %v353
        %v355 = vpop.f32.mrb[0].mxu0
        %356 = vmatprep.mubr.f32.mxu0 0.0
        %v357 = vand.u32 %v272, 4294901760
        %v358 = vsub.f32 %v272, %v357
        %v359 = vand.u32 %v358, 4294901760
        %v360 = vsub.f32 %v358, %v359
        %v361 = vand.u32 %v360, 4294901760
        %362 = vmatmul.mubr.f32.gmra.mrb[0].mxu0 %v361
        %v363 = vpop.f32.mrb[0].mxu0
        %v364 = vadd.f32 0.0, %v363
        %v365 = vpop.f32.mrb[0].mxu0
        %366 = vdwg.mxu0
        %367 = vmatprep.subr.mxu0 0.0
        %v368 = vand.u32 %v275, 4294901760
        %v369 = vsub.f32 %v275, %v368
        %v370 = vand.u32 %v369, 4294901760
        %v371 = vsub.f32 %v369, %v370
        %v372 = vand.u32 %v371, 4294901760
        %373 = vmatpush1.xpose.msra.mxu0 %v372
        %374 = vmatprep.subr.mxu0 0.0
        %v375 = vand.u32 %v278, 4294901760
        %v376 = vsub.f32 %v278, %v375
        %v377 = vand.u32 %v376, 4294901760
        %v378 = vsub.f32 %v376, %v377
        %v379 = vand.u32 %v378, 4294901760
        %380 = vmatpush1.xpose.msra.mxu0 %v379
        %381 = vmatprep.subr.mxu0 0.0
        %382 = vmatpush1.xpose.msra.mxu0 0.0
        %383 = vmatprep.subr.mxu0 0.0
        %384 = vmatpush1.xpose.msra.mxu0 0.0
        %385 = vmatprep.subr.mxu0 0.0
        %386 = vmatpush1.xpose.msra.mxu0 0.0
        %387 = vmatprep.subr.mxu0 0.0
        %388 = vmatpush1.xpose.msra.mxu0 0.0
        %389 = vmatprep.subr.mxu0 0.0
        %390 = vmatpush1.xpose.msra.mxu0 0.0
        %391 = vmatprep.subr.mxu0 0.0
        %392 = vmatpush1.xpose.msra.mxu0 0.0
        %393 = vmatprep.subr.mxu0 0.0
        %394 = vmatpush1.xpose.msra.mxu0 0.0
        %395 = vmatprep.subr.mxu0 0.0
        %396 = vmatpush1.xpose.msra.mxu0 0.0
        %397 = vmatprep.subr.mxu0 0.0
        %398 = vmatpush1.xpose.msra.mxu0 0.0
        %399 = vmatprep.subr.mxu0 0.0
        %400 = vmatpush1.xpose.msra.mxu0 0.0
        %401 = vmatprep.subr.mxu0 0.0
        %402 = vmatpush1.xpose.msra.mxu0 0.0
        %403 = vmatprep.subr.mxu0 0.0
        %404 = vmatpush1.xpose.msra.mxu0 0.0
        %405 = vmatprep.subr.mxu0 0.0
        %406 = vmatpush1.xpose.msra.mxu0 0.0
        %407 = vmatprep.subr.mxu0 0.0
        %408 = vmatpush1.xpose.msra.mxu0 0.0
        %409 = vmatprep.subr.mxu0 0.0
        %410 = vmatpush1.xpose.msra.mxu0 0.0
        %411 = vmatprep.subr.mxu0 0.0
        %412 = vmatpush1.xpose.msra.mxu0 0.0
        %413 = vmatprep.subr.mxu0 0.0
        %414 = vmatpush1.xpose.msra.mxu0 0.0
        %415 = vmatprep.subr.mxu0 0.0
        %416 = vmatpush1.xpose.msra.mxu0 0.0
        %417 = vmatprep.subr.mxu0 0.0
        %418 = vmatpush1.xpose.msra.mxu0 0.0
        %419 = vmatprep.subr.mxu0 0.0
        %420 = vmatpush1.xpose.msra.mxu0 0.0
        %421 = vmatprep.subr.mxu0 0.0
        %422 = vmatpush1.xpose.msra.mxu0 0.0
        %423 = vmatprep.subr.mxu0 0.0
        %424 = vmatpush1.xpose.msra.mxu0 0.0
        %425 = vmatprep.subr.mxu0 0.0
        %426 = vmatpush1.xpose.msra.mxu0 0.0
        %427 = vmatprep.subr.mxu0 0.0
        %428 = vmatpush1.xpose.msra.mxu0 0.0
        %429 = vmatprep.subr.mxu0 0.0
        %430 = vmatpush1.xpose.msra.mxu0 0.0
        %431 = vmatprep.subr.mxu0 0.0
        %432 = vmatpush1.xpose.msra.mxu0 0.0
        %433 = vmatprep.subr.mxu0 0.0
        %434 = vmatpush1.xpose.msra.mxu0 0.0
        %435 = vmatprep.subr.mxu0 0.0
        %436 = vmatpush1.xpose.msra.mxu0 0.0
        %437 = vmatprep.subr.mxu0 0.0
        %438 = vmatpush1.xpose.msra.mxu0 0.0
        %439 = vmatprep.subr.mxu0 0.0
        %440 = vmatpush1.xpose.msra.mxu0 0.0
        %441 = vmatprep.mubr.f32.mxu0 0.0
        %v442 = vand.u32 %v270, 4294901760
        %443 = vmatmul.mubr.f32.gmra.mrb[0].mxu0 %v442
        %v444 = vpop.f32.mrb[0].mxu0
        %v445 = vadd.f32 %v354, %v444
        %v446 = vpop.f32.mrb[0].mxu0
        %447 = vmatprep.mubr.f32.mxu0 0.0
        %v448 = vand.u32 %v272, 4294901760
        %449 = vmatmul.mubr.f32.gmra.mrb[0].mxu0 %v448
        %v450 = vpop.f32.mrb[0].mxu0
        %v451 = vadd.f32 %v364, %v450
        %v452 = vpop.f32.mrb[0].mxu0
        %453 = vdwg.mxu0
        %454 = vmatprep.subr.mxu0 0.0
        %v455 = vand.u32 %v275, 4294901760
        %v456 = vsub.f32 %v275, %v455
        %457 = vmatpush1.xpose.msra.mxu0 %v456
        %458 = vmatprep.subr.mxu0 0.0
        %v459 = vand.u32 %v278, 4294901760
        %v460 = vsub.f32 %v278, %v459
        %461 = vmatpush1.xpose.msra.mxu0 %v460
        %462 = vmatprep.subr.mxu0 0.0
        %463 = vmatpush1.xpose.msra.mxu0 0.0
        %464 = vmatprep.subr.mxu0 0.0
        %465 = vmatpush1.xpose.msra.mxu0 0.0
        %466 = vmatprep.subr.mxu0 0.0
        %467 = vmatpush1.xpose.msra.mxu0 0.0
        %468 = vmatprep.subr.mxu0 0.0
        %469 = vmatpush1.xpose.msra.mxu0 0.0
        %470 = vmatprep.subr.mxu0 0.0
        %471 = vmatpush1.xpose.msra.mxu0 0.0
        %472 = vmatprep.subr.mxu0 0.0
        %473 = vmatpush1.xpose.msra.mxu0 0.0
        %474 = vmatprep.subr.mxu0 0.0
        %475 = vmatpush1.xpose.msra.mxu0 0.0
        %476 = vmatprep.subr.mxu0 0.0
        %477 = vmatpush1.xpose.msra.mxu0 0.0
        %478 = vmatprep.subr.mxu0 0.0
        %479 = vmatpush1.xpose.msra.mxu0 0.0
        %480 = vmatprep.subr.mxu0 0.0
        %481 = vmatpush1.xpose.msra.mxu0 0.0
        %482 = vmatprep.subr.mxu0 0.0
        %483 = vmatpush1.xpose.msra.mxu0 0.0
        %484 = vmatprep.subr.mxu0 0.0
        %485 = vmatpush1.xpose.msra.mxu0 0.0
        %486 = vmatprep.subr.mxu0 0.0
        %487 = vmatpush1.xpose.msra.mxu0 0.0
        %488 = vmatprep.subr.mxu0 0.0
        %489 = vmatpush1.xpose.msra.mxu0 0.0
        %490 = vmatprep.subr.mxu0 0.0
        %491 = vmatpush1.xpose.msra.mxu0 0.0
        %492 = vmatprep.subr.mxu0 0.0
        %493 = vmatpush1.xpose.msra.mxu0 0.0
        %494 = vmatprep.subr.mxu0 0.0
        %495 = vmatpush1.xpose.msra.mxu0 0.0
        %496 = vmatprep.subr.mxu0 0.0
        %497 = vmatpush1.xpose.msra.mxu0 0.0
        %498 = vmatprep.subr.mxu0 0.0
        %499 = vmatpush1.xpose.msra.mxu0 0.0
        %500 = vmatprep.subr.mxu0 0.0
        %501 = vmatpush1.xpose.msra.mxu0 0.0
        %502 = vmatprep.subr.mxu0 0.0
        %503 = vmatpush1.xpose.msra.mxu0 0.0
        %504 = vmatprep.subr.mxu0 0.0
        %505 = vmatpush1.xpose.msra.mxu0 0.0
        %506 = vmatprep.subr.mxu0 0.0
        %507 = vmatpush1.xpose.msra.mxu0 0.0
        %508 = vmatprep.subr.mxu0 0.0
        %509 = vmatpush1.xpose.msra.mxu0 0.0
        %510 = vmatprep.subr.mxu0 0.0
        %511 = vmatpush1.xpose.msra.mxu0 0.0
        %512 = vmatprep.subr.mxu0 0.0
        %513 = vmatpush1.xpose.msra.mxu0 0.0
        %514 = vmatprep.subr.mxu0 0.0
        %515 = vmatpush1.xpose.msra.mxu0 0.0
        %516 = vmatprep.subr.mxu0 0.0
        %517 = vmatpush1.xpose.msra.mxu0 0.0
        %518 = vmatprep.subr.mxu0 0.0
        %519 = vmatpush1.xpose.msra.mxu0 0.0
        %520 = vmatprep.subr.mxu0 0.0
        %521 = vmatpush1.xpose.msra.mxu0 0.0
        %522 = vmatprep.mubr.f32.mxu0 0.0
        %v523 = vand.u32 %v270, 4294901760
        %v524 = vsub.f32 %v270, %v523
        %525 = vmatmul.mubr.f32.gmra.mrb[0].mxu0 %v524
        %v526 = vpop.f32.mrb[0].mxu0
        %v527 = vadd.f32 %v445, %v526
        %v528 = vpop.f32.mrb[0].mxu0
        %529 = vmatprep.mubr.f32.mxu0 0.0
        %v530 = vand.u32 %v272, 4294901760
        %v531 = vsub.f32 %v272, %v530
        %532 = vmatmul.mubr.f32.gmra.mrb[0].mxu0 %v531
        %v533 = vpop.f32.mrb[0].mxu0
        %v534 = vadd.f32 %v451, %v533
        %v535 = vpop.f32.mrb[0].mxu0
        %536 = vdwg.mxu0
        %537 = vmatprep.subr.mxu0 0.0
        %v538 = vand.u32 %v275, 4294901760
        %539 = vmatpush1.xpose.msra.mxu0 %v538
        %540 = vmatprep.subr.mxu0 0.0
        %v541 = vand.u32 %v278, 4294901760
        %542 = vmatpush1.xpose.msra.mxu0 %v541
        %543 = vmatprep.subr.mxu0 0.0
        %544 = vmatpush1.xpose.msra.mxu0 0.0
        %545 = vmatprep.subr.mxu0 0.0
        %546 = vmatpush1.xpose.msra.mxu0 0.0
        %547 = vmatprep.subr.mxu0 0.0
        %548 = vmatpush1.xpose.msra.mxu0 0.0
        %549 = vmatprep.subr.mxu0 0.0
        %550 = vmatpush1.xpose.msra.mxu0 0.0
        %551 = vmatprep.subr.mxu0 0.0
        %552 = vmatpush1.xpose.msra.mxu0 0.0
        %553 = vmatprep.subr.mxu0 0.0
        %554 = vmatpush1.xpose.msra.mxu0 0.0
        %555 = vmatprep.subr.mxu0 0.0
        %556 = vmatpush1.xpose.msra.mxu0 0.0
        %557 = vmatprep.subr.mxu0 0.0
        %558 = vmatpush1.xpose.msra.mxu0 0.0
        %559 = vmatprep.subr.mxu0 0.0
        %560 = vmatpush1.xpose.msra.mxu0 0.0
        %561 = vmatprep.subr.mxu0 0.0
        %562 = vmatpush1.xpose.msra.mxu0 0.0
        %563 = vmatprep.subr.mxu0 0.0
        %564 = vmatpush1.xpose.msra.mxu0 0.0
        %565 = vmatprep.subr.mxu0 0.0
        %566 = vmatpush1.xpose.msra.mxu0 0.0
        %567 = vmatprep.subr.mxu0 0.0
        %568 = vmatpush1.xpose.msra.mxu0 0.0
        %569 = vmatprep.subr.mxu0 0.0
        %570 = vmatpush1.xpose.msra.mxu0 0.0
        %571 = vmatprep.subr.mxu0 0.0
        %572 = vmatpush1.xpose.msra.mxu0 0.0
        %573 = vmatprep.subr.mxu0 0.0
        %574 = vmatpush1.xpose.msra.mxu0 0.0
        %575 = vmatprep.subr.mxu0 0.0
        %576 = vmatpush1.xpose.msra.mxu0 0.0
        %577 = vmatprep.subr.mxu0 0.0
        %578 = vmatpush1.xpose.msra.mxu0 0.0
        %579 = vmatprep.subr.mxu0 0.0
        %580 = vmatpush1.xpose.msra.mxu0 0.0
        %581 = vmatprep.subr.mxu0 0.0
        %582 = vmatpush1.xpose.msra.mxu0 0.0
        %583 = vmatprep.subr.mxu0 0.0
        %584 = vmatpush1.xpose.msra.mxu0 0.0
        %585 = vmatprep.subr.mxu0 0.0
        %586 = vmatpush1.xpose.msra.mxu0 0.0
        %587 = vmatprep.subr.mxu0 0.0
        %588 = vmatpush1.xpose.msra.mxu0 0.0
        %589 = vmatprep.subr.mxu0 0.0
        %590 = vmatpush1.xpose.msra.mxu0 0.0
        %591 = vmatprep.subr.mxu0 0.0
        %592 = vmatpush1.xpose.msra.mxu0 0.0
        %593 = vmatprep.subr.mxu0 0.0
        %594 = vmatpush1.xpose.msra.mxu0 0.0
        %595 = vmatprep.subr.mxu0 0.0
        %596 = vmatpush1.xpose.msra.mxu0 0.0
        %597 = vmatprep.subr.mxu0 0.0
        %598 = vmatpush1.xpose.msra.mxu0 0.0
        %599 = vmatprep.subr.mxu0 0.0
        %600 = vmatpush1.xpose.msra.mxu0 0.0
        %601 = vmatprep.subr.mxu0 0.0
        %602 = vmatpush1.xpose.msra.mxu0 0.0
        %603 = vmatprep.mubr.f32.mxu0 0.0
        %v604 = vand.u32 %v270, 4294901760
        %v605 = vsub.f32 %v270, %v604
        %v606 = vand.u32 %v605, 4294901760
        %607 = vmatmul.mubr.f32.gmra.mrb[0].mxu0 %v606
        %v608 = vpop.f32.mrb[0].mxu0
        %v609 = vadd.f32 %v527, %v608
        %v610 = vpop.f32.mrb[0].mxu0
        %611 = vmatprep.mubr.f32.mxu0 0.0
        %v612 = vand.u32 %v272, 4294901760
        %v613 = vsub.f32 %v272, %v612
        %v614 = vand.u32 %v613, 4294901760
        %615 = vmatmul.mubr.f32.gmra.mrb[0].mxu0 %v614
        %v616 = vpop.f32.mrb[0].mxu0
        %v617 = vadd.f32 %v534, %v616
        %v618 = vpop.f32.mrb[0].mxu0
        %619 = vdwg.mxu0
        %620 = vmatprep.subr.mxu0 0.0
        %v621 = vand.u32 %v275, 4294901760
        %v622 = vsub.f32 %v275, %v621
        %v623 = vand.u32 %v622, 4294901760
        %624 = vmatpush1.xpose.msra.mxu0 %v623
        %625 = vmatprep.subr.mxu0 0.0
        %v626 = vand.u32 %v278, 4294901760
        %v627 = vsub.f32 %v278, %v626
        %v628 = vand.u32 %v627, 4294901760
        %629 = vmatpush1.xpose.msra.mxu0 %v628
        %630 = vmatprep.subr.mxu0 0.0
        %631 = vmatpush1.xpose.msra.mxu0 0.0
        %632 = vmatprep.subr.mxu0 0.0
        %633 = vmatpush1.xpose.msra.mxu0 0.0
        %634 = vmatprep.subr.mxu0 0.0
        %635 = vmatpush1.xpose.msra.mxu0 0.0
        %636 = vmatprep.subr.mxu0 0.0
        %637 = vmatpush1.xpose.msra.mxu0 0.0
        %638 = vmatprep.subr.mxu0 0.0
        %639 = vmatpush1.xpose.msra.mxu0 0.0
        %640 = vmatprep.subr.mxu0 0.0
        %641 = vmatpush1.xpose.msra.mxu0 0.0
        %642 = vmatprep.subr.mxu0 0.0
        %643 = vmatpush1.xpose.msra.mxu0 0.0
        %644 = vmatprep.subr.mxu0 0.0
        %645 = vmatpush1.xpose.msra.mxu0 0.0
        %646 = vmatprep.subr.mxu0 0.0
        %647 = vmatpush1.xpose.msra.mxu0 0.0
        %648 = vmatprep.subr.mxu0 0.0
        %649 = vmatpush1.xpose.msra.mxu0 0.0
        %650 = vmatprep.subr.mxu0 0.0
        %651 = vmatpush1.xpose.msra.mxu0 0.0
        %652 = vmatprep.subr.mxu0 0.0
        %653 = vmatpush1.xpose.msra.mxu0 0.0
        %654 = vmatprep.subr.mxu0 0.0
        %655 = vmatpush1.xpose.msra.mxu0 0.0
        %656 = vmatprep.subr.mxu0 0.0
        %657 = vmatpush1.xpose.msra.mxu0 0.0
        %658 = vmatprep.subr.mxu0 0.0
        %659 = vmatpush1.xpose.msra.mxu0 0.0
        %660 = vmatprep.subr.mxu0 0.0
        %661 = vmatpush1.xpose.msra.mxu0 0.0
        %662 = vmatprep.subr.mxu0 0.0
        %663 = vmatpush1.xpose.msra.mxu0 0.0
        %664 = vmatprep.subr.mxu0 0.0
        %665 = vmatpush1.xpose.msra.mxu0 0.0
        %666 = vmatprep.subr.mxu0 0.0
        %667 = vmatpush1.xpose.msra.mxu0 0.0
        %668 = vmatprep.subr.mxu0 0.0
        %669 = vmatpush1.xpose.msra.mxu0 0.0
        %670 = vmatprep.subr.mxu0 0.0
        %671 = vmatpush1.xpose.msra.mxu0 0.0
        %672 = vmatprep.subr.mxu0 0.0
        %673 = vmatpush1.xpose.msra.mxu0 0.0
        %674 = vmatprep.subr.mxu0 0.0
        %675 = vmatpush1.xpose.msra.mxu0 0.0
        %676 = vmatprep.subr.mxu0 0.0
        %677 = vmatpush1.xpose.msra.mxu0 0.0
        %678 = vmatprep.subr.mxu0 0.0
        %679 = vmatpush1.xpose.msra.mxu0 0.0
        %680 = vmatprep.subr.mxu0 0.0
        %681 = vmatpush1.xpose.msra.mxu0 0.0
        %682 = vmatprep.subr.mxu0 0.0
        %683 = vmatpush1.xpose.msra.mxu0 0.0
        %684 = vmatprep.subr.mxu0 0.0
        %685 = vmatpush1.xpose.msra.mxu0 0.0
        %686 = vmatprep.subr.mxu0 0.0
        %687 = vmatpush1.xpose.msra.mxu0 0.0
        %688 = vmatprep.subr.mxu0 0.0
        %689 = vmatpush1.xpose.msra.mxu0 0.0
        %690 = vmatprep.mubr.f32.mxu0 0.0
        %v691 = vand.u32 %v270, 4294901760
        %692 = vmatmul.mubr.f32.gmra.mrb[0].mxu0 %v691
        %v693 = vpop.f32.mrb[0].mxu0
        %v694 = vadd.f32 %v609, %v693
        %v695 = vpop.f32.mrb[0].mxu0
        %696 = vmatprep.mubr.f32.mxu0 0.0
        %v697 = vand.u32 %v272, 4294901760
        %698 = vmatmul.mubr.f32.gmra.mrb[0].mxu0 %v697
        %v699 = vpop.f32.mrb[0].mxu0
        %v700 = vadd.f32 %v617, %v699
        %v701 = vpop.f32.mrb[0].mxu0
        %702 = vdwg.mxu0
        %703 = vmatprep.subr.mxu0 0.0
        %v704 = vand.u32 %v275, 4294901760
        %705 = vmatpush1.xpose.msra.mxu0 %v704
        %706 = vmatprep.subr.mxu0 0.0
        %v707 = vand.u32 %v278, 4294901760
        %708 = vmatpush1.xpose.msra.mxu0 %v707
        %709 = vmatprep.subr.mxu0 0.0
        %710 = vmatpush1.xpose.msra.mxu0 0.0
        %711 = vmatprep.subr.mxu0 0.0
        %712 = vmatpush1.xpose.msra.mxu0 0.0
        %713 = vmatprep.subr.mxu0 0.0
        %714 = vmatpush1.xpose.msra.mxu0 0.0
        %715 = vmatprep.subr.mxu0 0.0
        %716 = vmatpush1.xpose.msra.mxu0 0.0
        %717 = vmatprep.subr.mxu0 0.0
        %718 = vmatpush1.xpose.msra.mxu0 0.0
        %719 = vmatprep.subr.mxu0 0.0
        %720 = vmatpush1.xpose.msra.mxu0 0.0
        %721 = vmatprep.subr.mxu0 0.0
        %722 = vmatpush1.xpose.msra.mxu0 0.0
        %723 = vmatprep.subr.mxu0 0.0
        %724 = vmatpush1.xpose.msra.mxu0 0.0
        %725 = vmatprep.subr.mxu0 0.0
        %726 = vmatpush1.xpose.msra.mxu0 0.0
        %727 = vmatprep.subr.mxu0 0.0
        %728 = vmatpush1.xpose.msra.mxu0 0.0
        %729 = vmatprep.subr.mxu0 0.0
        %730 = vmatpush1.xpose.msra.mxu0 0.0
        %731 = vmatprep.subr.mxu0 0.0
        %732 = vmatpush1.xpose.msra.mxu0 0.0
        %733 = vmatprep.subr.mxu0 0.0
        %734 = vmatpush1.xpose.msra.mxu0 0.0
        %735 = vmatprep.subr.mxu0 0.0
        %736 = vmatpush1.xpose.msra.mxu0 0.0
        %737 = vmatprep.subr.mxu0 0.0
        %738 = vmatpush1.xpose.msra.mxu0 0.0
        %739 = vmatprep.subr.mxu0 0.0
        %740 = vmatpush1.xpose.msra.mxu0 0.0
        %741 = vmatprep.subr.mxu0 0.0
        %742 = vmatpush1.xpose.msra.mxu0 0.0
        %743 = vmatprep.subr.mxu0 0.0
        %744 = vmatpush1.xpose.msra.mxu0 0.0
        %745 = vmatprep.subr.mxu0 0.0
        %746 = vmatpush1.xpose.msra.mxu0 0.0
        %747 = vmatprep.subr.mxu0 0.0
        %748 = vmatpush1.xpose.msra.mxu0 0.0
        %749 = vmatprep.subr.mxu0 0.0
        %750 = vmatpush1.xpose.msra.mxu0 0.0
        %751 = vmatprep.subr.mxu0 0.0
        %752 = vmatpush1.xpose.msra.mxu0 0.0
        %753 = vmatprep.subr.mxu0 0.0
        %754 = vmatpush1.xpose.msra.mxu0 0.0
        %755 = vmatprep.subr.mxu0 0.0
        %756 = vmatpush1.xpose.msra.mxu0 0.0
        %757 = vmatprep.subr.mxu0 0.0
        %758 = vmatpush1.xpose.msra.mxu0 0.0
        %759 = vmatprep.subr.mxu0 0.0
        %760 = vmatpush1.xpose.msra.mxu0 0.0
        %761 = vmatprep.subr.mxu0 0.0
        %762 = vmatpush1.xpose.msra.mxu0 0.0
        %763 = vmatprep.subr.mxu0 0.0
        %764 = vmatpush1.xpose.msra.mxu0 0.0
        %765 = vmatprep.subr.mxu0 0.0
        %766 = vmatpush1.xpose.msra.mxu0 0.0
        %767 = vmatprep.subr.mxu0 0.0
        %768 = vmatpush1.xpose.msra.mxu0 0.0
        %769 = vmatprep.mubr.f32.mxu0 0.0
        %v770 = vand.u32 %v270, 4294901760
        %771 = vmatmul.mubr.f32.gmra.mrb[0].mxu0 %v770
        %v772 = vpop.f32.mrb[0].mxu0
        %v773 = vadd.f32 %v694, %v772
        %v774 = vpop.f32.mrb[0].mxu0
        %775 = vmatprep.mubr.f32.mxu0 0.0
        %v776 = vand.u32 %v272, 4294901760
        %777 = vmatmul.mubr.f32.gmra.mrb[0].mxu0 %v776
        %v778 = vpop.f32.mrb[0].mxu0
        %v779 = vadd.f32 %v700, %v778
        %v780 = vpop.f32.mrb[0].mxu0
        %781 = vdwg.mxu0
        %v782 = vmul.f32 %v255, %v255
        %v783 = vmul.f32 %v258, %v258
        %786 = vrot.lane.b32.xlu0 %v782, 96
        %v787 = vpop.permute.xlu0 %786
        %788 = vrot.lane.b32.xlu0 %v783, 96
        %v789 = vpop.permute.xlu0 %788
        %v792 = vsel %vm269, %v787, 0.0
        %793 = vadd.xlane.f32.xlu0 %v792
        %v794 = vpop.xlane.xlu0 %793
        %v795 = vsel %vm269, %v789, 0.0
        %796 = vadd.xlane.f32.xlu0 %v795
        %v797 = vpop.xlane.xlu0 %796
        %v798 = vmul.f32 %v773, 2.0
        %v799 = vmul.f32 %v779, 2.0
        %v800 = vsub.f32 %v794, %v798
        %v801 = vsub.f32 %v797, %v799
        %v802 = vmul.f32 %v261, %v261
        %v803 = vmul.f32 %v262, %v262
        %v804 = vsel %vm269, %v802, 0.0
        %805 = vadd.xlane.f32.xlu0 %v804
        %v806 = vpop.xlane.xlu0 %805
        %v807 = vsel %vm269, %v803, 0.0
        %808 = vadd.xlane.f32.xlu0 %v807
        %v809 = vpop.xlane.xlu0 %808
        %v812 = vlaneseq
        %v813 = vand.u32 %v812, 127
        %v814 = vlaneseq
        %v815 = vshrl.u32 %v814, 7
        %v816 = vsub.s32 %v813, %v815
        %v817 = vrot.slane %v806, %v816
        %v818 = vadd.s32 %v813, 4294967288
        %v819 = vlaneseq
        %v820 = vshrl.u32 %v819, 7
        %v821 = vsub.s32 %v818, %v820
        %v822 = vrot.slane %v809, %v821
        %vm823 = vcmask 130112
        %v824 = vsel %vm823, %v822, %v817
        %vm825 = vcmask 1042434
        %v826 = vsel %vm825, %v824, %v824
        %vm827 = vcmask 1043459
        %v828 = vsel %vm827, %v824, %v826
        %vm829 = vcmask 1044484
        %v830 = vsel %vm829, %v824, %v828
        %vm831 = vcmask 1045509
        %v832 = vsel %vm831, %v824, %v830
        %vm833 = vcmask 1046534
        %v834 = vsel %vm833, %v824, %v832
        %vm835 = vcmask 1047559
        %v836 = vsel %vm835, %v824, %v834
        %v838 = vadd.f32 %v800, %v836
        %v839 = vadd.f32 %v801, %v836
        %vm840 = vcmask 130048
        %v841 = vsel %vm840, %v838, inf
        %842 = vmin.xlane.f32.xlu0 %v841
        %v843 = vpop.xlane.xlu0 %842
        %v844 = vsel %vm840, %v839, inf
        %845 = vmin.xlane.f32.xlu0 %v844
        %v846 = vpop.xlane.xlu0 %845
        %vm847 = vcmp.le.f32.partialorder %v838, %v843
        %vm848 = vcmp.le.f32.partialorder %v839, %v846
        %v849 = vsel %vm847, %v813, 16
        %v850 = vsel %vm848, %v813, 16
        %v851 = vsel %vm840, %v849, 2147483647
        %v852 = vand.u32 %v851, 65535
        %v853 = vshra.s32 %v851, 16
        %v854 = vcvt.s32.f32 %v852
        %v855 = vcvt.s32.f32 %v853
        %856 = vmin.xlane.f32.xlu0 %v855
        %v857 = vpop.xlane.xlu0 %856
        %vm858 = vcmp.eq.f32.partialorder %v855, %v857
        %v859 = vsel %vm858, %v854, inf
        %860 = vmin.xlane.f32.xlu0 %v859
        %v861 = vpop.xlane.xlu0 %860
        %v862 = vcvt.f32.s32 %v861
        %v863 = vcvt.f32.s32 %v857
        %v864 = vshll.u32 %v863, 16
        %v865 = vadd.s32 %v864, %v862
        %v866 = vsel %vm840, %v850, 2147483647
        %v867 = vand.u32 %v866, 65535
        %v868 = vshra.s32 %v866, 16
        %v869 = vcvt.s32.f32 %v867
        %v870 = vcvt.s32.f32 %v868
        %871 = vmin.xlane.f32.xlu0 %v870
        %v872 = vpop.xlane.xlu0 %871
        %vm873 = vcmp.eq.f32.partialorder %v870, %v872
        %v874 = vsel %vm873, %v869, inf
        %875 = vmin.xlane.f32.xlu0 %v874
        %v876 = vpop.xlane.xlu0 %875
        %v877 = vcvt.f32.s32 %v876
        %v878 = vcvt.f32.s32 %v872
        %v879 = vshll.u32 %v878, 16
        %v880 = vadd.s32 %v879, %v877
        %vm881 = vcmp.eq.s32.totalorder %v813, %v865
        %vm882 = vcmp.eq.s32.totalorder %v813, %v880
        %v883 = vsel %vm881, 1, 0
        %v884 = vsel %vm882, 1, 0
        %v885 = vcvt.s32.f32 %v883
        %v886 = vcvt.s32.f32 %v884
        %v888 = vsel %vm840, %v885, 0
        %v891 = vsel %vm840, %v886, 0
        %893 = vmatprep.subr.mxu0 0.0
        %v894 = vand.u32 %v261, 4294901760
        %895 = vmatpush1.msra.mxu0 %v894
        %896 = vmatprep.subr.mxu0 0.0
        %v897 = vand.u32 %v262, 4294901760
        %898 = vmatpush1.msra.mxu0 %v897
        %899 = vmatprep.subr.mxu0 0.0
        %900 = vmatpush1.msra.mxu0 0.0
        %901 = vmatprep.subr.mxu0 0.0
        %902 = vmatpush1.msra.mxu0 0.0
        %903 = vmatprep.subr.mxu0 0.0
        %904 = vmatpush1.msra.mxu0 0.0
        %905 = vmatprep.subr.mxu0 0.0
        %906 = vmatpush1.msra.mxu0 0.0
        %907 = vmatprep.subr.mxu0 0.0
        %908 = vmatpush1.msra.mxu0 0.0
        %909 = vmatprep.subr.mxu0 0.0
        %910 = vmatpush1.msra.mxu0 0.0
        %911 = vmatprep.subr.mxu0 0.0
        %912 = vmatpush1.msra.mxu0 0.0
        %913 = vmatprep.subr.mxu0 0.0
        %914 = vmatpush1.msra.mxu0 0.0
        %915 = vmatprep.subr.mxu0 0.0
        %916 = vmatpush1.msra.mxu0 0.0
        %917 = vmatprep.subr.mxu0 0.0
        %918 = vmatpush1.msra.mxu0 0.0
        %919 = vmatprep.subr.mxu0 0.0
        %920 = vmatpush1.msra.mxu0 0.0
        %921 = vmatprep.subr.mxu0 0.0
        %922 = vmatpush1.msra.mxu0 0.0
        %923 = vmatprep.subr.mxu0 0.0
        %924 = vmatpush1.msra.mxu0 0.0
        %925 = vmatprep.subr.mxu0 0.0
        %926 = vmatpush1.msra.mxu0 0.0
        %927 = vmatprep.subr.mxu0 0.0
        %928 = vmatpush1.msra.mxu0 0.0
        %929 = vmatprep.subr.mxu0 0.0
        %930 = vmatpush1.msra.mxu0 0.0
        %931 = vmatprep.subr.mxu0 0.0
        %932 = vmatpush1.msra.mxu0 0.0
        %933 = vmatprep.subr.mxu0 0.0
        %934 = vmatpush1.msra.mxu0 0.0
        %935 = vmatprep.subr.mxu0 0.0
        %936 = vmatpush1.msra.mxu0 0.0
        %937 = vmatprep.subr.mxu0 0.0
        %938 = vmatpush1.msra.mxu0 0.0
        %939 = vmatprep.subr.mxu0 0.0
        %940 = vmatpush1.msra.mxu0 0.0
        %941 = vmatprep.subr.mxu0 0.0
        %942 = vmatpush1.msra.mxu0 0.0
        %943 = vmatprep.subr.mxu0 0.0
        %944 = vmatpush1.msra.mxu0 0.0
        %945 = vmatprep.subr.mxu0 0.0
        %946 = vmatpush1.msra.mxu0 0.0
        %947 = vmatprep.subr.mxu0 0.0
        %948 = vmatpush1.msra.mxu0 0.0
        %949 = vmatprep.subr.mxu0 0.0
        %950 = vmatpush1.msra.mxu0 0.0
        %951 = vmatprep.subr.mxu0 0.0
        %952 = vmatpush1.msra.mxu0 0.0
        %953 = vmatprep.subr.mxu0 0.0
        %954 = vmatpush1.msra.mxu0 0.0
        %955 = vmatprep.subr.mxu0 0.0
        %956 = vmatpush1.msra.mxu0 0.0
        %957 = vmatprep.subr.mxu0 0.0
        %958 = vmatpush1.msra.mxu0 0.0
        %959 = vmatprep.mubr.f32.mxu0 0.0
        %v960 = vand.u32 %v888, 4294901760
        %v961 = vsub.f32 %v888, %v960
        %v962 = vand.u32 %v961, 4294901760
        %v963 = vsub.f32 %v961, %v962
        %v964 = vand.u32 %v963, 4294901760
        %965 = vmatmul.mubr.f32.gmra.mrb[0].mxu0 %v964
        %v966 = vpop.f32.mrb[0].mxu0
        %v967 = vadd.f32 0.0, %v966
        %v968 = vpop.f32.mrb[0].mxu0
        %969 = vmatprep.mubr.f32.mxu0 0.0
        %v970 = vand.u32 %v891, 4294901760
        %v971 = vsub.f32 %v891, %v970
        %v972 = vand.u32 %v971, 4294901760
        %v973 = vsub.f32 %v971, %v972
        %v974 = vand.u32 %v973, 4294901760
        %975 = vmatmul.mubr.f32.gmra.mrb[0].mxu0 %v974
        %v976 = vpop.f32.mrb[0].mxu0
        %v977 = vadd.f32 0.0, %v976
        %v978 = vpop.f32.mrb[0].mxu0
        %979 = vdwg.mxu0
        %980 = vmatprep.subr.mxu0 0.0
        %v981 = vand.u32 %v261, 4294901760
        %v982 = vsub.f32 %v261, %v981
        %v983 = vand.u32 %v982, 4294901760
        %v984 = vsub.f32 %v982, %v983
        %v985 = vand.u32 %v984, 4294901760
        %986 = vmatpush1.msra.mxu0 %v985
        %987 = vmatprep.subr.mxu0 0.0
        %v988 = vand.u32 %v262, 4294901760
        %v989 = vsub.f32 %v262, %v988
        %v990 = vand.u32 %v989, 4294901760
        %v991 = vsub.f32 %v989, %v990
        %v992 = vand.u32 %v991, 4294901760
        %993 = vmatpush1.msra.mxu0 %v992
        %994 = vmatprep.subr.mxu0 0.0
        %995 = vmatpush1.msra.mxu0 0.0
        %996 = vmatprep.subr.mxu0 0.0
        %997 = vmatpush1.msra.mxu0 0.0
        %998 = vmatprep.subr.mxu0 0.0
        %999 = vmatpush1.msra.mxu0 0.0
        %1000 = vmatprep.subr.mxu0 0.0
        %1001 = vmatpush1.msra.mxu0 0.0
        %1002 = vmatprep.subr.mxu0 0.0
        %1003 = vmatpush1.msra.mxu0 0.0
        %1004 = vmatprep.subr.mxu0 0.0
        %1005 = vmatpush1.msra.mxu0 0.0
        %1006 = vmatprep.subr.mxu0 0.0
        %1007 = vmatpush1.msra.mxu0 0.0
        %1008 = vmatprep.subr.mxu0 0.0
        %1009 = vmatpush1.msra.mxu0 0.0
        %1010 = vmatprep.subr.mxu0 0.0
        %1011 = vmatpush1.msra.mxu0 0.0
        %1012 = vmatprep.subr.mxu0 0.0
        %1013 = vmatpush1.msra.mxu0 0.0
        %1014 = vmatprep.subr.mxu0 0.0
        %1015 = vmatpush1.msra.mxu0 0.0
        %1016 = vmatprep.subr.mxu0 0.0
        %1017 = vmatpush1.msra.mxu0 0.0
        %1018 = vmatprep.subr.mxu0 0.0
        %1019 = vmatpush1.msra.mxu0 0.0
        %1020 = vmatprep.subr.mxu0 0.0
        %1021 = vmatpush1.msra.mxu0 0.0
        %1022 = vmatprep.subr.mxu0 0.0
        %1023 = vmatpush1.msra.mxu0 0.0
        %1024 = vmatprep.subr.mxu0 0.0
        %1025 = vmatpush1.msra.mxu0 0.0
        %1026 = vmatprep.subr.mxu0 0.0
        %1027 = vmatpush1.msra.mxu0 0.0
        %1028 = vmatprep.subr.mxu0 0.0
        %1029 = vmatpush1.msra.mxu0 0.0
        %1030 = vmatprep.subr.mxu0 0.0
        %1031 = vmatpush1.msra.mxu0 0.0
        %1032 = vmatprep.subr.mxu0 0.0
        %1033 = vmatpush1.msra.mxu0 0.0
        %1034 = vmatprep.subr.mxu0 0.0
        %1035 = vmatpush1.msra.mxu0 0.0
        %1036 = vmatprep.subr.mxu0 0.0
        %1037 = vmatpush1.msra.mxu0 0.0
        %1038 = vmatprep.subr.mxu0 0.0
        %1039 = vmatpush1.msra.mxu0 0.0
        %1040 = vmatprep.subr.mxu0 0.0
        %1041 = vmatpush1.msra.mxu0 0.0
        %1042 = vmatprep.subr.mxu0 0.0
        %1043 = vmatpush1.msra.mxu0 0.0
        %1044 = vmatprep.subr.mxu0 0.0
        %1045 = vmatpush1.msra.mxu0 0.0
        %1046 = vmatprep.subr.mxu0 0.0
        %1047 = vmatpush1.msra.mxu0 0.0
        %1048 = vmatprep.subr.mxu0 0.0
        %1049 = vmatpush1.msra.mxu0 0.0
        %1050 = vmatprep.subr.mxu0 0.0
        %1051 = vmatpush1.msra.mxu0 0.0
        %1052 = vmatprep.subr.mxu0 0.0
        %1053 = vmatpush1.msra.mxu0 0.0
        %1054 = vmatprep.mubr.f32.mxu0 0.0
        %v1055 = vand.u32 %v888, 4294901760
        %1056 = vmatmul.mubr.f32.gmra.mrb[0].mxu0 %v1055
        %v1057 = vpop.f32.mrb[0].mxu0
        %v1058 = vadd.f32 %v967, %v1057
        %v1059 = vpop.f32.mrb[0].mxu0
        %1060 = vmatprep.mubr.f32.mxu0 0.0
        %v1061 = vand.u32 %v891, 4294901760
        %1062 = vmatmul.mubr.f32.gmra.mrb[0].mxu0 %v1061
        %v1063 = vpop.f32.mrb[0].mxu0
        %v1064 = vadd.f32 %v977, %v1063
        %v1065 = vpop.f32.mrb[0].mxu0
        %1066 = vdwg.mxu0
        %1067 = vmatprep.subr.mxu0 0.0
        %v1068 = vand.u32 %v261, 4294901760
        %v1069 = vsub.f32 %v261, %v1068
        %1070 = vmatpush1.msra.mxu0 %v1069
        %1071 = vmatprep.subr.mxu0 0.0
        %v1072 = vand.u32 %v262, 4294901760
        %v1073 = vsub.f32 %v262, %v1072
        %1074 = vmatpush1.msra.mxu0 %v1073
        %1075 = vmatprep.subr.mxu0 0.0
        %1076 = vmatpush1.msra.mxu0 0.0
        %1077 = vmatprep.subr.mxu0 0.0
        %1078 = vmatpush1.msra.mxu0 0.0
        %1079 = vmatprep.subr.mxu0 0.0
        %1080 = vmatpush1.msra.mxu0 0.0
        %1081 = vmatprep.subr.mxu0 0.0
        %1082 = vmatpush1.msra.mxu0 0.0
        %1083 = vmatprep.subr.mxu0 0.0
        %1084 = vmatpush1.msra.mxu0 0.0
        %1085 = vmatprep.subr.mxu0 0.0
        %1086 = vmatpush1.msra.mxu0 0.0
        %1087 = vmatprep.subr.mxu0 0.0
        %1088 = vmatpush1.msra.mxu0 0.0
        %1089 = vmatprep.subr.mxu0 0.0
        %1090 = vmatpush1.msra.mxu0 0.0
        %1091 = vmatprep.subr.mxu0 0.0
        %1092 = vmatpush1.msra.mxu0 0.0
        %1093 = vmatprep.subr.mxu0 0.0
        %1094 = vmatpush1.msra.mxu0 0.0
        %1095 = vmatprep.subr.mxu0 0.0
        %1096 = vmatpush1.msra.mxu0 0.0
        %1097 = vmatprep.subr.mxu0 0.0
        %1098 = vmatpush1.msra.mxu0 0.0
        %1099 = vmatprep.subr.mxu0 0.0
        %1100 = vmatpush1.msra.mxu0 0.0
        %1101 = vmatprep.subr.mxu0 0.0
        %1102 = vmatpush1.msra.mxu0 0.0
        %1103 = vmatprep.subr.mxu0 0.0
        %1104 = vmatpush1.msra.mxu0 0.0
        %1105 = vmatprep.subr.mxu0 0.0
        %1106 = vmatpush1.msra.mxu0 0.0
        %1107 = vmatprep.subr.mxu0 0.0
        %1108 = vmatpush1.msra.mxu0 0.0
        %1109 = vmatprep.subr.mxu0 0.0
        %1110 = vmatpush1.msra.mxu0 0.0
        %1111 = vmatprep.subr.mxu0 0.0
        %1112 = vmatpush1.msra.mxu0 0.0
        %1113 = vmatprep.subr.mxu0 0.0
        %1114 = vmatpush1.msra.mxu0 0.0
        %1115 = vmatprep.subr.mxu0 0.0
        %1116 = vmatpush1.msra.mxu0 0.0
        %1117 = vmatprep.subr.mxu0 0.0
        %1118 = vmatpush1.msra.mxu0 0.0
        %1119 = vmatprep.subr.mxu0 0.0
        %1120 = vmatpush1.msra.mxu0 0.0
        %1121 = vmatprep.subr.mxu0 0.0
        %1122 = vmatpush1.msra.mxu0 0.0
        %1123 = vmatprep.subr.mxu0 0.0
        %1124 = vmatpush1.msra.mxu0 0.0
        %1125 = vmatprep.subr.mxu0 0.0
        %1126 = vmatpush1.msra.mxu0 0.0
        %1127 = vmatprep.subr.mxu0 0.0
        %1128 = vmatpush1.msra.mxu0 0.0
        %1129 = vmatprep.subr.mxu0 0.0
        %1130 = vmatpush1.msra.mxu0 0.0
        %1131 = vmatprep.subr.mxu0 0.0
        %1132 = vmatpush1.msra.mxu0 0.0
        %1133 = vmatprep.subr.mxu0 0.0
        %1134 = vmatpush1.msra.mxu0 0.0
        %1135 = vmatprep.mubr.f32.mxu0 0.0
        %v1136 = vand.u32 %v888, 4294901760
        %v1137 = vsub.f32 %v888, %v1136
        %1138 = vmatmul.mubr.f32.gmra.mrb[0].mxu0 %v1137
        %v1139 = vpop.f32.mrb[0].mxu0
        %v1140 = vadd.f32 %v1058, %v1139
        %v1141 = vpop.f32.mrb[0].mxu0
        %1142 = vmatprep.mubr.f32.mxu0 0.0
        %v1143 = vand.u32 %v891, 4294901760
        %v1144 = vsub.f32 %v891, %v1143
        %1145 = vmatmul.mubr.f32.gmra.mrb[0].mxu0 %v1144
        %v1146 = vpop.f32.mrb[0].mxu0
        %v1147 = vadd.f32 %v1064, %v1146
        %v1148 = vpop.f32.mrb[0].mxu0
        %1149 = vdwg.mxu0
        %1150 = vmatprep.subr.mxu0 0.0
        %v1151 = vand.u32 %v261, 4294901760
        %1152 = vmatpush1.msra.mxu0 %v1151
        %1153 = vmatprep.subr.mxu0 0.0
        %v1154 = vand.u32 %v262, 4294901760
        %1155 = vmatpush1.msra.mxu0 %v1154
        %1156 = vmatprep.subr.mxu0 0.0
        %1157 = vmatpush1.msra.mxu0 0.0
        %1158 = vmatprep.subr.mxu0 0.0
        %1159 = vmatpush1.msra.mxu0 0.0
        %1160 = vmatprep.subr.mxu0 0.0
        %1161 = vmatpush1.msra.mxu0 0.0
        %1162 = vmatprep.subr.mxu0 0.0
        %1163 = vmatpush1.msra.mxu0 0.0
        %1164 = vmatprep.subr.mxu0 0.0
        %1165 = vmatpush1.msra.mxu0 0.0
        %1166 = vmatprep.subr.mxu0 0.0
        %1167 = vmatpush1.msra.mxu0 0.0
        %1168 = vmatprep.subr.mxu0 0.0
        %1169 = vmatpush1.msra.mxu0 0.0
        %1170 = vmatprep.subr.mxu0 0.0
        %1171 = vmatpush1.msra.mxu0 0.0
        %1172 = vmatprep.subr.mxu0 0.0
        %1173 = vmatpush1.msra.mxu0 0.0
        %1174 = vmatprep.subr.mxu0 0.0
        %1175 = vmatpush1.msra.mxu0 0.0
        %1176 = vmatprep.subr.mxu0 0.0
        %1177 = vmatpush1.msra.mxu0 0.0
        %1178 = vmatprep.subr.mxu0 0.0
        %1179 = vmatpush1.msra.mxu0 0.0
        %1180 = vmatprep.subr.mxu0 0.0
        %1181 = vmatpush1.msra.mxu0 0.0
        %1182 = vmatprep.subr.mxu0 0.0
        %1183 = vmatpush1.msra.mxu0 0.0
        %1184 = vmatprep.subr.mxu0 0.0
        %1185 = vmatpush1.msra.mxu0 0.0
        %1186 = vmatprep.subr.mxu0 0.0
        %1187 = vmatpush1.msra.mxu0 0.0
        %1188 = vmatprep.subr.mxu0 0.0
        %1189 = vmatpush1.msra.mxu0 0.0
        %1190 = vmatprep.subr.mxu0 0.0
        %1191 = vmatpush1.msra.mxu0 0.0
        %1192 = vmatprep.subr.mxu0 0.0
        %1193 = vmatpush1.msra.mxu0 0.0
        %1194 = vmatprep.subr.mxu0 0.0
        %1195 = vmatpush1.msra.mxu0 0.0
        %1196 = vmatprep.subr.mxu0 0.0
        %1197 = vmatpush1.msra.mxu0 0.0
        %1198 = vmatprep.subr.mxu0 0.0
        %1199 = vmatpush1.msra.mxu0 0.0
        %1200 = vmatprep.subr.mxu0 0.0
        %1201 = vmatpush1.msra.mxu0 0.0
        %1202 = vmatprep.subr.mxu0 0.0
        %1203 = vmatpush1.msra.mxu0 0.0
        %1204 = vmatprep.subr.mxu0 0.0
        %1205 = vmatpush1.msra.mxu0 0.0
        %1206 = vmatprep.subr.mxu0 0.0
        %1207 = vmatpush1.msra.mxu0 0.0
        %1208 = vmatprep.subr.mxu0 0.0
        %1209 = vmatpush1.msra.mxu0 0.0
        %1210 = vmatprep.subr.mxu0 0.0
        %1211 = vmatpush1.msra.mxu0 0.0
        %1212 = vmatprep.subr.mxu0 0.0
        %1213 = vmatpush1.msra.mxu0 0.0
        %1214 = vmatprep.subr.mxu0 0.0
        %1215 = vmatpush1.msra.mxu0 0.0
        %1216 = vmatprep.mubr.f32.mxu0 0.0
        %v1217 = vand.u32 %v888, 4294901760
        %v1218 = vsub.f32 %v888, %v1217
        %v1219 = vand.u32 %v1218, 4294901760
        %1220 = vmatmul.mubr.f32.gmra.mrb[0].mxu0 %v1219
        %v1221 = vpop.f32.mrb[0].mxu0
        %v1222 = vadd.f32 %v1140, %v1221
        %v1223 = vpop.f32.mrb[0].mxu0
        %1224 = vmatprep.mubr.f32.mxu0 0.0
        %v1225 = vand.u32 %v891, 4294901760
        %v1226 = vsub.f32 %v891, %v1225
        %v1227 = vand.u32 %v1226, 4294901760
        %1228 = vmatmul.mubr.f32.gmra.mrb[0].mxu0 %v1227
        %v1229 = vpop.f32.mrb[0].mxu0
        %v1230 = vadd.f32 %v1147, %v1229
        %v1231 = vpop.f32.mrb[0].mxu0
        %1232 = vdwg.mxu0
        %1233 = vmatprep.subr.mxu0 0.0
        %v1234 = vand.u32 %v261, 4294901760
        %v1235 = vsub.f32 %v261, %v1234
        %v1236 = vand.u32 %v1235, 4294901760
        %1237 = vmatpush1.msra.mxu0 %v1236
        %1238 = vmatprep.subr.mxu0 0.0
        %v1239 = vand.u32 %v262, 4294901760
        %v1240 = vsub.f32 %v262, %v1239
        %v1241 = vand.u32 %v1240, 4294901760
        %1242 = vmatpush1.msra.mxu0 %v1241
        %1243 = vmatprep.subr.mxu0 0.0
        %1244 = vmatpush1.msra.mxu0 0.0
        %1245 = vmatprep.subr.mxu0 0.0
        %1246 = vmatpush1.msra.mxu0 0.0
        %1247 = vmatprep.subr.mxu0 0.0
        %1248 = vmatpush1.msra.mxu0 0.0
        %1249 = vmatprep.subr.mxu0 0.0
        %1250 = vmatpush1.msra.mxu0 0.0
        %1251 = vmatprep.subr.mxu0 0.0
        %1252 = vmatpush1.msra.mxu0 0.0
        %1253 = vmatprep.subr.mxu0 0.0
        %1254 = vmatpush1.msra.mxu0 0.0
        %1255 = vmatprep.subr.mxu0 0.0
        %1256 = vmatpush1.msra.mxu0 0.0
        %1257 = vmatprep.subr.mxu0 0.0
        %1258 = vmatpush1.msra.mxu0 0.0
        %1259 = vmatprep.subr.mxu0 0.0
        %1260 = vmatpush1.msra.mxu0 0.0
        %1261 = vmatprep.subr.mxu0 0.0
        %1262 = vmatpush1.msra.mxu0 0.0
        %1263 = vmatprep.subr.mxu0 0.0
        %1264 = vmatpush1.msra.mxu0 0.0
        %1265 = vmatprep.subr.mxu0 0.0
        %1266 = vmatpush1.msra.mxu0 0.0
        %1267 = vmatprep.subr.mxu0 0.0
        %1268 = vmatpush1.msra.mxu0 0.0
        %1269 = vmatprep.subr.mxu0 0.0
        %1270 = vmatpush1.msra.mxu0 0.0
        %1271 = vmatprep.subr.mxu0 0.0
        %1272 = vmatpush1.msra.mxu0 0.0
        %1273 = vmatprep.subr.mxu0 0.0
        %1274 = vmatpush1.msra.mxu0 0.0
        %1275 = vmatprep.subr.mxu0 0.0
        %1276 = vmatpush1.msra.mxu0 0.0
        %1277 = vmatprep.subr.mxu0 0.0
        %1278 = vmatpush1.msra.mxu0 0.0
        %1279 = vmatprep.subr.mxu0 0.0
        %1280 = vmatpush1.msra.mxu0 0.0
        %1281 = vmatprep.subr.mxu0 0.0
        %1282 = vmatpush1.msra.mxu0 0.0
        %1283 = vmatprep.subr.mxu0 0.0
        %1284 = vmatpush1.msra.mxu0 0.0
        %1285 = vmatprep.subr.mxu0 0.0
        %1286 = vmatpush1.msra.mxu0 0.0
        %1287 = vmatprep.subr.mxu0 0.0
        %1288 = vmatpush1.msra.mxu0 0.0
        %1289 = vmatprep.subr.mxu0 0.0
        %1290 = vmatpush1.msra.mxu0 0.0
        %1291 = vmatprep.subr.mxu0 0.0
        %1292 = vmatpush1.msra.mxu0 0.0
        %1293 = vmatprep.subr.mxu0 0.0
        %1294 = vmatpush1.msra.mxu0 0.0
        %1295 = vmatprep.subr.mxu0 0.0
        %1296 = vmatpush1.msra.mxu0 0.0
        %1297 = vmatprep.subr.mxu0 0.0
        %1298 = vmatpush1.msra.mxu0 0.0
        %1299 = vmatprep.subr.mxu0 0.0
        %1300 = vmatpush1.msra.mxu0 0.0
        %1301 = vmatprep.subr.mxu0 0.0
        %1302 = vmatpush1.msra.mxu0 0.0
        %1303 = vmatprep.mubr.f32.mxu0 0.0
        %v1304 = vand.u32 %v888, 4294901760
        %1305 = vmatmul.mubr.f32.gmra.mrb[0].mxu0 %v1304
        %v1306 = vpop.f32.mrb[0].mxu0
        %v1307 = vadd.f32 %v1222, %v1306
        %v1308 = vpop.f32.mrb[0].mxu0
        %1309 = vmatprep.mubr.f32.mxu0 0.0
        %v1310 = vand.u32 %v891, 4294901760
        %1311 = vmatmul.mubr.f32.gmra.mrb[0].mxu0 %v1310
        %v1312 = vpop.f32.mrb[0].mxu0
        %v1313 = vadd.f32 %v1230, %v1312
        %v1314 = vpop.f32.mrb[0].mxu0
        %1315 = vdwg.mxu0
        %1316 = vmatprep.subr.mxu0 0.0
        %v1317 = vand.u32 %v261, 4294901760
        %1318 = vmatpush1.msra.mxu0 %v1317
        %1319 = vmatprep.subr.mxu0 0.0
        %v1320 = vand.u32 %v262, 4294901760
        %1321 = vmatpush1.msra.mxu0 %v1320
        %1322 = vmatprep.subr.mxu0 0.0
        %1323 = vmatpush1.msra.mxu0 0.0
        %1324 = vmatprep.subr.mxu0 0.0
        %1325 = vmatpush1.msra.mxu0 0.0
        %1326 = vmatprep.subr.mxu0 0.0
        %1327 = vmatpush1.msra.mxu0 0.0
        %1328 = vmatprep.subr.mxu0 0.0
        %1329 = vmatpush1.msra.mxu0 0.0
        %1330 = vmatprep.subr.mxu0 0.0
        %1331 = vmatpush1.msra.mxu0 0.0
        %1332 = vmatprep.subr.mxu0 0.0
        %1333 = vmatpush1.msra.mxu0 0.0
        %1334 = vmatprep.subr.mxu0 0.0
        %1335 = vmatpush1.msra.mxu0 0.0
        %1336 = vmatprep.subr.mxu0 0.0
        %1337 = vmatpush1.msra.mxu0 0.0
        %1338 = vmatprep.subr.mxu0 0.0
        %1339 = vmatpush1.msra.mxu0 0.0
        %1340 = vmatprep.subr.mxu0 0.0
        %1341 = vmatpush1.msra.mxu0 0.0
        %1342 = vmatprep.subr.mxu0 0.0
        %1343 = vmatpush1.msra.mxu0 0.0
        %1344 = vmatprep.subr.mxu0 0.0
        %1345 = vmatpush1.msra.mxu0 0.0
        %1346 = vmatprep.subr.mxu0 0.0
        %1347 = vmatpush1.msra.mxu0 0.0
        %1348 = vmatprep.subr.mxu0 0.0
        %1349 = vmatpush1.msra.mxu0 0.0
        %1350 = vmatprep.subr.mxu0 0.0
        %1351 = vmatpush1.msra.mxu0 0.0
        %1352 = vmatprep.subr.mxu0 0.0
        %1353 = vmatpush1.msra.mxu0 0.0
        %1354 = vmatprep.subr.mxu0 0.0
        %1355 = vmatpush1.msra.mxu0 0.0
        %1356 = vmatprep.subr.mxu0 0.0
        %1357 = vmatpush1.msra.mxu0 0.0
        %1358 = vmatprep.subr.mxu0 0.0
        %1359 = vmatpush1.msra.mxu0 0.0
        %1360 = vmatprep.subr.mxu0 0.0
        %1361 = vmatpush1.msra.mxu0 0.0
        %1362 = vmatprep.subr.mxu0 0.0
        %1363 = vmatpush1.msra.mxu0 0.0
        %1364 = vmatprep.subr.mxu0 0.0
        %1365 = vmatpush1.msra.mxu0 0.0
        %1366 = vmatprep.subr.mxu0 0.0
        %1367 = vmatpush1.msra.mxu0 0.0
        %1368 = vmatprep.subr.mxu0 0.0
        %1369 = vmatpush1.msra.mxu0 0.0
        %1370 = vmatprep.subr.mxu0 0.0
        %1371 = vmatpush1.msra.mxu0 0.0
        %1372 = vmatprep.subr.mxu0 0.0
        %1373 = vmatpush1.msra.mxu0 0.0
        %1374 = vmatprep.subr.mxu0 0.0
        %1375 = vmatpush1.msra.mxu0 0.0
        %1376 = vmatprep.subr.mxu0 0.0
        %1377 = vmatpush1.msra.mxu0 0.0
        %1378 = vmatprep.subr.mxu0 0.0
        %1379 = vmatpush1.msra.mxu0 0.0
        %1380 = vmatprep.subr.mxu0 0.0
        %1381 = vmatpush1.msra.mxu0 0.0
        %1382 = vmatprep.mubr.f32.mxu0 0.0
        %v1383 = vand.u32 %v888, 4294901760
        %1384 = vmatmul.mubr.f32.gmra.mrb[0].mxu0 %v1383
        %v1385 = vpop.f32.mrb[0].mxu0
        %v1386 = vadd.f32 %v1307, %v1385
        %v1387 = vpop.f32.mrb[0].mxu0
        %1388 = vmatprep.mubr.f32.mxu0 0.0
        %v1389 = vand.u32 %v891, 4294901760
        %1390 = vmatmul.mubr.f32.gmra.mrb[0].mxu0 %v1389
        %v1391 = vpop.f32.mrb[0].mxu0
        %v1392 = vadd.f32 %v1313, %v1391
        %v1393 = vpop.f32.mrb[0].mxu0
        %1394 = vdwg.mxu0
        %v1395 = vpack.c.bf16 %v258, %v255
        %v1396 = vpack.c.bf16 %v1392, %v1386
        %v1398 = vsel %vm269, %v1395, 0
        %v1401 = vsel %vm269, %v1396, 0
        %1403 = vmatprep.subr.bf16.mxu0 0
        %1404 = vmatpush1.bf16.xpose.msra.mxu0 %v1401
        %1405 = vmatprep.subr.bf16.mxu0 0
        %1406 = vmatpush1.bf16.xpose.msra.mxu0 0
        %1407 = vmatprep.subr.bf16.mxu0 0
        %1408 = vmatpush1.bf16.xpose.msra.mxu0 0
        %1409 = vmatprep.subr.bf16.mxu0 0
        %1410 = vmatpush1.bf16.xpose.msra.mxu0 0
        %1411 = vmatprep.subr.bf16.mxu0 0
        %1412 = vmatpush1.bf16.xpose.msra.mxu0 0
        %1413 = vmatprep.subr.bf16.mxu0 0
        %1414 = vmatpush1.bf16.xpose.msra.mxu0 0
        %1415 = vmatprep.subr.bf16.mxu0 0
        %1416 = vmatpush1.bf16.xpose.msra.mxu0 0
        %1417 = vmatprep.subr.bf16.mxu0 0
        %1418 = vmatpush1.bf16.xpose.msra.mxu0 0
        %1419 = vmatprep.subr.bf16.mxu0 0
        %1420 = vmatpush1.bf16.xpose.msra.mxu0 0
        %1421 = vmatprep.subr.bf16.mxu0 0
        %1422 = vmatpush1.bf16.xpose.msra.mxu0 0
        %1423 = vmatprep.subr.bf16.mxu0 0
        %1424 = vmatpush1.bf16.xpose.msra.mxu0 0
        %1425 = vmatprep.subr.bf16.mxu0 0
        %1426 = vmatpush1.bf16.xpose.msra.mxu0 0
        %1427 = vmatprep.subr.bf16.mxu0 0
        %1428 = vmatpush1.bf16.xpose.msra.mxu0 0
        %1429 = vmatprep.subr.bf16.mxu0 0
        %1430 = vmatpush1.bf16.xpose.msra.mxu0 0
        %1431 = vmatprep.subr.bf16.mxu0 0
        %1432 = vmatpush1.bf16.xpose.msra.mxu0 0
        %1433 = vmatprep.subr.bf16.mxu0 0
        %1434 = vmatpush1.bf16.xpose.msra.mxu0 0
        %1435 = vmatprep.mubr.bf16.mxu0 0
        %1436 = vmatmul.mubr.bf16.gmra.mrb[0].mxu0 %v1398
        %v1437 = vpop.f32.mrb[0].mxu0
        %v1438 = vadd.f32 0.0, %v1437
        %v1439 = vpop.f32.mrb[0].mxu0
        %v1440 = vpop.f32.mrb[0].mxu0
        %v1441 = vadd.f32 0.0, %v1440
        %v1442 = vpop.f32.mrb[0].mxu0
        %1443 = vdwg.mxu0
        %v1444 = vmul.f32 %v1438, 0.35355338
        %v1445 = vmul.f32 %v1441, 0.35355338
        %v1446 = vlaneseq
        %v1447 = vshrl.u32 %v1446, 7
        %v1448 = vadd.s32 %v1447, 8
        %vm1449 = vcmp.le.s32.totalorder %v813, %v1447
        %vm1450 = vcmp.le.s32.totalorder %v813, %v1448
        %v1451 = vsel %vm1449, %v1444, -1e+30
        %v1452 = vsel %vm1450, %v1445, -1e+30
        %v1453 = vsel %vm840, %v1451, -inf
        %1454 = vmax.xlane.f32.xlu0 %v1453
        %v1455 = vpop.xlane.xlu0 %1454
        %v1456 = vsel %vm840, %v1452, -inf
        %1457 = vmax.xlane.f32.xlu0 %v1456
        %v1458 = vpop.xlane.xlu0 %1457
        %v1459 = vsub.f32 %v1451, %v1455
        %v1460 = vsub.f32 %v1452, %v1458
        %v1461 = vmul.f32 %v1459, 1.442695
        %v1462 = vpow.pop %v1461
        %v1463 = vmul.f32 %v1460, 1.442695
        %v1464 = vpow.pop %v1463
        %v1465 = vsel %vm840, %v1462, 0.0
        %1466 = vadd.xlane.f32.xlu0 %v1465
        %v1467 = vpop.xlane.xlu0 %1466
        %v1468 = vsel %vm840, %v1464, 0.0
        %1469 = vadd.xlane.f32.xlu0 %v1468
        %v1470 = vpop.xlane.xlu0 %1469
        %v1471 = vrcp.pop %v1467
        %v1472 = vmul.f32 %v1462, %v1471
        %v1473 = vrcp.pop %v1470
        %v1474 = vmul.f32 %v1464, %v1473
        %v1475 = vpack.c.bf16 %v1474, %v1472
        %1477 = vrot.lane.b32.xlu0 %v1395, 64
        %v1478 = vpop.permute.xlu0 %1477
        %v1481 = vsel %vm840, %v1475, 0
        %1483 = vmatprep.subr.bf16.mxu0 0
        %1484 = vmatpush1.bf16.msra.mxu0 %v1478
        %1485 = vmatprep.subr.bf16.mxu0 0
        %1486 = vmatpush1.bf16.msra.mxu0 0
        %1487 = vmatprep.subr.bf16.mxu0 0
        %1488 = vmatpush1.bf16.msra.mxu0 0
        %1489 = vmatprep.subr.bf16.mxu0 0
        %1490 = vmatpush1.bf16.msra.mxu0 0
        %1491 = vmatprep.subr.bf16.mxu0 0
        %1492 = vmatpush1.bf16.msra.mxu0 0
        %1493 = vmatprep.subr.bf16.mxu0 0
        %1494 = vmatpush1.bf16.msra.mxu0 0
        %1495 = vmatprep.subr.bf16.mxu0 0
        %1496 = vmatpush1.bf16.msra.mxu0 0
        %1497 = vmatprep.subr.bf16.mxu0 0
        %1498 = vmatpush1.bf16.msra.mxu0 0
        %1499 = vmatprep.subr.bf16.mxu0 0
        %1500 = vmatpush1.bf16.msra.mxu0 0
        %1501 = vmatprep.subr.bf16.mxu0 0
        %1502 = vmatpush1.bf16.msra.mxu0 0
        %1503 = vmatprep.subr.bf16.mxu0 0
        %1504 = vmatpush1.bf16.msra.mxu0 0
        %1505 = vmatprep.subr.bf16.mxu0 0
        %1506 = vmatpush1.bf16.msra.mxu0 0
        %1507 = vmatprep.subr.bf16.mxu0 0
        %1508 = vmatpush1.bf16.msra.mxu0 0
        %1509 = vmatprep.subr.bf16.mxu0 0
        %1510 = vmatpush1.bf16.msra.mxu0 0
        %1511 = vmatprep.subr.bf16.mxu0 0
        %1512 = vmatpush1.bf16.msra.mxu0 0
        %1513 = vmatprep.subr.bf16.mxu0 0
        %1514 = vmatpush1.bf16.msra.mxu0 0
        %1515 = vmatprep.mubr.bf16.mxu0 0
        %1516 = vmatmul.mubr.bf16.gmra.mrb[0].mxu0 %v1481
        %v1517 = vpop.f32.mrb[0].mxu0
        %v1518 = vadd.f32 0.0, %v1517
        %v1519 = vpop.f32.mrb[0].mxu0
        %v1520 = vpop.f32.mrb[0].mxu0
        %v1521 = vadd.f32 0.0, %v1520
        %v1522 = vpop.f32.mrb[0].mxu0
        %1523 = vdwg.mxu0
        %1524 = vst.msk [vmem:[#allocation2] sm:$0xff] %vm269, %v1518
        %1525 = vst.msk [vmem:[#allocation2 + $0x8] sm:$0xff] %vm269, %v1521
        %s1526 = scalar_lea.vmem %s2, 16
        %v1527 = vld [vmem:[%s1526] sm:$0xff]
        %v1528 = vld [vmem:[%s1526 + $0x8] sm:$0xff]
        %1529 = vrot.lane.b32.xlu0 %v255, 88
        %v1530 = vpop.permute.xlu0 %1529
        %1531 = vrot.lane.b32.xlu0 %v258, 88
        %v1532 = vpop.permute.xlu0 %1531
        %v1533 = vsel %vm269, %v1530, 0
        %v1535 = vsel %vm269, %v1532, 0
        %v1538 = vsel %vm269, %v1527, 0
        %v1541 = vsel %vm269, %v1528, 0
        %1543 = vmatprep.subr.mxu0 0.0
        %v1544 = vand.u32 %v1538, 4294901760
        %1545 = vmatpush1.xpose.msra.mxu0 %v1544
        %1546 = vmatprep.subr.mxu0 0.0
        %v1547 = vand.u32 %v1541, 4294901760
        %1548 = vmatpush1.xpose.msra.mxu0 %v1547
        %1549 = vmatprep.subr.mxu0 0.0
        %1550 = vmatpush1.xpose.msra.mxu0 0.0
        %1551 = vmatprep.subr.mxu0 0.0
        %1552 = vmatpush1.xpose.msra.mxu0 0.0
        %1553 = vmatprep.subr.mxu0 0.0
        %1554 = vmatpush1.xpose.msra.mxu0 0.0
        %1555 = vmatprep.subr.mxu0 0.0
        %1556 = vmatpush1.xpose.msra.mxu0 0.0
        %1557 = vmatprep.subr.mxu0 0.0
        %1558 = vmatpush1.xpose.msra.mxu0 0.0
        %1559 = vmatprep.subr.mxu0 0.0
        %1560 = vmatpush1.xpose.msra.mxu0 0.0
        %1561 = vmatprep.subr.mxu0 0.0
        %1562 = vmatpush1.xpose.msra.mxu0 0.0
        %1563 = vmatprep.subr.mxu0 0.0
        %1564 = vmatpush1.xpose.msra.mxu0 0.0
        %1565 = vmatprep.subr.mxu0 0.0
        %1566 = vmatpush1.xpose.msra.mxu0 0.0
        %1567 = vmatprep.subr.mxu0 0.0
        %1568 = vmatpush1.xpose.msra.mxu0 0.0
        %1569 = vmatprep.subr.mxu0 0.0
        %1570 = vmatpush1.xpose.msra.mxu0 0.0
        %1571 = vmatprep.subr.mxu0 0.0
        %1572 = vmatpush1.xpose.msra.mxu0 0.0
        %1573 = vmatprep.subr.mxu0 0.0
        %1574 = vmatpush1.xpose.msra.mxu0 0.0
        %1575 = vmatprep.subr.mxu0 0.0
        %1576 = vmatpush1.xpose.msra.mxu0 0.0
        %1577 = vmatprep.subr.mxu0 0.0
        %1578 = vmatpush1.xpose.msra.mxu0 0.0
        %1579 = vmatprep.subr.mxu0 0.0
        %1580 = vmatpush1.xpose.msra.mxu0 0.0
        %1581 = vmatprep.subr.mxu0 0.0
        %1582 = vmatpush1.xpose.msra.mxu0 0.0
        %1583 = vmatprep.subr.mxu0 0.0
        %1584 = vmatpush1.xpose.msra.mxu0 0.0
        %1585 = vmatprep.subr.mxu0 0.0
        %1586 = vmatpush1.xpose.msra.mxu0 0.0
        %1587 = vmatprep.subr.mxu0 0.0
        %1588 = vmatpush1.xpose.msra.mxu0 0.0
        %1589 = vmatprep.subr.mxu0 0.0
        %1590 = vmatpush1.xpose.msra.mxu0 0.0
        %1591 = vmatprep.subr.mxu0 0.0
        %1592 = vmatpush1.xpose.msra.mxu0 0.0
        %1593 = vmatprep.subr.mxu0 0.0
        %1594 = vmatpush1.xpose.msra.mxu0 0.0
        %1595 = vmatprep.subr.mxu0 0.0
        %1596 = vmatpush1.xpose.msra.mxu0 0.0
        %1597 = vmatprep.subr.mxu0 0.0
        %1598 = vmatpush1.xpose.msra.mxu0 0.0
        %1599 = vmatprep.subr.mxu0 0.0
        %1600 = vmatpush1.xpose.msra.mxu0 0.0
        %1601 = vmatprep.subr.mxu0 0.0
        %1602 = vmatpush1.xpose.msra.mxu0 0.0
        %1603 = vmatprep.subr.mxu0 0.0
        %1604 = vmatpush1.xpose.msra.mxu0 0.0
        %1605 = vmatprep.subr.mxu0 0.0
        %1606 = vmatpush1.xpose.msra.mxu0 0.0
        %1607 = vmatprep.subr.mxu0 0.0
        %1608 = vmatpush1.xpose.msra.mxu0 0.0
        %1609 = vmatprep.mubr.f32.mxu0 0.0
        %v1610 = vand.u32 %v1533, 4294901760
        %v1611 = vsub.f32 %v1533, %v1610
        %v1612 = vand.u32 %v1611, 4294901760
        %v1613 = vsub.f32 %v1611, %v1612
        %v1614 = vand.u32 %v1613, 4294901760
        %1615 = vmatmul.mubr.f32.gmra.mrb[0].mxu0 %v1614
        %v1616 = vpop.f32.mrb[0].mxu0
        %v1617 = vadd.f32 0.0, %v1616
        %v1618 = vpop.f32.mrb[0].mxu0
        %1619 = vmatprep.mubr.f32.mxu0 0.0
        %v1620 = vand.u32 %v1535, 4294901760
        %v1621 = vsub.f32 %v1535, %v1620
        %v1622 = vand.u32 %v1621, 4294901760
        %v1623 = vsub.f32 %v1621, %v1622
        %v1624 = vand.u32 %v1623, 4294901760
        %1625 = vmatmul.mubr.f32.gmra.mrb[0].mxu0 %v1624
        %v1626 = vpop.f32.mrb[0].mxu0
        %v1627 = vadd.f32 0.0, %v1626
        %v1628 = vpop.f32.mrb[0].mxu0
        %1629 = vdwg.mxu0
        %1630 = vmatprep.subr.mxu0 0.0
        %v1631 = vand.u32 %v1538, 4294901760
        %v1632 = vsub.f32 %v1538, %v1631
        %v1633 = vand.u32 %v1632, 4294901760
        %v1634 = vsub.f32 %v1632, %v1633
        %v1635 = vand.u32 %v1634, 4294901760
        %1636 = vmatpush1.xpose.msra.mxu0 %v1635
        %1637 = vmatprep.subr.mxu0 0.0
        %v1638 = vand.u32 %v1541, 4294901760
        %v1639 = vsub.f32 %v1541, %v1638
        %v1640 = vand.u32 %v1639, 4294901760
        %v1641 = vsub.f32 %v1639, %v1640
        %v1642 = vand.u32 %v1641, 4294901760
        %1643 = vmatpush1.xpose.msra.mxu0 %v1642
        %1644 = vmatprep.subr.mxu0 0.0
        %1645 = vmatpush1.xpose.msra.mxu0 0.0
        %1646 = vmatprep.subr.mxu0 0.0
        %1647 = vmatpush1.xpose.msra.mxu0 0.0
        %1648 = vmatprep.subr.mxu0 0.0
        %1649 = vmatpush1.xpose.msra.mxu0 0.0
        %1650 = vmatprep.subr.mxu0 0.0
        %1651 = vmatpush1.xpose.msra.mxu0 0.0
        %1652 = vmatprep.subr.mxu0 0.0
        %1653 = vmatpush1.xpose.msra.mxu0 0.0
        %1654 = vmatprep.subr.mxu0 0.0
        %1655 = vmatpush1.xpose.msra.mxu0 0.0
        %1656 = vmatprep.subr.mxu0 0.0
        %1657 = vmatpush1.xpose.msra.mxu0 0.0
        %1658 = vmatprep.subr.mxu0 0.0
        %1659 = vmatpush1.xpose.msra.mxu0 0.0
        %1660 = vmatprep.subr.mxu0 0.0
        %1661 = vmatpush1.xpose.msra.mxu0 0.0
        %1662 = vmatprep.subr.mxu0 0.0
        %1663 = vmatpush1.xpose.msra.mxu0 0.0
        %1664 = vmatprep.subr.mxu0 0.0
        %1665 = vmatpush1.xpose.msra.mxu0 0.0
        %1666 = vmatprep.subr.mxu0 0.0
        %1667 = vmatpush1.xpose.msra.mxu0 0.0
        %1668 = vmatprep.subr.mxu0 0.0
        %1669 = vmatpush1.xpose.msra.mxu0 0.0
        %1670 = vmatprep.subr.mxu0 0.0
        %1671 = vmatpush1.xpose.msra.mxu0 0.0
        %1672 = vmatprep.subr.mxu0 0.0
        %1673 = vmatpush1.xpose.msra.mxu0 0.0
        %1674 = vmatprep.subr.mxu0 0.0
        %1675 = vmatpush1.xpose.msra.mxu0 0.0
        %1676 = vmatprep.subr.mxu0 0.0
        %1677 = vmatpush1.xpose.msra.mxu0 0.0
        %1678 = vmatprep.subr.mxu0 0.0
        %1679 = vmatpush1.xpose.msra.mxu0 0.0
        %1680 = vmatprep.subr.mxu0 0.0
        %1681 = vmatpush1.xpose.msra.mxu0 0.0
        %1682 = vmatprep.subr.mxu0 0.0
        %1683 = vmatpush1.xpose.msra.mxu0 0.0
        %1684 = vmatprep.subr.mxu0 0.0
        %1685 = vmatpush1.xpose.msra.mxu0 0.0
        %1686 = vmatprep.subr.mxu0 0.0
        %1687 = vmatpush1.xpose.msra.mxu0 0.0
        %1688 = vmatprep.subr.mxu0 0.0
        %1689 = vmatpush1.xpose.msra.mxu0 0.0
        %1690 = vmatprep.subr.mxu0 0.0
        %1691 = vmatpush1.xpose.msra.mxu0 0.0
        %1692 = vmatprep.subr.mxu0 0.0
        %1693 = vmatpush1.xpose.msra.mxu0 0.0
        %1694 = vmatprep.subr.mxu0 0.0
        %1695 = vmatpush1.xpose.msra.mxu0 0.0
        %1696 = vmatprep.subr.mxu0 0.0
        %1697 = vmatpush1.xpose.msra.mxu0 0.0
        %1698 = vmatprep.subr.mxu0 0.0
        %1699 = vmatpush1.xpose.msra.mxu0 0.0
        %1700 = vmatprep.subr.mxu0 0.0
        %1701 = vmatpush1.xpose.msra.mxu0 0.0
        %1702 = vmatprep.subr.mxu0 0.0
        %1703 = vmatpush1.xpose.msra.mxu0 0.0
        %1704 = vmatprep.mubr.f32.mxu0 0.0
        %v1705 = vand.u32 %v1533, 4294901760
        %1706 = vmatmul.mubr.f32.gmra.mrb[0].mxu0 %v1705
        %v1707 = vpop.f32.mrb[0].mxu0
        %v1708 = vadd.f32 %v1617, %v1707
        %v1709 = vpop.f32.mrb[0].mxu0
        %1710 = vmatprep.mubr.f32.mxu0 0.0
        %v1711 = vand.u32 %v1535, 4294901760
        %1712 = vmatmul.mubr.f32.gmra.mrb[0].mxu0 %v1711
        %v1713 = vpop.f32.mrb[0].mxu0
        %v1714 = vadd.f32 %v1627, %v1713
        %v1715 = vpop.f32.mrb[0].mxu0
        %1716 = vdwg.mxu0
        %1717 = vmatprep.subr.mxu0 0.0
        %v1718 = vand.u32 %v1538, 4294901760
        %v1719 = vsub.f32 %v1538, %v1718
        %1720 = vmatpush1.xpose.msra.mxu0 %v1719
        %1721 = vmatprep.subr.mxu0 0.0
        %v1722 = vand.u32 %v1541, 4294901760
        %v1723 = vsub.f32 %v1541, %v1722
        %1724 = vmatpush1.xpose.msra.mxu0 %v1723
        %1725 = vmatprep.subr.mxu0 0.0
        %1726 = vmatpush1.xpose.msra.mxu0 0.0
        %1727 = vmatprep.subr.mxu0 0.0
        %1728 = vmatpush1.xpose.msra.mxu0 0.0
        %1729 = vmatprep.subr.mxu0 0.0
        %1730 = vmatpush1.xpose.msra.mxu0 0.0
        %1731 = vmatprep.subr.mxu0 0.0
        %1732 = vmatpush1.xpose.msra.mxu0 0.0
        %1733 = vmatprep.subr.mxu0 0.0
        %1734 = vmatpush1.xpose.msra.mxu0 0.0
        %1735 = vmatprep.subr.mxu0 0.0
        %1736 = vmatpush1.xpose.msra.mxu0 0.0
        %1737 = vmatprep.subr.mxu0 0.0
        %1738 = vmatpush1.xpose.msra.mxu0 0.0
        %1739 = vmatprep.subr.mxu0 0.0
        %1740 = vmatpush1.xpose.msra.mxu0 0.0
        %1741 = vmatprep.subr.mxu0 0.0
        %1742 = vmatpush1.xpose.msra.mxu0 0.0
        %1743 = vmatprep.subr.mxu0 0.0
        %1744 = vmatpush1.xpose.msra.mxu0 0.0
        %1745 = vmatprep.subr.mxu0 0.0
        %1746 = vmatpush1.xpose.msra.mxu0 0.0
        %1747 = vmatprep.subr.mxu0 0.0
        %1748 = vmatpush1.xpose.msra.mxu0 0.0
        %1749 = vmatprep.subr.mxu0 0.0
        %1750 = vmatpush1.xpose.msra.mxu0 0.0
        %1751 = vmatprep.subr.mxu0 0.0
        %1752 = vmatpush1.xpose.msra.mxu0 0.0
        %1753 = vmatprep.subr.mxu0 0.0
        %1754 = vmatpush1.xpose.msra.mxu0 0.0
        %1755 = vmatprep.subr.mxu0 0.0
        %1756 = vmatpush1.xpose.msra.mxu0 0.0
        %1757 = vmatprep.subr.mxu0 0.0
        %1758 = vmatpush1.xpose.msra.mxu0 0.0
        %1759 = vmatprep.subr.mxu0 0.0
        %1760 = vmatpush1.xpose.msra.mxu0 0.0
        %1761 = vmatprep.subr.mxu0 0.0
        %1762 = vmatpush1.xpose.msra.mxu0 0.0
        %1763 = vmatprep.subr.mxu0 0.0
        %1764 = vmatpush1.xpose.msra.mxu0 0.0
        %1765 = vmatprep.subr.mxu0 0.0
        %1766 = vmatpush1.xpose.msra.mxu0 0.0
        %1767 = vmatprep.subr.mxu0 0.0
        %1768 = vmatpush1.xpose.msra.mxu0 0.0
        %1769 = vmatprep.subr.mxu0 0.0
        %1770 = vmatpush1.xpose.msra.mxu0 0.0
        %1771 = vmatprep.subr.mxu0 0.0
        %1772 = vmatpush1.xpose.msra.mxu0 0.0
        %1773 = vmatprep.subr.mxu0 0.0
        %1774 = vmatpush1.xpose.msra.mxu0 0.0
        %1775 = vmatprep.subr.mxu0 0.0
        %1776 = vmatpush1.xpose.msra.mxu0 0.0
        %1777 = vmatprep.subr.mxu0 0.0
        %1778 = vmatpush1.xpose.msra.mxu0 0.0
        %1779 = vmatprep.subr.mxu0 0.0
        %1780 = vmatpush1.xpose.msra.mxu0 0.0
        %1781 = vmatprep.subr.mxu0 0.0
        %1782 = vmatpush1.xpose.msra.mxu0 0.0
        %1783 = vmatprep.subr.mxu0 0.0
        %1784 = vmatpush1.xpose.msra.mxu0 0.0
        %1785 = vmatprep.mubr.f32.mxu0 0.0
        %v1786 = vand.u32 %v1533, 4294901760
        %v1787 = vsub.f32 %v1533, %v1786
        %1788 = vmatmul.mubr.f32.gmra.mrb[0].mxu0 %v1787
        %v1789 = vpop.f32.mrb[0].mxu0
        %v1790 = vadd.f32 %v1708, %v1789
        %v1791 = vpop.f32.mrb[0].mxu0
        %1792 = vmatprep.mubr.f32.mxu0 0.0
        %v1793 = vand.u32 %v1535, 4294901760
        %v1794 = vsub.f32 %v1535, %v1793
        %1795 = vmatmul.mubr.f32.gmra.mrb[0].mxu0 %v1794
        %v1796 = vpop.f32.mrb[0].mxu0
        %v1797 = vadd.f32 %v1714, %v1796
        %v1798 = vpop.f32.mrb[0].mxu0
        %1799 = vdwg.mxu0
        %1800 = vmatprep.subr.mxu0 0.0
        %v1801 = vand.u32 %v1538, 4294901760
        %1802 = vmatpush1.xpose.msra.mxu0 %v1801
        %1803 = vmatprep.subr.mxu0 0.0
        %v1804 = vand.u32 %v1541, 4294901760
        %1805 = vmatpush1.xpose.msra.mxu0 %v1804
        %1806 = vmatprep.subr.mxu0 0.0
        %1807 = vmatpush1.xpose.msra.mxu0 0.0
        %1808 = vmatprep.subr.mxu0 0.0
        %1809 = vmatpush1.xpose.msra.mxu0 0.0
        %1810 = vmatprep.subr.mxu0 0.0
        %1811 = vmatpush1.xpose.msra.mxu0 0.0
        %1812 = vmatprep.subr.mxu0 0.0
        %1813 = vmatpush1.xpose.msra.mxu0 0.0
        %1814 = vmatprep.subr.mxu0 0.0
        %1815 = vmatpush1.xpose.msra.mxu0 0.0
        %1816 = vmatprep.subr.mxu0 0.0
        %1817 = vmatpush1.xpose.msra.mxu0 0.0
        %1818 = vmatprep.subr.mxu0 0.0
        %1819 = vmatpush1.xpose.msra.mxu0 0.0
        %1820 = vmatprep.subr.mxu0 0.0
        %1821 = vmatpush1.xpose.msra.mxu0 0.0
        %1822 = vmatprep.subr.mxu0 0.0
        %1823 = vmatpush1.xpose.msra.mxu0 0.0
        %1824 = vmatprep.subr.mxu0 0.0
        %1825 = vmatpush1.xpose.msra.mxu0 0.0
        %1826 = vmatprep.subr.mxu0 0.0
        %1827 = vmatpush1.xpose.msra.mxu0 0.0
        %1828 = vmatprep.subr.mxu0 0.0
        %1829 = vmatpush1.xpose.msra.mxu0 0.0
        %1830 = vmatprep.subr.mxu0 0.0
        %1831 = vmatpush1.xpose.msra.mxu0 0.0
        %1832 = vmatprep.subr.mxu0 0.0
        %1833 = vmatpush1.xpose.msra.mxu0 0.0
        %1834 = vmatprep.subr.mxu0 0.0
        %1835 = vmatpush1.xpose.msra.mxu0 0.0
        %1836 = vmatprep.subr.mxu0 0.0
        %1837 = vmatpush1.xpose.msra.mxu0 0.0
        %1838 = vmatprep.subr.mxu0 0.0
        %1839 = vmatpush1.xpose.msra.mxu0 0.0
        %1840 = vmatprep.subr.mxu0 0.0
        %1841 = vmatpush1.xpose.msra.mxu0 0.0
        %1842 = vmatprep.subr.mxu0 0.0
        %1843 = vmatpush1.xpose.msra.mxu0 0.0
        %1844 = vmatprep.subr.mxu0 0.0
        %1845 = vmatpush1.xpose.msra.mxu0 0.0
        %1846 = vmatprep.subr.mxu0 0.0
        %1847 = vmatpush1.xpose.msra.mxu0 0.0
        %1848 = vmatprep.subr.mxu0 0.0
        %1849 = vmatpush1.xpose.msra.mxu0 0.0
        %1850 = vmatprep.subr.mxu0 0.0
        %1851 = vmatpush1.xpose.msra.mxu0 0.0
        %1852 = vmatprep.subr.mxu0 0.0
        %1853 = vmatpush1.xpose.msra.mxu0 0.0
        %1854 = vmatprep.subr.mxu0 0.0
        %1855 = vmatpush1.xpose.msra.mxu0 0.0
        %1856 = vmatprep.subr.mxu0 0.0
        %1857 = vmatpush1.xpose.msra.mxu0 0.0
        %1858 = vmatprep.subr.mxu0 0.0
        %1859 = vmatpush1.xpose.msra.mxu0 0.0
        %1860 = vmatprep.subr.mxu0 0.0
        %1861 = vmatpush1.xpose.msra.mxu0 0.0
        %1862 = vmatprep.subr.mxu0 0.0
        %1863 = vmatpush1.xpose.msra.mxu0 0.0
        %1864 = vmatprep.subr.mxu0 0.0
        %1865 = vmatpush1.xpose.msra.mxu0 0.0
        %1866 = vmatprep.mubr.f32.mxu0 0.0
        %v1867 = vand.u32 %v1533, 4294901760
        %v1868 = vsub.f32 %v1533, %v1867
        %v1869 = vand.u32 %v1868, 4294901760
        %1870 = vmatmul.mubr.f32.gmra.mrb[0].mxu0 %v1869
        %v1871 = vpop.f32.mrb[0].mxu0
        %v1872 = vadd.f32 %v1790, %v1871
        %v1873 = vpop.f32.mrb[0].mxu0
        %1874 = vmatprep.mubr.f32.mxu0 0.0
        %v1875 = vand.u32 %v1535, 4294901760
        %v1876 = vsub.f32 %v1535, %v1875
        %v1877 = vand.u32 %v1876, 4294901760
        %1878 = vmatmul.mubr.f32.gmra.mrb[0].mxu0 %v1877
        %v1879 = vpop.f32.mrb[0].mxu0
        %v1880 = vadd.f32 %v1797, %v1879
        %v1881 = vpop.f32.mrb[0].mxu0
        %1882 = vdwg.mxu0
        %1883 = vmatprep.subr.mxu0 0.0
        %v1884 = vand.u32 %v1538, 4294901760
        %v1885 = vsub.f32 %v1538, %v1884
        %v1886 = vand.u32 %v1885, 4294901760
        %1887 = vmatpush1.xpose.msra.mxu0 %v1886
        %1888 = vmatprep.subr.mxu0 0.0
        %v1889 = vand.u32 %v1541, 4294901760
        %v1890 = vsub.f32 %v1541, %v1889
        %v1891 = vand.u32 %v1890, 4294901760
        %1892 = vmatpush1.xpose.msra.mxu0 %v1891
        %1893 = vmatprep.subr.mxu0 0.0
        %1894 = vmatpush1.xpose.msra.mxu0 0.0
        %1895 = vmatprep.subr.mxu0 0.0
        %1896 = vmatpush1.xpose.msra.mxu0 0.0
        %1897 = vmatprep.subr.mxu0 0.0
        %1898 = vmatpush1.xpose.msra.mxu0 0.0
        %1899 = vmatprep.subr.mxu0 0.0
        %1900 = vmatpush1.xpose.msra.mxu0 0.0
        %1901 = vmatprep.subr.mxu0 0.0
        %1902 = vmatpush1.xpose.msra.mxu0 0.0
        %1903 = vmatprep.subr.mxu0 0.0
        %1904 = vmatpush1.xpose.msra.mxu0 0.0
        %1905 = vmatprep.subr.mxu0 0.0
        %1906 = vmatpush1.xpose.msra.mxu0 0.0
        %1907 = vmatprep.subr.mxu0 0.0
        %1908 = vmatpush1.xpose.msra.mxu0 0.0
        %1909 = vmatprep.subr.mxu0 0.0
        %1910 = vmatpush1.xpose.msra.mxu0 0.0
        %1911 = vmatprep.subr.mxu0 0.0
        %1912 = vmatpush1.xpose.msra.mxu0 0.0
        %1913 = vmatprep.subr.mxu0 0.0
        %1914 = vmatpush1.xpose.msra.mxu0 0.0
        %1915 = vmatprep.subr.mxu0 0.0
        %1916 = vmatpush1.xpose.msra.mxu0 0.0
        %1917 = vmatprep.subr.mxu0 0.0
        %1918 = vmatpush1.xpose.msra.mxu0 0.0
        %1919 = vmatprep.subr.mxu0 0.0
        %1920 = vmatpush1.xpose.msra.mxu0 0.0
        %1921 = vmatprep.subr.mxu0 0.0
        %1922 = vmatpush1.xpose.msra.mxu0 0.0
        %1923 = vmatprep.subr.mxu0 0.0
        %1924 = vmatpush1.xpose.msra.mxu0 0.0
        %1925 = vmatprep.subr.mxu0 0.0
        %1926 = vmatpush1.xpose.msra.mxu0 0.0
        %1927 = vmatprep.subr.mxu0 0.0
        %1928 = vmatpush1.xpose.msra.mxu0 0.0
        %1929 = vmatprep.subr.mxu0 0.0
        %1930 = vmatpush1.xpose.msra.mxu0 0.0
        %1931 = vmatprep.subr.mxu0 0.0
        %1932 = vmatpush1.xpose.msra.mxu0 0.0
        %1933 = vmatprep.subr.mxu0 0.0
        %1934 = vmatpush1.xpose.msra.mxu0 0.0
        %1935 = vmatprep.subr.mxu0 0.0
        %1936 = vmatpush1.xpose.msra.mxu0 0.0
        %1937 = vmatprep.subr.mxu0 0.0
        %1938 = vmatpush1.xpose.msra.mxu0 0.0
        %1939 = vmatprep.subr.mxu0 0.0
        %1940 = vmatpush1.xpose.msra.mxu0 0.0
        %1941 = vmatprep.subr.mxu0 0.0
        %1942 = vmatpush1.xpose.msra.mxu0 0.0
        %1943 = vmatprep.subr.mxu0 0.0
        %1944 = vmatpush1.xpose.msra.mxu0 0.0
        %1945 = vmatprep.subr.mxu0 0.0
        %1946 = vmatpush1.xpose.msra.mxu0 0.0
        %1947 = vmatprep.subr.mxu0 0.0
        %1948 = vmatpush1.xpose.msra.mxu0 0.0
        %1949 = vmatprep.subr.mxu0 0.0
        %1950 = vmatpush1.xpose.msra.mxu0 0.0
        %1951 = vmatprep.subr.mxu0 0.0
        %1952 = vmatpush1.xpose.msra.mxu0 0.0
        %1953 = vmatprep.mubr.f32.mxu0 0.0
        %v1954 = vand.u32 %v1533, 4294901760
        %1955 = vmatmul.mubr.f32.gmra.mrb[0].mxu0 %v1954
        %v1956 = vpop.f32.mrb[0].mxu0
        %v1957 = vadd.f32 %v1872, %v1956
        %v1958 = vpop.f32.mrb[0].mxu0
        %1959 = vmatprep.mubr.f32.mxu0 0.0
        %v1960 = vand.u32 %v1535, 4294901760
        %1961 = vmatmul.mubr.f32.gmra.mrb[0].mxu0 %v1960
        %v1962 = vpop.f32.mrb[0].mxu0
        %v1963 = vadd.f32 %v1880, %v1962
        %v1964 = vpop.f32.mrb[0].mxu0
        %1965 = vdwg.mxu0
        %1966 = vmatprep.subr.mxu0 0.0
        %v1967 = vand.u32 %v1538, 4294901760
        %1968 = vmatpush1.xpose.msra.mxu0 %v1967
        %1969 = vmatprep.subr.mxu0 0.0
        %v1970 = vand.u32 %v1541, 4294901760
        %1971 = vmatpush1.xpose.msra.mxu0 %v1970
        %1972 = vmatprep.subr.mxu0 0.0
        %1973 = vmatpush1.xpose.msra.mxu0 0.0
        %1974 = vmatprep.subr.mxu0 0.0
        %1975 = vmatpush1.xpose.msra.mxu0 0.0
        %1976 = vmatprep.subr.mxu0 0.0
        %1977 = vmatpush1.xpose.msra.mxu0 0.0
        %1978 = vmatprep.subr.mxu0 0.0
        %1979 = vmatpush1.xpose.msra.mxu0 0.0
        %1980 = vmatprep.subr.mxu0 0.0
        %1981 = vmatpush1.xpose.msra.mxu0 0.0
        %1982 = vmatprep.subr.mxu0 0.0
        %1983 = vmatpush1.xpose.msra.mxu0 0.0
        %1984 = vmatprep.subr.mxu0 0.0
        %1985 = vmatpush1.xpose.msra.mxu0 0.0
        %1986 = vmatprep.subr.mxu0 0.0
        %1987 = vmatpush1.xpose.msra.mxu0 0.0
        %1988 = vmatprep.subr.mxu0 0.0
        %1989 = vmatpush1.xpose.msra.mxu0 0.0
        %1990 = vmatprep.subr.mxu0 0.0
        %1991 = vmatpush1.xpose.msra.mxu0 0.0
        %1992 = vmatprep.subr.mxu0 0.0
        %1993 = vmatpush1.xpose.msra.mxu0 0.0
        %1994 = vmatprep.subr.mxu0 0.0
        %1995 = vmatpush1.xpose.msra.mxu0 0.0
        %1996 = vmatprep.subr.mxu0 0.0
        %1997 = vmatpush1.xpose.msra.mxu0 0.0
        %1998 = vmatprep.subr.mxu0 0.0
        %1999 = vmatpush1.xpose.msra.mxu0 0.0
        %2000 = vmatprep.subr.mxu0 0.0
        %2001 = vmatpush1.xpose.msra.mxu0 0.0
        %2002 = vmatprep.subr.mxu0 0.0
        %2003 = vmatpush1.xpose.msra.mxu0 0.0
        %2004 = vmatprep.subr.mxu0 0.0
        %2005 = vmatpush1.xpose.msra.mxu0 0.0
        %2006 = vmatprep.subr.mxu0 0.0
        %2007 = vmatpush1.xpose.msra.mxu0 0.0
        %2008 = vmatprep.subr.mxu0 0.0
        %2009 = vmatpush1.xpose.msra.mxu0 0.0
        %2010 = vmatprep.subr.mxu0 0.0
        %2011 = vmatpush1.xpose.msra.mxu0 0.0
        %2012 = vmatprep.subr.mxu0 0.0
        %2013 = vmatpush1.xpose.msra.mxu0 0.0
        %2014 = vmatprep.subr.mxu0 0.0
        %2015 = vmatpush1.xpose.msra.mxu0 0.0
        %2016 = vmatprep.subr.mxu0 0.0
        %2017 = vmatpush1.xpose.msra.mxu0 0.0
        %2018 = vmatprep.subr.mxu0 0.0
        %2019 = vmatpush1.xpose.msra.mxu0 0.0
        %2020 = vmatprep.subr.mxu0 0.0
        %2021 = vmatpush1.xpose.msra.mxu0 0.0
        %2022 = vmatprep.subr.mxu0 0.0
        %2023 = vmatpush1.xpose.msra.mxu0 0.0
        %2024 = vmatprep.subr.mxu0 0.0
        %2025 = vmatpush1.xpose.msra.mxu0 0.0
        %2026 = vmatprep.subr.mxu0 0.0
        %2027 = vmatpush1.xpose.msra.mxu0 0.0
        %2028 = vmatprep.subr.mxu0 0.0
        %2029 = vmatpush1.xpose.msra.mxu0 0.0
        %2030 = vmatprep.subr.mxu0 0.0
        %2031 = vmatpush1.xpose.msra.mxu0 0.0
        %2032 = vmatprep.mubr.f32.mxu0 0.0
        %v2033 = vand.u32 %v1533, 4294901760
        %2034 = vmatmul.mubr.f32.gmra.mrb[0].mxu0 %v2033
        %v2035 = vpop.f32.mrb[0].mxu0
        %v2036 = vadd.f32 %v1957, %v2035
        %v2037 = vpop.f32.mrb[0].mxu0
        %2038 = vmatprep.mubr.f32.mxu0 0.0
        %v2039 = vand.u32 %v1535, 4294901760
        %2040 = vmatmul.mubr.f32.gmra.mrb[0].mxu0 %v2039
        %v2041 = vpop.f32.mrb[0].mxu0
        %v2042 = vadd.f32 %v1963, %v2041
        %v2043 = vpop.f32.mrb[0].mxu0
        %2044 = vdwg.mxu0
        %2045 = vrot.lane.b32.xlu0 %v782, 88
        %v2046 = vpop.permute.xlu0 %2045
        %2047 = vrot.lane.b32.xlu0 %v783, 88
        %v2048 = vpop.permute.xlu0 %2047
        %v2051 = vsel %vm269, %v2046, 0.0
        %2052 = vadd.xlane.f32.xlu0 %v2051
        %v2053 = vpop.xlane.xlu0 %2052
        %v2054 = vsel %vm269, %v2048, 0.0
        %2055 = vadd.xlane.f32.xlu0 %v2054
        %v2056 = vpop.xlane.xlu0 %2055
        %v2057 = vmul.f32 %v2036, 2.0
        %v2058 = vmul.f32 %v2042, 2.0
        %v2059 = vsub.f32 %v2053, %v2057
        %v2060 = vsub.f32 %v2056, %v2058
        %v2061 = vmul.f32 %v1527, %v1527
        %v2062 = vmul.f32 %v1528, %v1528
        %v2063 = vsel %vm269, %v2061, 0.0
        %2064 = vadd.xlane.f32.xlu0 %v2063
        %v2065 = vpop.xlane.xlu0 %2064
        %v2066 = vsel %vm269, %v2062, 0.0
        %2067 = vadd.xlane.f32.xlu0 %v2066
        %v2068 = vpop.xlane.xlu0 %2067
        %v2071 = vlaneseq
        %v2072 = vshrl.u32 %v2071, 7
        %v2073 = vsub.s32 %v813, %v2072
        %v2074 = vrot.slane %v2065, %v2073
        %v2075 = vlaneseq
        %v2076 = vshrl.u32 %v2075, 7
        %v2077 = vsub.s32 %v818, %v2076
        %v2078 = vrot.slane %v2068, %v2077
        %v2079 = vsel %vm823, %v2078, %v2074
        %v2080 = vsel %vm825, %v2079, %v2079
        %v2081 = vsel %vm827, %v2079, %v2080
        %v2082 = vsel %vm829, %v2079, %v2081
        %v2083 = vsel %vm831, %v2079, %v2082
        %v2084 = vsel %vm833, %v2079, %v2083
        %v2085 = vsel %vm835, %v2079, %v2084
        %v2087 = vadd.f32 %v2059, %v2085
        %v2088 = vadd.f32 %v2060, %v2085
        %v2089 = vsel %vm840, %v2087, inf
        %2090 = vmin.xlane.f32.xlu0 %v2089
        %v2091 = vpop.xlane.xlu0 %2090
        %v2092 = vsel %vm840, %v2088, inf
        %2093 = vmin.xlane.f32.xlu0 %v2092
        %v2094 = vpop.xlane.xlu0 %2093
        %vm2095 = vcmp.le.f32.partialorder %v2087, %v2091
        %vm2096 = vcmp.le.f32.partialorder %v2088, %v2094
        %v2097 = vsel %vm2095, %v813, 16
        %v2098 = vsel %vm2096, %v813, 16
        %v2099 = vsel %vm840, %v2097, 2147483647
        %v2100 = vand.u32 %v2099, 65535
        %v2101 = vshra.s32 %v2099, 16
        %v2102 = vcvt.s32.f32 %v2100
        %v2103 = vcvt.s32.f32 %v2101
        %2104 = vmin.xlane.f32.xlu0 %v2103
        %v2105 = vpop.xlane.xlu0 %2104
        %vm2106 = vcmp.eq.f32.partialorder %v2103, %v2105
        %v2107 = vsel %vm2106, %v2102, inf
        %2108 = vmin.xlane.f32.xlu0 %v2107
        %v2109 = vpop.xlane.xlu0 %2108
        %v2110 = vcvt.f32.s32 %v2109
        %v2111 = vcvt.f32.s32 %v2105
        %v2112 = vshll.u32 %v2111, 16
        %v2113 = vadd.s32 %v2112, %v2110
        %v2114 = vsel %vm840, %v2098, 2147483647
        %v2115 = vand.u32 %v2114, 65535
        %v2116 = vshra.s32 %v2114, 16
        %v2117 = vcvt.s32.f32 %v2115
        %v2118 = vcvt.s32.f32 %v2116
        %2119 = vmin.xlane.f32.xlu0 %v2118
        %v2120 = vpop.xlane.xlu0 %2119
        %vm2121 = vcmp.eq.f32.partialorder %v2118, %v2120
        %v2122 = vsel %vm2121, %v2117, inf
        %2123 = vmin.xlane.f32.xlu0 %v2122
        %v2124 = vpop.xlane.xlu0 %2123
        %v2125 = vcvt.f32.s32 %v2124
        %v2126 = vcvt.f32.s32 %v2120
        %v2127 = vshll.u32 %v2126, 16
        %v2128 = vadd.s32 %v2127, %v2125
        %vm2129 = vcmp.eq.s32.totalorder %v813, %v2113
        %vm2130 = vcmp.eq.s32.totalorder %v813, %v2128
        %v2131 = vsel %vm2129, 1, 0
        %v2132 = vsel %vm2130, 1, 0
        %v2133 = vcvt.s32.f32 %v2131
        %v2134 = vcvt.s32.f32 %v2132
        %v2136 = vsel %vm840, %v2133, 0
        %v2139 = vsel %vm840, %v2134, 0
        %2141 = vmatprep.subr.mxu0 0.0
        %v2142 = vand.u32 %v1527, 4294901760
        %2143 = vmatpush1.msra.mxu0 %v2142
        %2144 = vmatprep.subr.mxu0 0.0
        %v2145 = vand.u32 %v1528, 4294901760
        %2146 = vmatpush1.msra.mxu0 %v2145
        %2147 = vmatprep.subr.mxu0 0.0
        %2148 = vmatpush1.msra.mxu0 0.0
        %2149 = vmatprep.subr.mxu0 0.0
        %2150 = vmatpush1.msra.mxu0 0.0
        %2151 = vmatprep.subr.mxu0 0.0
        %2152 = vmatpush1.msra.mxu0 0.0
        %2153 = vmatprep.subr.mxu0 0.0
        %2154 = vmatpush1.msra.mxu0 0.0
        %2155 = vmatprep.subr.mxu0 0.0
        %2156 = vmatpush1.msra.mxu0 0.0
        %2157 = vmatprep.subr.mxu0 0.0
        %2158 = vmatpush1.msra.mxu0 0.0
        %2159 = vmatprep.subr.mxu0 0.0
        %2160 = vmatpush1.msra.mxu0 0.0
        %2161 = vmatprep.subr.mxu0 0.0
        %2162 = vmatpush1.msra.mxu0 0.0
        %2163 = vmatprep.subr.mxu0 0.0
        %2164 = vmatpush1.msra.mxu0 0.0
        %2165 = vmatprep.subr.mxu0 0.0
        %2166 = vmatpush1.msra.mxu0 0.0
        %2167 = vmatprep.subr.mxu0 0.0
        %2168 = vmatpush1.msra.mxu0 0.0
        %2169 = vmatprep.subr.mxu0 0.0
        %2170 = vmatpush1.msra.mxu0 0.0
        %2171 = vmatprep.subr.mxu0 0.0
        %2172 = vmatpush1.msra.mxu0 0.0
        %2173 = vmatprep.subr.mxu0 0.0
        %2174 = vmatpush1.msra.mxu0 0.0
        %2175 = vmatprep.subr.mxu0 0.0
        %2176 = vmatpush1.msra.mxu0 0.0
        %2177 = vmatprep.subr.mxu0 0.0
        %2178 = vmatpush1.msra.mxu0 0.0
        %2179 = vmatprep.subr.mxu0 0.0
        %2180 = vmatpush1.msra.mxu0 0.0
        %2181 = vmatprep.subr.mxu0 0.0
        %2182 = vmatpush1.msra.mxu0 0.0
        %2183 = vmatprep.subr.mxu0 0.0
        %2184 = vmatpush1.msra.mxu0 0.0
        %2185 = vmatprep.subr.mxu0 0.0
        %2186 = vmatpush1.msra.mxu0 0.0
        %2187 = vmatprep.subr.mxu0 0.0
        %2188 = vmatpush1.msra.mxu0 0.0
        %2189 = vmatprep.subr.mxu0 0.0
        %2190 = vmatpush1.msra.mxu0 0.0
        %2191 = vmatprep.subr.mxu0 0.0
        %2192 = vmatpush1.msra.mxu0 0.0
        %2193 = vmatprep.subr.mxu0 0.0
        %2194 = vmatpush1.msra.mxu0 0.0
        %2195 = vmatprep.subr.mxu0 0.0
        %2196 = vmatpush1.msra.mxu0 0.0
        %2197 = vmatprep.subr.mxu0 0.0
        %2198 = vmatpush1.msra.mxu0 0.0
        %2199 = vmatprep.subr.mxu0 0.0
        %2200 = vmatpush1.msra.mxu0 0.0
        %2201 = vmatprep.subr.mxu0 0.0
        %2202 = vmatpush1.msra.mxu0 0.0
        %2203 = vmatprep.subr.mxu0 0.0
        %2204 = vmatpush1.msra.mxu0 0.0
        %2205 = vmatprep.subr.mxu0 0.0
        %2206 = vmatpush1.msra.mxu0 0.0
        %2207 = vmatprep.mubr.f32.mxu0 0.0
        %v2208 = vand.u32 %v2136, 4294901760
        %v2209 = vsub.f32 %v2136, %v2208
        %v2210 = vand.u32 %v2209, 4294901760
        %v2211 = vsub.f32 %v2209, %v2210
        %v2212 = vand.u32 %v2211, 4294901760
        %2213 = vmatmul.mubr.f32.gmra.mrb[0].mxu0 %v2212
        %v2214 = vpop.f32.mrb[0].mxu0
        %v2215 = vadd.f32 0.0, %v2214
        %v2216 = vpop.f32.mrb[0].mxu0
        %2217 = vmatprep.mubr.f32.mxu0 0.0
        %v2218 = vand.u32 %v2139, 4294901760
        %v2219 = vsub.f32 %v2139, %v2218
        %v2220 = vand.u32 %v2219, 4294901760
        %v2221 = vsub.f32 %v2219, %v2220
        %v2222 = vand.u32 %v2221, 4294901760
        %2223 = vmatmul.mubr.f32.gmra.mrb[0].mxu0 %v2222
        %v2224 = vpop.f32.mrb[0].mxu0
        %v2225 = vadd.f32 0.0, %v2224
        %v2226 = vpop.f32.mrb[0].mxu0
        %2227 = vdwg.mxu0
        %2228 = vmatprep.subr.mxu0 0.0
        %v2229 = vand.u32 %v1527, 4294901760
        %v2230 = vsub.f32 %v1527, %v2229
        %v2231 = vand.u32 %v2230, 4294901760
        %v2232 = vsub.f32 %v2230, %v2231
        %v2233 = vand.u32 %v2232, 4294901760
        %2234 = vmatpush1.msra.mxu0 %v2233
        %2235 = vmatprep.subr.mxu0 0.0
        %v2236 = vand.u32 %v1528, 4294901760
        %v2237 = vsub.f32 %v1528, %v2236
        %v2238 = vand.u32 %v2237, 4294901760
        %v2239 = vsub.f32 %v2237, %v2238
        %v2240 = vand.u32 %v2239, 4294901760
        %2241 = vmatpush1.msra.mxu0 %v2240
        %2242 = vmatprep.subr.mxu0 0.0
        %2243 = vmatpush1.msra.mxu0 0.0
        %2244 = vmatprep.subr.mxu0 0.0
        %2245 = vmatpush1.msra.mxu0 0.0
        %2246 = vmatprep.subr.mxu0 0.0
        %2247 = vmatpush1.msra.mxu0 0.0
        %2248 = vmatprep.subr.mxu0 0.0
        %2249 = vmatpush1.msra.mxu0 0.0
        %2250 = vmatprep.subr.mxu0 0.0
        %2251 = vmatpush1.msra.mxu0 0.0
        %2252 = vmatprep.subr.mxu0 0.0
        %2253 = vmatpush1.msra.mxu0 0.0
        %2254 = vmatprep.subr.mxu0 0.0
        %2255 = vmatpush1.msra.mxu0 0.0
        %2256 = vmatprep.subr.mxu0 0.0
        %2257 = vmatpush1.msra.mxu0 0.0
        %2258 = vmatprep.subr.mxu0 0.0
        %2259 = vmatpush1.msra.mxu0 0.0
        %2260 = vmatprep.subr.mxu0 0.0
        %2261 = vmatpush1.msra.mxu0 0.0
        %2262 = vmatprep.subr.mxu0 0.0
        %2263 = vmatpush1.msra.mxu0 0.0
        %2264 = vmatprep.subr.mxu0 0.0
        %2265 = vmatpush1.msra.mxu0 0.0
        %2266 = vmatprep.subr.mxu0 0.0
        %2267 = vmatpush1.msra.mxu0 0.0
        %2268 = vmatprep.subr.mxu0 0.0
        %2269 = vmatpush1.msra.mxu0 0.0
        %2270 = vmatprep.subr.mxu0 0.0
        %2271 = vmatpush1.msra.mxu0 0.0
        %2272 = vmatprep.subr.mxu0 0.0
        %2273 = vmatpush1.msra.mxu0 0.0
        %2274 = vmatprep.subr.mxu0 0.0
        %2275 = vmatpush1.msra.mxu0 0.0
        %2276 = vmatprep.subr.mxu0 0.0
        %2277 = vmatpush1.msra.mxu0 0.0
        %2278 = vmatprep.subr.mxu0 0.0
        %2279 = vmatpush1.msra.mxu0 0.0
        %2280 = vmatprep.subr.mxu0 0.0
        %2281 = vmatpush1.msra.mxu0 0.0
        %2282 = vmatprep.subr.mxu0 0.0
        %2283 = vmatpush1.msra.mxu0 0.0
        %2284 = vmatprep.subr.mxu0 0.0
        %2285 = vmatpush1.msra.mxu0 0.0
        %2286 = vmatprep.subr.mxu0 0.0
        %2287 = vmatpush1.msra.mxu0 0.0
        %2288 = vmatprep.subr.mxu0 0.0
        %2289 = vmatpush1.msra.mxu0 0.0
        %2290 = vmatprep.subr.mxu0 0.0
        %2291 = vmatpush1.msra.mxu0 0.0
        %2292 = vmatprep.subr.mxu0 0.0
        %2293 = vmatpush1.msra.mxu0 0.0
        %2294 = vmatprep.subr.mxu0 0.0
        %2295 = vmatpush1.msra.mxu0 0.0
        %2296 = vmatprep.subr.mxu0 0.0
        %2297 = vmatpush1.msra.mxu0 0.0
        %2298 = vmatprep.subr.mxu0 0.0
        %2299 = vmatpush1.msra.mxu0 0.0
        %2300 = vmatprep.subr.mxu0 0.0
        %2301 = vmatpush1.msra.mxu0 0.0
        %2302 = vmatprep.mubr.f32.mxu0 0.0
        %v2303 = vand.u32 %v2136, 4294901760
        %2304 = vmatmul.mubr.f32.gmra.mrb[0].mxu0 %v2303
        %v2305 = vpop.f32.mrb[0].mxu0
        %v2306 = vadd.f32 %v2215, %v2305
        %v2307 = vpop.f32.mrb[0].mxu0
        %2308 = vmatprep.mubr.f32.mxu0 0.0
        %v2309 = vand.u32 %v2139, 4294901760
        %2310 = vmatmul.mubr.f32.gmra.mrb[0].mxu0 %v2309
        %v2311 = vpop.f32.mrb[0].mxu0
        %v2312 = vadd.f32 %v2225, %v2311
        %v2313 = vpop.f32.mrb[0].mxu0
        %2314 = vdwg.mxu0
        %2315 = vmatprep.subr.mxu0 0.0
        %v2316 = vand.u32 %v1527, 4294901760
        %v2317 = vsub.f32 %v1527, %v2316
        %2318 = vmatpush1.msra.mxu0 %v2317
        %2319 = vmatprep.subr.mxu0 0.0
        %v2320 = vand.u32 %v1528, 4294901760
        %v2321 = vsub.f32 %v1528, %v2320
        %2322 = vmatpush1.msra.mxu0 %v2321
        %2323 = vmatprep.subr.mxu0 0.0
        %2324 = vmatpush1.msra.mxu0 0.0
        %2325 = vmatprep.subr.mxu0 0.0
        %2326 = vmatpush1.msra.mxu0 0.0
        %2327 = vmatprep.subr.mxu0 0.0
        %2328 = vmatpush1.msra.mxu0 0.0
        %2329 = vmatprep.subr.mxu0 0.0
        %2330 = vmatpush1.msra.mxu0 0.0
        %2331 = vmatprep.subr.mxu0 0.0
        %2332 = vmatpush1.msra.mxu0 0.0
        %2333 = vmatprep.subr.mxu0 0.0
        %2334 = vmatpush1.msra.mxu0 0.0
        %2335 = vmatprep.subr.mxu0 0.0
        %2336 = vmatpush1.msra.mxu0 0.0
        %2337 = vmatprep.subr.mxu0 0.0
        %2338 = vmatpush1.msra.mxu0 0.0
        %2339 = vmatprep.subr.mxu0 0.0
        %2340 = vmatpush1.msra.mxu0 0.0
        %2341 = vmatprep.subr.mxu0 0.0
        %2342 = vmatpush1.msra.mxu0 0.0
        %2343 = vmatprep.subr.mxu0 0.0
        %2344 = vmatpush1.msra.mxu0 0.0
        %2345 = vmatprep.subr.mxu0 0.0
        %2346 = vmatpush1.msra.mxu0 0.0
        %2347 = vmatprep.subr.mxu0 0.0
        %2348 = vmatpush1.msra.mxu0 0.0
        %2349 = vmatprep.subr.mxu0 0.0
        %2350 = vmatpush1.msra.mxu0 0.0
        %2351 = vmatprep.subr.mxu0 0.0
        %2352 = vmatpush1.msra.mxu0 0.0
        %2353 = vmatprep.subr.mxu0 0.0
        %2354 = vmatpush1.msra.mxu0 0.0
        %2355 = vmatprep.subr.mxu0 0.0
        %2356 = vmatpush1.msra.mxu0 0.0
        %2357 = vmatprep.subr.mxu0 0.0
        %2358 = vmatpush1.msra.mxu0 0.0
        %2359 = vmatprep.subr.mxu0 0.0
        %2360 = vmatpush1.msra.mxu0 0.0
        %2361 = vmatprep.subr.mxu0 0.0
        %2362 = vmatpush1.msra.mxu0 0.0
        %2363 = vmatprep.subr.mxu0 0.0
        %2364 = vmatpush1.msra.mxu0 0.0
        %2365 = vmatprep.subr.mxu0 0.0
        %2366 = vmatpush1.msra.mxu0 0.0
        %2367 = vmatprep.subr.mxu0 0.0
        %2368 = vmatpush1.msra.mxu0 0.0
        %2369 = vmatprep.subr.mxu0 0.0
        %2370 = vmatpush1.msra.mxu0 0.0
        %2371 = vmatprep.subr.mxu0 0.0
        %2372 = vmatpush1.msra.mxu0 0.0
        %2373 = vmatprep.subr.mxu0 0.0
        %2374 = vmatpush1.msra.mxu0 0.0
        %2375 = vmatprep.subr.mxu0 0.0
        %2376 = vmatpush1.msra.mxu0 0.0
        %2377 = vmatprep.subr.mxu0 0.0
        %2378 = vmatpush1.msra.mxu0 0.0
        %2379 = vmatprep.subr.mxu0 0.0
        %2380 = vmatpush1.msra.mxu0 0.0
        %2381 = vmatprep.subr.mxu0 0.0
        %2382 = vmatpush1.msra.mxu0 0.0
        %2383 = vmatprep.mubr.f32.mxu0 0.0
        %v2384 = vand.u32 %v2136, 4294901760
        %v2385 = vsub.f32 %v2136, %v2384
        %2386 = vmatmul.mubr.f32.gmra.mrb[0].mxu0 %v2385
        %v2387 = vpop.f32.mrb[0].mxu0
        %v2388 = vadd.f32 %v2306, %v2387
        %v2389 = vpop.f32.mrb[0].mxu0
        %2390 = vmatprep.mubr.f32.mxu0 0.0
        %v2391 = vand.u32 %v2139, 4294901760
        %v2392 = vsub.f32 %v2139, %v2391
        %2393 = vmatmul.mubr.f32.gmra.mrb[0].mxu0 %v2392
        %v2394 = vpop.f32.mrb[0].mxu0
        %v2395 = vadd.f32 %v2312, %v2394
        %v2396 = vpop.f32.mrb[0].mxu0
        %2397 = vdwg.mxu0
        %2398 = vmatprep.subr.mxu0 0.0
        %v2399 = vand.u32 %v1527, 4294901760
        %2400 = vmatpush1.msra.mxu0 %v2399
        %2401 = vmatprep.subr.mxu0 0.0
        %v2402 = vand.u32 %v1528, 4294901760
        %2403 = vmatpush1.msra.mxu0 %v2402
        %2404 = vmatprep.subr.mxu0 0.0
        %2405 = vmatpush1.msra.mxu0 0.0
        %2406 = vmatprep.subr.mxu0 0.0
        %2407 = vmatpush1.msra.mxu0 0.0
        %2408 = vmatprep.subr.mxu0 0.0
        %2409 = vmatpush1.msra.mxu0 0.0
        %2410 = vmatprep.subr.mxu0 0.0
        %2411 = vmatpush1.msra.mxu0 0.0
        %2412 = vmatprep.subr.mxu0 0.0
        %2413 = vmatpush1.msra.mxu0 0.0
        %2414 = vmatprep.subr.mxu0 0.0
        %2415 = vmatpush1.msra.mxu0 0.0
        %2416 = vmatprep.subr.mxu0 0.0
        %2417 = vmatpush1.msra.mxu0 0.0
        %2418 = vmatprep.subr.mxu0 0.0
        %2419 = vmatpush1.msra.mxu0 0.0
        %2420 = vmatprep.subr.mxu0 0.0
        %2421 = vmatpush1.msra.mxu0 0.0
        %2422 = vmatprep.subr.mxu0 0.0
        %2423 = vmatpush1.msra.mxu0 0.0
        %2424 = vmatprep.subr.mxu0 0.0
        %2425 = vmatpush1.msra.mxu0 0.0
        %2426 = vmatprep.subr.mxu0 0.0
        %2427 = vmatpush1.msra.mxu0 0.0
        %2428 = vmatprep.subr.mxu0 0.0
        %2429 = vmatpush1.msra.mxu0 0.0
        %2430 = vmatprep.subr.mxu0 0.0
        %2431 = vmatpush1.msra.mxu0 0.0
        %2432 = vmatprep.subr.mxu0 0.0
        %2433 = vmatpush1.msra.mxu0 0.0
        %2434 = vmatprep.subr.mxu0 0.0
        %2435 = vmatpush1.msra.mxu0 0.0
        %2436 = vmatprep.subr.mxu0 0.0
        %2437 = vmatpush1.msra.mxu0 0.0
        %2438 = vmatprep.subr.mxu0 0.0
        %2439 = vmatpush1.msra.mxu0 0.0
        %2440 = vmatprep.subr.mxu0 0.0
        %2441 = vmatpush1.msra.mxu0 0.0
        %2442 = vmatprep.subr.mxu0 0.0
        %2443 = vmatpush1.msra.mxu0 0.0
        %2444 = vmatprep.subr.mxu0 0.0
        %2445 = vmatpush1.msra.mxu0 0.0
        %2446 = vmatprep.subr.mxu0 0.0
        %2447 = vmatpush1.msra.mxu0 0.0
        %2448 = vmatprep.subr.mxu0 0.0
        %2449 = vmatpush1.msra.mxu0 0.0
        %2450 = vmatprep.subr.mxu0 0.0
        %2451 = vmatpush1.msra.mxu0 0.0
        %2452 = vmatprep.subr.mxu0 0.0
        %2453 = vmatpush1.msra.mxu0 0.0
        %2454 = vmatprep.subr.mxu0 0.0
        %2455 = vmatpush1.msra.mxu0 0.0
        %2456 = vmatprep.subr.mxu0 0.0
        %2457 = vmatpush1.msra.mxu0 0.0
        %2458 = vmatprep.subr.mxu0 0.0
        %2459 = vmatpush1.msra.mxu0 0.0
        %2460 = vmatprep.subr.mxu0 0.0
        %2461 = vmatpush1.msra.mxu0 0.0
        %2462 = vmatprep.subr.mxu0 0.0
        %2463 = vmatpush1.msra.mxu0 0.0
        %2464 = vmatprep.mubr.f32.mxu0 0.0
        %v2465 = vand.u32 %v2136, 4294901760
        %v2466 = vsub.f32 %v2136, %v2465
        %v2467 = vand.u32 %v2466, 4294901760
        %2468 = vmatmul.mubr.f32.gmra.mrb[0].mxu0 %v2467
        %v2469 = vpop.f32.mrb[0].mxu0
        %v2470 = vadd.f32 %v2388, %v2469
        %v2471 = vpop.f32.mrb[0].mxu0
        %2472 = vmatprep.mubr.f32.mxu0 0.0
        %v2473 = vand.u32 %v2139, 4294901760
        %v2474 = vsub.f32 %v2139, %v2473
        %v2475 = vand.u32 %v2474, 4294901760
        %2476 = vmatmul.mubr.f32.gmra.mrb[0].mxu0 %v2475
        %v2477 = vpop.f32.mrb[0].mxu0
        %v2478 = vadd.f32 %v2395, %v2477
        %v2479 = vpop.f32.mrb[0].mxu0
        %2480 = vdwg.mxu0
        %2481 = vmatprep.subr.mxu0 0.0
        %v2482 = vand.u32 %v1527, 4294901760
        %v2483 = vsub.f32 %v1527, %v2482
        %v2484 = vand.u32 %v2483, 4294901760
        %2485 = vmatpush1.msra.mxu0 %v2484
        %2486 = vmatprep.subr.mxu0 0.0
        %v2487 = vand.u32 %v1528, 4294901760
        %v2488 = vsub.f32 %v1528, %v2487
        %v2489 = vand.u32 %v2488, 4294901760
        %2490 = vmatpush1.msra.mxu0 %v2489
        %2491 = vmatprep.subr.mxu0 0.0
        %2492 = vmatpush1.msra.mxu0 0.0
        %2493 = vmatprep.subr.mxu0 0.0
        %2494 = vmatpush1.msra.mxu0 0.0
        %2495 = vmatprep.subr.mxu0 0.0
        %2496 = vmatpush1.msra.mxu0 0.0
        %2497 = vmatprep.subr.mxu0 0.0
        %2498 = vmatpush1.msra.mxu0 0.0
        %2499 = vmatprep.subr.mxu0 0.0
        %2500 = vmatpush1.msra.mxu0 0.0
        %2501 = vmatprep.subr.mxu0 0.0
        %2502 = vmatpush1.msra.mxu0 0.0
        %2503 = vmatprep.subr.mxu0 0.0
        %2504 = vmatpush1.msra.mxu0 0.0
        %2505 = vmatprep.subr.mxu0 0.0
        %2506 = vmatpush1.msra.mxu0 0.0
        %2507 = vmatprep.subr.mxu0 0.0
        %2508 = vmatpush1.msra.mxu0 0.0
        %2509 = vmatprep.subr.mxu0 0.0
        %2510 = vmatpush1.msra.mxu0 0.0
        %2511 = vmatprep.subr.mxu0 0.0
        %2512 = vmatpush1.msra.mxu0 0.0
        %2513 = vmatprep.subr.mxu0 0.0
        %2514 = vmatpush1.msra.mxu0 0.0
        %2515 = vmatprep.subr.mxu0 0.0
        %2516 = vmatpush1.msra.mxu0 0.0
        %2517 = vmatprep.subr.mxu0 0.0
        %2518 = vmatpush1.msra.mxu0 0.0
        %2519 = vmatprep.subr.mxu0 0.0
        %2520 = vmatpush1.msra.mxu0 0.0
        %2521 = vmatprep.subr.mxu0 0.0
        %2522 = vmatpush1.msra.mxu0 0.0
        %2523 = vmatprep.subr.mxu0 0.0
        %2524 = vmatpush1.msra.mxu0 0.0
        %2525 = vmatprep.subr.mxu0 0.0
        %2526 = vmatpush1.msra.mxu0 0.0
        %2527 = vmatprep.subr.mxu0 0.0
        %2528 = vmatpush1.msra.mxu0 0.0
        %2529 = vmatprep.subr.mxu0 0.0
        %2530 = vmatpush1.msra.mxu0 0.0
        %2531 = vmatprep.subr.mxu0 0.0
        %2532 = vmatpush1.msra.mxu0 0.0
        %2533 = vmatprep.subr.mxu0 0.0
        %2534 = vmatpush1.msra.mxu0 0.0
        %2535 = vmatprep.subr.mxu0 0.0
        %2536 = vmatpush1.msra.mxu0 0.0
        %2537 = vmatprep.subr.mxu0 0.0
        %2538 = vmatpush1.msra.mxu0 0.0
        %2539 = vmatprep.subr.mxu0 0.0
        %2540 = vmatpush1.msra.mxu0 0.0
        %2541 = vmatprep.subr.mxu0 0.0
        %2542 = vmatpush1.msra.mxu0 0.0
        %2543 = vmatprep.subr.mxu0 0.0
        %2544 = vmatpush1.msra.mxu0 0.0
        %2545 = vmatprep.subr.mxu0 0.0
        %2546 = vmatpush1.msra.mxu0 0.0
        %2547 = vmatprep.subr.mxu0 0.0
        %2548 = vmatpush1.msra.mxu0 0.0
        %2549 = vmatprep.subr.mxu0 0.0
        %2550 = vmatpush1.msra.mxu0 0.0
        %2551 = vmatprep.mubr.f32.mxu0 0.0
        %v2552 = vand.u32 %v2136, 4294901760
        %2553 = vmatmul.mubr.f32.gmra.mrb[0].mxu0 %v2552
        %v2554 = vpop.f32.mrb[0].mxu0
        %v2555 = vadd.f32 %v2470, %v2554
        %v2556 = vpop.f32.mrb[0].mxu0
        %2557 = vmatprep.mubr.f32.mxu0 0.0
        %v2558 = vand.u32 %v2139, 4294901760
        %2559 = vmatmul.mubr.f32.gmra.mrb[0].mxu0 %v2558
        %v2560 = vpop.f32.mrb[0].mxu0
        %v2561 = vadd.f32 %v2478, %v2560
        %v2562 = vpop.f32.mrb[0].mxu0
        %2563 = vdwg.mxu0
        %2564 = vmatprep.subr.mxu0 0.0
        %v2565 = vand.u32 %v1527, 4294901760
        %2566 = vmatpush1.msra.mxu0 %v2565
        %2567 = vmatprep.subr.mxu0 0.0
        %v2568 = vand.u32 %v1528, 4294901760
        %2569 = vmatpush1.msra.mxu0 %v2568
        %2570 = vmatprep.subr.mxu0 0.0
        %2571 = vmatpush1.msra.mxu0 0.0
        %2572 = vmatprep.subr.mxu0 0.0
        %2573 = vmatpush1.msra.mxu0 0.0
        %2574 = vmatprep.subr.mxu0 0.0
        %2575 = vmatpush1.msra.mxu0 0.0
        %2576 = vmatprep.subr.mxu0 0.0
        %2577 = vmatpush1.msra.mxu0 0.0
        %2578 = vmatprep.subr.mxu0 0.0
        %2579 = vmatpush1.msra.mxu0 0.0
        %2580 = vmatprep.subr.mxu0 0.0
        %2581 = vmatpush1.msra.mxu0 0.0
        %2582 = vmatprep.subr.mxu0 0.0
        %2583 = vmatpush1.msra.mxu0 0.0
        %2584 = vmatprep.subr.mxu0 0.0
        %2585 = vmatpush1.msra.mxu0 0.0
        %2586 = vmatprep.subr.mxu0 0.0
        %2587 = vmatpush1.msra.mxu0 0.0
        %2588 = vmatprep.subr.mxu0 0.0
        %2589 = vmatpush1.msra.mxu0 0.0
        %2590 = vmatprep.subr.mxu0 0.0
        %2591 = vmatpush1.msra.mxu0 0.0
        %2592 = vmatprep.subr.mxu0 0.0
        %2593 = vmatpush1.msra.mxu0 0.0
        %2594 = vmatprep.subr.mxu0 0.0
        %2595 = vmatpush1.msra.mxu0 0.0
        %2596 = vmatprep.subr.mxu0 0.0
        %2597 = vmatpush1.msra.mxu0 0.0
        %2598 = vmatprep.subr.mxu0 0.0
        %2599 = vmatpush1.msra.mxu0 0.0
        %2600 = vmatprep.subr.mxu0 0.0
        %2601 = vmatpush1.msra.mxu0 0.0
        %2602 = vmatprep.subr.mxu0 0.0
        %2603 = vmatpush1.msra.mxu0 0.0
        %2604 = vmatprep.subr.mxu0 0.0
        %2605 = vmatpush1.msra.mxu0 0.0
        %2606 = vmatprep.subr.mxu0 0.0
        %2607 = vmatpush1.msra.mxu0 0.0
        %2608 = vmatprep.subr.mxu0 0.0
        %2609 = vmatpush1.msra.mxu0 0.0
        %2610 = vmatprep.subr.mxu0 0.0
        %2611 = vmatpush1.msra.mxu0 0.0
        %2612 = vmatprep.subr.mxu0 0.0
        %2613 = vmatpush1.msra.mxu0 0.0
        %2614 = vmatprep.subr.mxu0 0.0
        %2615 = vmatpush1.msra.mxu0 0.0
        %2616 = vmatprep.subr.mxu0 0.0
        %2617 = vmatpush1.msra.mxu0 0.0
        %2618 = vmatprep.subr.mxu0 0.0
        %2619 = vmatpush1.msra.mxu0 0.0
        %2620 = vmatprep.subr.mxu0 0.0
        %2621 = vmatpush1.msra.mxu0 0.0
        %2622 = vmatprep.subr.mxu0 0.0
        %2623 = vmatpush1.msra.mxu0 0.0
        %2624 = vmatprep.subr.mxu0 0.0
        %2625 = vmatpush1.msra.mxu0 0.0
        %2626 = vmatprep.subr.mxu0 0.0
        %2627 = vmatpush1.msra.mxu0 0.0
        %2628 = vmatprep.subr.mxu0 0.0
        %2629 = vmatpush1.msra.mxu0 0.0
        %2630 = vmatprep.mubr.f32.mxu0 0.0
        %v2631 = vand.u32 %v2136, 4294901760
        %2632 = vmatmul.mubr.f32.gmra.mrb[0].mxu0 %v2631
        %v2633 = vpop.f32.mrb[0].mxu0
        %v2634 = vadd.f32 %v2555, %v2633
        %v2635 = vpop.f32.mrb[0].mxu0
        %2636 = vmatprep.mubr.f32.mxu0 0.0
        %v2637 = vand.u32 %v2139, 4294901760
        %2638 = vmatmul.mubr.f32.gmra.mrb[0].mxu0 %v2637
        %v2639 = vpop.f32.mrb[0].mxu0
        %v2640 = vadd.f32 %v2561, %v2639
        %v2641 = vpop.f32.mrb[0].mxu0
        %2642 = vdwg.mxu0
        %v2643 = vpack.c.bf16 %v2640, %v2634
        %2644 = vrot.lane.b32.xlu0 %v1395, 120
        %v2645 = vpop.permute.xlu0 %2644
        %v2647 = vsel %vm269, %v2645, 0
        %v2650 = vsel %vm269, %v2643, 0
        %2652 = vmatprep.subr.bf16.mxu0 0
        %2653 = vmatpush1.bf16.xpose.msra.mxu0 %v2650
        %2654 = vmatprep.subr.bf16.mxu0 0
        %2655 = vmatpush1.bf16.xpose.msra.mxu0 0
        %2656 = vmatprep.subr.bf16.mxu0 0
        %2657 = vmatpush1.bf16.xpose.msra.mxu0 0
        %2658 = vmatprep.subr.bf16.mxu0 0
        %2659 = vmatpush1.bf16.xpose.msra.mxu0 0
        %2660 = vmatprep.subr.bf16.mxu0 0
        %2661 = vmatpush1.bf16.xpose.msra.mxu0 0
        %2662 = vmatprep.subr.bf16.mxu0 0
        %2663 = vmatpush1.bf16.xpose.msra.mxu0 0
        %2664 = vmatprep.subr.bf16.mxu0 0
        %2665 = vmatpush1.bf16.xpose.msra.mxu0 0
        %2666 = vmatprep.subr.bf16.mxu0 0
        %2667 = vmatpush1.bf16.xpose.msra.mxu0 0
        %2668 = vmatprep.subr.bf16.mxu0 0
        %2669 = vmatpush1.bf16.xpose.msra.mxu0 0
        %2670 = vmatprep.subr.bf16.mxu0 0
        %2671 = vmatpush1.bf16.xpose.msra.mxu0 0
        %2672 = vmatprep.subr.bf16.mxu0 0
        %2673 = vmatpush1.bf16.xpose.msra.mxu0 0
        %2674 = vmatprep.subr.bf16.mxu0 0
        %2675 = vmatpush1.bf16.xpose.msra.mxu0 0
        %2676 = vmatprep.subr.bf16.mxu0 0
        %2677 = vmatpush1.bf16.xpose.msra.mxu0 0
        %2678 = vmatprep.subr.bf16.mxu0 0
        %2679 = vmatpush1.bf16.xpose.msra.mxu0 0
        %2680 = vmatprep.subr.bf16.mxu0 0
        %2681 = vmatpush1.bf16.xpose.msra.mxu0 0
        %2682 = vmatprep.subr.bf16.mxu0 0
        %2683 = vmatpush1.bf16.xpose.msra.mxu0 0
        %2684 = vmatprep.mubr.bf16.mxu0 0
        %2685 = vmatmul.mubr.bf16.gmra.mrb[0].mxu0 %v2647
        %v2686 = vpop.f32.mrb[0].mxu0
        %v2687 = vadd.f32 0.0, %v2686
        %v2688 = vpop.f32.mrb[0].mxu0
        %v2689 = vpop.f32.mrb[0].mxu0
        %v2690 = vadd.f32 0.0, %v2689
        %v2691 = vpop.f32.mrb[0].mxu0
        %2692 = vdwg.mxu0
        %v2693 = vmul.f32 %v2687, 0.35355338
        %v2694 = vmul.f32 %v2690, 0.35355338
        %v2695 = vsel %vm1449, %v2693, -1e+30
        %v2696 = vsel %vm1450, %v2694, -1e+30
        %v2697 = vsel %vm840, %v2695, -inf
        %2698 = vmax.xlane.f32.xlu0 %v2697
        %v2699 = vpop.xlane.xlu0 %2698
        %v2700 = vsel %vm840, %v2696, -inf
        %2701 = vmax.xlane.f32.xlu0 %v2700
        %v2702 = vpop.xlane.xlu0 %2701
        %v2703 = vsub.f32 %v2695, %v2699
        %v2704 = vsub.f32 %v2696, %v2702
        %v2705 = vmul.f32 %v2703, 1.442695
        %v2706 = vpow.pop %v2705
        %v2707 = vmul.f32 %v2704, 1.442695
        %v2708 = vpow.pop %v2707
        %v2709 = vsel %vm840, %v2706, 0.0
        %2710 = vadd.xlane.f32.xlu0 %v2709
        %v2711 = vpop.xlane.xlu0 %2710
        %v2712 = vsel %vm840, %v2708, 0.0
        %2713 = vadd.xlane.f32.xlu0 %v2712
        %v2714 = vpop.xlane.xlu0 %2713
        %v2715 = vrcp.pop %v2711
        %v2716 = vmul.f32 %v2706, %v2715
        %v2717 = vrcp.pop %v2714
        %v2718 = vmul.f32 %v2708, %v2717
        %v2719 = vpack.c.bf16 %v2718, %v2716
        %2720 = vrot.lane.b32.xlu0 %v1395, 56
        %v2721 = vpop.permute.xlu0 %2720
        %v2724 = vsel %vm840, %v2719, 0
        %2726 = vmatprep.subr.bf16.mxu0 0
        %2727 = vmatpush1.bf16.msra.mxu0 %v2721
        %2728 = vmatprep.subr.bf16.mxu0 0
        %2729 = vmatpush1.bf16.msra.mxu0 0
        %2730 = vmatprep.subr.bf16.mxu0 0
        %2731 = vmatpush1.bf16.msra.mxu0 0
        %2732 = vmatprep.subr.bf16.mxu0 0
        %2733 = vmatpush1.bf16.msra.mxu0 0
        %2734 = vmatprep.subr.bf16.mxu0 0
        %2735 = vmatpush1.bf16.msra.mxu0 0
        %2736 = vmatprep.subr.bf16.mxu0 0
        %2737 = vmatpush1.bf16.msra.mxu0 0
        %2738 = vmatprep.subr.bf16.mxu0 0
        %2739 = vmatpush1.bf16.msra.mxu0 0
        %2740 = vmatprep.subr.bf16.mxu0 0
        %2741 = vmatpush1.bf16.msra.mxu0 0
        %2742 = vmatprep.subr.bf16.mxu0 0
        %2743 = vmatpush1.bf16.msra.mxu0 0
        %2744 = vmatprep.subr.bf16.mxu0 0
        %2745 = vmatpush1.bf16.msra.mxu0 0
        %2746 = vmatprep.subr.bf16.mxu0 0
        %2747 = vmatpush1.bf16.msra.mxu0 0
        %2748 = vmatprep.subr.bf16.mxu0 0
        %2749 = vmatpush1.bf16.msra.mxu0 0
        %2750 = vmatprep.subr.bf16.mxu0 0
        %2751 = vmatpush1.bf16.msra.mxu0 0
        %2752 = vmatprep.subr.bf16.mxu0 0
        %2753 = vmatpush1.bf16.msra.mxu0 0
        %2754 = vmatprep.subr.bf16.mxu0 0
        %2755 = vmatpush1.bf16.msra.mxu0 0
        %2756 = vmatprep.subr.bf16.mxu0 0
        %2757 = vmatpush1.bf16.msra.mxu0 0
        %2758 = vmatprep.mubr.bf16.mxu0 0
        %2759 = vmatmul.mubr.bf16.gmra.mrb[0].mxu0 %v2724
        %v2760 = vpop.f32.mrb[0].mxu0
        %v2761 = vadd.f32 0.0, %v2760
        %v2762 = vpop.f32.mrb[0].mxu0
        %v2763 = vpop.f32.mrb[0].mxu0
        %v2764 = vadd.f32 0.0, %v2763
        %v2765 = vpop.f32.mrb[0].mxu0
        %2766 = vdwg.mxu0
        %2769 = vrot.lane.b32.xlu0 %v2761, 8
        %v2770 = vpop.permute.xlu0 %2769
        %2771 = vrot.lane.b32.xlu0 %v2764, 8
        %v2772 = vpop.permute.xlu0 %2771
        %2775 = vst.msk [vmem:[#allocation2] sm:$0xff] %vm823, %v2770
        %2776 = vst.msk [vmem:[#allocation2 + $0x8] sm:$0xff] %vm823, %v2772
        %s2777 = scalar_lea.vmem %s2, 32
        %v2778 = vld [vmem:[%s2777] sm:$0xff]
        %v2779 = vld [vmem:[%s2777 + $0x8] sm:$0xff]
        %2780 = vrot.lane.b32.xlu0 %v255, 80
        %v2781 = vpop.permute.xlu0 %2780
        %2782 = vrot.lane.b32.xlu0 %v258, 80
        %v2783 = vpop.permute.xlu0 %2782
        %v2784 = vsel %vm269, %v2781, 0
        %v2786 = vsel %vm269, %v2783, 0
        %v2789 = vsel %vm269, %v2778, 0
        %v2792 = vsel %vm269, %v2779, 0
        %2794 = vmatprep.subr.mxu0 0.0
        %v2795 = vand.u32 %v2789, 4294901760
        %2796 = vmatpush1.xpose.msra.mxu0 %v2795
        %2797 = vmatprep.subr.mxu0 0.0
        %v2798 = vand.u32 %v2792, 4294901760
        %2799 = vmatpush1.xpose.msra.mxu0 %v2798
        %2800 = vmatprep.subr.mxu0 0.0
        %2801 = vmatpush1.xpose.msra.mxu0 0.0
        %2802 = vmatprep.subr.mxu0 0.0
        %2803 = vmatpush1.xpose.msra.mxu0 0.0
        %2804 = vmatprep.subr.mxu0 0.0
        %2805 = vmatpush1.xpose.msra.mxu0 0.0
        %2806 = vmatprep.subr.mxu0 0.0
        %2807 = vmatpush1.xpose.msra.mxu0 0.0
        %2808 = vmatprep.subr.mxu0 0.0
        %2809 = vmatpush1.xpose.msra.mxu0 0.0
        %2810 = vmatprep.subr.mxu0 0.0
        %2811 = vmatpush1.xpose.msra.mxu0 0.0
        %2812 = vmatprep.subr.mxu0 0.0
        %2813 = vmatpush1.xpose.msra.mxu0 0.0
        %2814 = vmatprep.subr.mxu0 0.0
        %2815 = vmatpush1.xpose.msra.mxu0 0.0
        %2816 = vmatprep.subr.mxu0 0.0
        %2817 = vmatpush1.xpose.msra.mxu0 0.0
        %2818 = vmatprep.subr.mxu0 0.0
        %2819 = vmatpush1.xpose.msra.mxu0 0.0
        %2820 = vmatprep.subr.mxu0 0.0
        %2821 = vmatpush1.xpose.msra.mxu0 0.0
        %2822 = vmatprep.subr.mxu0 0.0
        %2823 = vmatpush1.xpose.msra.mxu0 0.0
        %2824 = vmatprep.subr.mxu0 0.0
        %2825 = vmatpush1.xpose.msra.mxu0 0.0
        %2826 = vmatprep.subr.mxu0 0.0
        %2827 = vmatpush1.xpose.msra.mxu0 0.0
        %2828 = vmatprep.subr.mxu0 0.0
        %2829 = vmatpush1.xpose.msra.mxu0 0.0
        %2830 = vmatprep.subr.mxu0 0.0
        %2831 = vmatpush1.xpose.msra.mxu0 0.0
        %2832 = vmatprep.subr.mxu0 0.0
        %2833 = vmatpush1.xpose.msra.mxu0 0.0
        %2834 = vmatprep.subr.mxu0 0.0
        %2835 = vmatpush1.xpose.msra.mxu0 0.0
        %2836 = vmatprep.subr.mxu0 0.0
        %2837 = vmatpush1.xpose.msra.mxu0 0.0
        %2838 = vmatprep.subr.mxu0 0.0
        %2839 = vmatpush1.xpose.msra.mxu0 0.0
        %2840 = vmatprep.subr.mxu0 0.0
        %2841 = vmatpush1.xpose.msra.mxu0 0.0
        %2842 = vmatprep.subr.mxu0 0.0
        %2843 = vmatpush1.xpose.msra.mxu0 0.0
        %2844 = vmatprep.subr.mxu0 0.0
        %2845 = vmatpush1.xpose.msra.mxu0 0.0
        %2846 = vmatprep.subr.mxu0 0.0
        %2847 = vmatpush1.xpose.msra.mxu0 0.0
        %2848 = vmatprep.subr.mxu0 0.0
        %2849 = vmatpush1.xpose.msra.mxu0 0.0
        %2850 = vmatprep.subr.mxu0 0.0
        %2851 = vmatpush1.xpose.msra.mxu0 0.0
        %2852 = vmatprep.subr.mxu0 0.0
        %2853 = vmatpush1.xpose.msra.mxu0 0.0
        %2854 = vmatprep.subr.mxu0 0.0
        %2855 = vmatpush1.xpose.msra.mxu0 0.0
        %2856 = vmatprep.subr.mxu0 0.0
        %2857 = vmatpush1.xpose.msra.mxu0 0.0
        %2858 = vmatprep.subr.mxu0 0.0
        %2859 = vmatpush1.xpose.msra.mxu0 0.0
        %2860 = vmatprep.mubr.f32.mxu0 0.0
        %v2861 = vand.u32 %v2784, 4294901760
        %v2862 = vsub.f32 %v2784, %v2861
        %v2863 = vand.u32 %v2862, 4294901760
        %v2864 = vsub.f32 %v2862, %v2863
        %v2865 = vand.u32 %v2864, 4294901760
        %2866 = vmatmul.mubr.f32.gmra.mrb[0].mxu0 %v2865
        %v2867 = vpop.f32.mrb[0].mxu0
        %v2868 = vadd.f32 0.0, %v2867
        %v2869 = vpop.f32.mrb[0].mxu0
        %2870 = vmatprep.mubr.f32.mxu0 0.0
        %v2871 = vand.u32 %v2786, 4294901760
        %v2872 = vsub.f32 %v2786, %v2871
        %v2873 = vand.u32 %v2872, 4294901760
        %v2874 = vsub.f32 %v2872, %v2873
        %v2875 = vand.u32 %v2874, 4294901760
        %2876 = vmatmul.mubr.f32.gmra.mrb[0].mxu0 %v2875
        %v2877 = vpop.f32.mrb[0].mxu0
        %v2878 = vadd.f32 0.0, %v2877
        %v2879 = vpop.f32.mrb[0].mxu0
        %2880 = vdwg.mxu0
        %2881 = vmatprep.subr.mxu0 0.0
        %v2882 = vand.u32 %v2789, 4294901760
        %v2883 = vsub.f32 %v2789, %v2882
        %v2884 = vand.u32 %v2883, 4294901760
        %v2885 = vsub.f32 %v2883, %v2884
        %v2886 = vand.u32 %v2885, 4294901760
        %2887 = vmatpush1.xpose.msra.mxu0 %v2886
        %2888 = vmatprep.subr.mxu0 0.0
        %v2889 = vand.u32 %v2792, 4294901760
        %v2890 = vsub.f32 %v2792, %v2889
        %v2891 = vand.u32 %v2890, 4294901760
        %v2892 = vsub.f32 %v2890, %v2891
        %v2893 = vand.u32 %v2892, 4294901760
        %2894 = vmatpush1.xpose.msra.mxu0 %v2893
        %2895 = vmatprep.subr.mxu0 0.0
        %2896 = vmatpush1.xpose.msra.mxu0 0.0
        %2897 = vmatprep.subr.mxu0 0.0
        %2898 = vmatpush1.xpose.msra.mxu0 0.0
        %2899 = vmatprep.subr.mxu0 0.0
        %2900 = vmatpush1.xpose.msra.mxu0 0.0
        %2901 = vmatprep.subr.mxu0 0.0
        %2902 = vmatpush1.xpose.msra.mxu0 0.0
        %2903 = vmatprep.subr.mxu0 0.0
        %2904 = vmatpush1.xpose.msra.mxu0 0.0
        %2905 = vmatprep.subr.mxu0 0.0
        %2906 = vmatpush1.xpose.msra.mxu0 0.0
        %2907 = vmatprep.subr.mxu0 0.0
        %2908 = vmatpush1.xpose.msra.mxu0 0.0
        %2909 = vmatprep.subr.mxu0 0.0
        %2910 = vmatpush1.xpose.msra.mxu0 0.0
        %2911 = vmatprep.subr.mxu0 0.0
        %2912 = vmatpush1.xpose.msra.mxu0 0.0
        %2913 = vmatprep.subr.mxu0 0.0
        %2914 = vmatpush1.xpose.msra.mxu0 0.0
        %2915 = vmatprep.subr.mxu0 0.0
        %2916 = vmatpush1.xpose.msra.mxu0 0.0
        %2917 = vmatprep.subr.mxu0 0.0
        %2918 = vmatpush1.xpose.msra.mxu0 0.0
        %2919 = vmatprep.subr.mxu0 0.0
        %2920 = vmatpush1.xpose.msra.mxu0 0.0
        %2921 = vmatprep.subr.mxu0 0.0
        %2922 = vmatpush1.xpose.msra.mxu0 0.0
        %2923 = vmatprep.subr.mxu0 0.0
        %2924 = vmatpush1.xpose.msra.mxu0 0.0
        %2925 = vmatprep.subr.mxu0 0.0
        %2926 = vmatpush1.xpose.msra.mxu0 0.0
        %2927 = vmatprep.subr.mxu0 0.0
        %2928 = vmatpush1.xpose.msra.mxu0 0.0
        %2929 = vmatprep.subr.mxu0 0.0
        %2930 = vmatpush1.xpose.msra.mxu0 0.0
        %2931 = vmatprep.subr.mxu0 0.0
        %2932 = vmatpush1.xpose.msra.mxu0 0.0
        %2933 = vmatprep.subr.mxu0 0.0
        %2934 = vmatpush1.xpose.msra.mxu0 0.0
        %2935 = vmatprep.subr.mxu0 0.0
        %2936 = vmatpush1.xpose.msra.mxu0 0.0
        %2937 = vmatprep.subr.mxu0 0.0
        %2938 = vmatpush1.xpose.msra.mxu0 0.0
        %2939 = vmatprep.subr.mxu0 0.0
        %2940 = vmatpush1.xpose.msra.mxu0 0.0
        %2941 = vmatprep.subr.mxu0 0.0
        %2942 = vmatpush1.xpose.msra.mxu0 0.0
        %2943 = vmatprep.subr.mxu0 0.0
        %2944 = vmatpush1.xpose.msra.mxu0 0.0
        %2945 = vmatprep.subr.mxu0 0.0
        %2946 = vmatpush1.xpose.msra.mxu0 0.0
        %2947 = vmatprep.subr.mxu0 0.0
        %2948 = vmatpush1.xpose.msra.mxu0 0.0
        %2949 = vmatprep.subr.mxu0 0.0
        %2950 = vmatpush1.xpose.msra.mxu0 0.0
        %2951 = vmatprep.subr.mxu0 0.0
        %2952 = vmatpush1.xpose.msra.mxu0 0.0
        %2953 = vmatprep.subr.mxu0 0.0
        %2954 = vmatpush1.xpose.msra.mxu0 0.0
        %2955 = vmatprep.mubr.f32.mxu0 0.0
        %v2956 = vand.u32 %v2784, 4294901760
        %2957 = vmatmul.mubr.f32.gmra.mrb[0].mxu0 %v2956
        %v2958 = vpop.f32.mrb[0].mxu0
        %v2959 = vadd.f32 %v2868, %v2958
        %v2960 = vpop.f32.mrb[0].mxu0
        %2961 = vmatprep.mubr.f32.mxu0 0.0
        %v2962 = vand.u32 %v2786, 4294901760
        %2963 = vmatmul.mubr.f32.gmra.mrb[0].mxu0 %v2962
        %v2964 = vpop.f32.mrb[0].mxu0
        %v2965 = vadd.f32 %v2878, %v2964
        %v2966 = vpop.f32.mrb[0].mxu0
        %2967 = vdwg.mxu0
        %2968 = vmatprep.subr.mxu0 0.0
        %v2969 = vand.u32 %v2789, 4294901760
        %v2970 = vsub.f32 %v2789, %v2969
        %2971 = vmatpush1.xpose.msra.mxu0 %v2970
        %2972 = vmatprep.subr.mxu0 0.0
        %v2973 = vand.u32 %v2792, 4294901760
        %v2974 = vsub.f32 %v2792, %v2973
        %2975 = vmatpush1.xpose.msra.mxu0 %v2974
        %2976 = vmatprep.subr.mxu0 0.0
        %2977 = vmatpush1.xpose.msra.mxu0 0.0
        %2978 = vmatprep.subr.mxu0 0.0
        %2979 = vmatpush1.xpose.msra.mxu0 0.0
        %2980 = vmatprep.subr.mxu0 0.0
        %2981 = vmatpush1.xpose.msra.mxu0 0.0
        %2982 = vmatprep.subr.mxu0 0.0
        %2983 = vmatpush1.xpose.msra.mxu0 0.0
        %2984 = vmatprep.subr.mxu0 0.0
        %2985 = vmatpush1.xpose.msra.mxu0 0.0
        %2986 = vmatprep.subr.mxu0 0.0
        %2987 = vmatpush1.xpose.msra.mxu0 0.0
        %2988 = vmatprep.subr.mxu0 0.0
        %2989 = vmatpush1.xpose.msra.mxu0 0.0
        %2990 = vmatprep.subr.mxu0 0.0
        %2991 = vmatpush1.xpose.msra.mxu0 0.0
        %2992 = vmatprep.subr.mxu0 0.0
        %2993 = vmatpush1.xpose.msra.mxu0 0.0
        %2994 = vmatprep.subr.mxu0 0.0
        %2995 = vmatpush1.xpose.msra.mxu0 0.0
        %2996 = vmatprep.subr.mxu0 0.0
        %2997 = vmatpush1.xpose.msra.mxu0 0.0
        %2998 = vmatprep.subr.mxu0 0.0
        %2999 = vmatpush1.xpose.msra.mxu0 0.0
        %3000 = vmatprep.subr.mxu0 0.0
        %3001 = vmatpush1.xpose.msra.mxu0 0.0
        %3002 = vmatprep.subr.mxu0 0.0
        %3003 = vmatpush1.xpose.msra.mxu0 0.0
        %3004 = vmatprep.subr.mxu0 0.0
        %3005 = vmatpush1.xpose.msra.mxu0 0.0
        %3006 = vmatprep.subr.mxu0 0.0
        %3007 = vmatpush1.xpose.msra.mxu0 0.0
        %3008 = vmatprep.subr.mxu0 0.0
        %3009 = vmatpush1.xpose.msra.mxu0 0.0
        %3010 = vmatprep.subr.mxu0 0.0
        %3011 = vmatpush1.xpose.msra.mxu0 0.0
        %3012 = vmatprep.subr.mxu0 0.0
        %3013 = vmatpush1.xpose.msra.mxu0 0.0
        %3014 = vmatprep.subr.mxu0 0.0
        %3015 = vmatpush1.xpose.msra.mxu0 0.0
        %3016 = vmatprep.subr.mxu0 0.0
        %3017 = vmatpush1.xpose.msra.mxu0 0.0
        %3018 = vmatprep.subr.mxu0 0.0
        %3019 = vmatpush1.xpose.msra.mxu0 0.0
        %3020 = vmatprep.subr.mxu0 0.0
        %3021 = vmatpush1.xpose.msra.mxu0 0.0
        %3022 = vmatprep.subr.mxu0 0.0
        %3023 = vmatpush1.xpose.msra.mxu0 0.0
        %3024 = vmatprep.subr.mxu0 0.0
        %3025 = vmatpush1.xpose.msra.mxu0 0.0
        %3026 = vmatprep.subr.mxu0 0.0
        %3027 = vmatpush1.xpose.msra.mxu0 0.0
        %3028 = vmatprep.subr.mxu0 0.0
        %3029 = vmatpush1.xpose.msra.mxu0 0.0
        %3030 = vmatprep.subr.mxu0 0.0
        %3031 = vmatpush1.xpose.msra.mxu0 0.0
        %3032 = vmatprep.subr.mxu0 0.0
        %3033 = vmatpush1.xpose.msra.mxu0 0.0
        %3034 = vmatprep.subr.mxu0 0.0
        %3035 = vmatpush1.xpose.msra.mxu0 0.0
        %3036 = vmatprep.mubr.f32.mxu0 0.0
        %v3037 = vand.u32 %v2784, 4294901760
        %v3038 = vsub.f32 %v2784, %v3037
        %3039 = vmatmul.mubr.f32.gmra.mrb[0].mxu0 %v3038
        %v3040 = vpop.f32.mrb[0].mxu0
        %v3041 = vadd.f32 %v2959, %v3040
        %v3042 = vpop.f32.mrb[0].mxu0
        %3043 = vmatprep.mubr.f32.mxu0 0.0
        %v3044 = vand.u32 %v2786, 4294901760
        %v3045 = vsub.f32 %v2786, %v3044
        %3046 = vmatmul.mubr.f32.gmra.mrb[0].mxu0 %v3045
        %v3047 = vpop.f32.mrb[0].mxu0
        %v3048 = vadd.f32 %v2965, %v3047
        %v3049 = vpop.f32.mrb[0].mxu0
        %3050 = vdwg.mxu0
        %3051 = vmatprep.subr.mxu0 0.0
        %v3052 = vand.u32 %v2789, 4294901760
        %3053 = vmatpush1.xpose.msra.mxu0 %v3052
        %3054 = vmatprep.subr.mxu0 0.0
        %v3055 = vand.u32 %v2792, 4294901760
        %3056 = vmatpush1.xpose.msra.mxu0 %v3055
        %3057 = vmatprep.subr.mxu0 0.0
        %3058 = vmatpush1.xpose.msra.mxu0 0.0
        %3059 = vmatprep.subr.mxu0 0.0
        %3060 = vmatpush1.xpose.msra.mxu0 0.0
        %3061 = vmatprep.subr.mxu0 0.0
        %3062 = vmatpush1.xpose.msra.mxu0 0.0
        %3063 = vmatprep.subr.mxu0 0.0
        %3064 = vmatpush1.xpose.msra.mxu0 0.0
        %3065 = vmatprep.subr.mxu0 0.0
        %3066 = vmatpush1.xpose.msra.mxu0 0.0
        %3067 = vmatprep.subr.mxu0 0.0
        %3068 = vmatpush1.xpose.msra.mxu0 0.0
        %3069 = vmatprep.subr.mxu0 0.0
        %3070 = vmatpush1.xpose.msra.mxu0 0.0
        %3071 = vmatprep.subr.mxu0 0.0
        %3072 = vmatpush1.xpose.msra.mxu0 0.0
        %3073 = vmatprep.subr.mxu0 0.0
        %3074 = vmatpush1.xpose.msra.mxu0 0.0
        %3075 = vmatprep.subr.mxu0 0.0
        %3076 = vmatpush1.xpose.msra.mxu0 0.0
        %3077 = vmatprep.subr.mxu0 0.0
        %3078 = vmatpush1.xpose.msra.mxu0 0.0
        %3079 = vmatprep.subr.mxu0 0.0
        %3080 = vmatpush1.xpose.msra.mxu0 0.0
        %3081 = vmatprep.subr.mxu0 0.0
        %3082 = vmatpush1.xpose.msra.mxu0 0.0
        %3083 = vmatprep.subr.mxu0 0.0
        %3084 = vmatpush1.xpose.msra.mxu0 0.0
        %3085 = vmatprep.subr.mxu0 0.0
        %3086 = vmatpush1.xpose.msra.mxu0 0.0
        %3087 = vmatprep.subr.mxu0 0.0
        %3088 = vmatpush1.xpose.msra.mxu0 0.0
        %3089 = vmatprep.subr.mxu0 0.0
        %3090 = vmatpush1.xpose.msra.mxu0 0.0
        %3091 = vmatprep.subr.mxu0 0.0
        %3092 = vmatpush1.xpose.msra.mxu0 0.0
        %3093 = vmatprep.subr.mxu0 0.0
        %3094 = vmatpush1.xpose.msra.mxu0 0.0
        %3095 = vmatprep.subr.mxu0 0.0
        %3096 = vmatpush1.xpose.msra.mxu0 0.0
        %3097 = vmatprep.subr.mxu0 0.0
        %3098 = vmatpush1.xpose.msra.mxu0 0.0
        %3099 = vmatprep.subr.mxu0 0.0
        %3100 = vmatpush1.xpose.msra.mxu0 0.0
        %3101 = vmatprep.subr.mxu0 0.0
        %3102 = vmatpush1.xpose.msra.mxu0 0.0
        %3103 = vmatprep.subr.mxu0 0.0
        %3104 = vmatpush1.xpose.msra.mxu0 0.0
        %3105 = vmatprep.subr.mxu0 0.0
        %3106 = vmatpush1.xpose.msra.mxu0 0.0
        %3107 = vmatprep.subr.mxu0 0.0
        %3108 = vmatpush1.xpose.msra.mxu0 0.0
        %3109 = vmatprep.subr.mxu0 0.0
        %3110 = vmatpush1.xpose.msra.mxu0 0.0
        %3111 = vmatprep.subr.mxu0 0.0
        %3112 = vmatpush1.xpose.msra.mxu0 0.0
        %3113 = vmatprep.subr.mxu0 0.0
        %3114 = vmatpush1.xpose.msra.mxu0 0.0
        %3115 = vmatprep.subr.mxu0 0.0
        %3116 = vmatpush1.xpose.msra.mxu0 0.0
        %3117 = vmatprep.mubr.f32.mxu0 0.0
        %v3118 = vand.u32 %v2784, 4294901760
        %v3119 = vsub.f32 %v2784, %v3118
        %v3120 = vand.u32 %v3119, 4294901760
        %3121 = vmatmul.mubr.f32.gmra.mrb[0].mxu0 %v3120
        %v3122 = vpop.f32.mrb[0].mxu0
        %v3123 = vadd.f32 %v3041, %v3122
        %v3124 = vpop.f32.mrb[0].mxu0
        %3125 = vmatprep.mubr.f32.mxu0 0.0
        %v3126 = vand.u32 %v2786, 4294901760
        %v3127 = vsub.f32 %v2786, %v3126
        %v3128 = vand.u32 %v3127, 4294901760
        %3129 = vmatmul.mubr.f32.gmra.mrb[0].mxu0 %v3128
        %v3130 = vpop.f32.mrb[0].mxu0
        %v3131 = vadd.f32 %v3048, %v3130
        %v3132 = vpop.f32.mrb[0].mxu0
        %3133 = vdwg.mxu0
        %3134 = vmatprep.subr.mxu0 0.0
        %v3135 = vand.u32 %v2789, 4294901760
        %v3136 = vsub.f32 %v2789, %v3135
        %v3137 = vand.u32 %v3136, 4294901760
        %3138 = vmatpush1.xpose.msra.mxu0 %v3137
        %3139 = vmatprep.subr.mxu0 0.0
        %v3140 = vand.u32 %v2792, 4294901760
        %v3141 = vsub.f32 %v2792, %v3140
        %v3142 = vand.u32 %v3141, 4294901760
        %3143 = vmatpush1.xpose.msra.mxu0 %v3142
        %3144 = vmatprep.subr.mxu0 0.0
        %3145 = vmatpush1.xpose.msra.mxu0 0.0
        %3146 = vmatprep.subr.mxu0 0.0
        %3147 = vmatpush1.xpose.msra.mxu0 0.0
        %3148 = vmatprep.subr.mxu0 0.0
        %3149 = vmatpush1.xpose.msra.mxu0 0.0
        %3150 = vmatprep.subr.mxu0 0.0
        %3151 = vmatpush1.xpose.msra.mxu0 0.0
        %3152 = vmatprep.subr.mxu0 0.0
        %3153 = vmatpush1.xpose.msra.mxu0 0.0
        %3154 = vmatprep.subr.mxu0 0.0
        %3155 = vmatpush1.xpose.msra.mxu0 0.0
        %3156 = vmatprep.subr.mxu0 0.0
        %3157 = vmatpush1.xpose.msra.mxu0 0.0
        %3158 = vmatprep.subr.mxu0 0.0
        %3159 = vmatpush1.xpose.msra.mxu0 0.0
        %3160 = vmatprep.subr.mxu0 0.0
        %3161 = vmatpush1.xpose.msra.mxu0 0.0
        %3162 = vmatprep.subr.mxu0 0.0
        %3163 = vmatpush1.xpose.msra.mxu0 0.0
        %3164 = vmatprep.subr.mxu0 0.0
        %3165 = vmatpush1.xpose.msra.mxu0 0.0
        %3166 = vmatprep.subr.mxu0 0.0
        %3167 = vmatpush1.xpose.msra.mxu0 0.0
        %3168 = vmatprep.subr.mxu0 0.0
        %3169 = vmatpush1.xpose.msra.mxu0 0.0
        %3170 = vmatprep.subr.mxu0 0.0
        %3171 = vmatpush1.xpose.msra.mxu0 0.0
        %3172 = vmatprep.subr.mxu0 0.0
        %3173 = vmatpush1.xpose.msra.mxu0 0.0
        %3174 = vmatprep.subr.mxu0 0.0
        %3175 = vmatpush1.xpose.msra.mxu0 0.0
        %3176 = vmatprep.subr.mxu0 0.0
        %3177 = vmatpush1.xpose.msra.mxu0 0.0
        %3178 = vmatprep.subr.mxu0 0.0
        %3179 = vmatpush1.xpose.msra.mxu0 0.0
        %3180 = vmatprep.subr.mxu0 0.0
        %3181 = vmatpush1.xpose.msra.mxu0 0.0
        %3182 = vmatprep.subr.mxu0 0.0
        %3183 = vmatpush1.xpose.msra.mxu0 0.0
        %3184 = vmatprep.subr.mxu0 0.0
        %3185 = vmatpush1.xpose.msra.mxu0 0.0
        %3186 = vmatprep.subr.mxu0 0.0
        %3187 = vmatpush1.xpose.msra.mxu0 0.0
        %3188 = vmatprep.subr.mxu0 0.0
        %3189 = vmatpush1.xpose.msra.mxu0 0.0
        %3190 = vmatprep.subr.mxu0 0.0
        %3191 = vmatpush1.xpose.msra.mxu0 0.0
        %3192 = vmatprep.subr.mxu0 0.0
        %3193 = vmatpush1.xpose.msra.mxu0 0.0
        %3194 = vmatprep.subr.mxu0 0.0
        %3195 = vmatpush1.xpose.msra.mxu0 0.0
        %3196 = vmatprep.subr.mxu0 0.0
        %3197 = vmatpush1.xpose.msra.mxu0 0.0
        %3198 = vmatprep.subr.mxu0 0.0
        %3199 = vmatpush1.xpose.msra.mxu0 0.0
        %3200 = vmatprep.subr.mxu0 0.0
        %3201 = vmatpush1.xpose.msra.mxu0 0.0
        %3202 = vmatprep.subr.mxu0 0.0
        %3203 = vmatpush1.xpose.msra.mxu0 0.0
        %3204 = vmatprep.mubr.f32.mxu0 0.0
        %v3205 = vand.u32 %v2784, 4294901760
        %3206 = vmatmul.mubr.f32.gmra.mrb[0].mxu0 %v3205
        %v3207 = vpop.f32.mrb[0].mxu0
        %v3208 = vadd.f32 %v3123, %v3207
        %v3209 = vpop.f32.mrb[0].mxu0
        %3210 = vmatprep.mubr.f32.mxu0 0.0
        %v3211 = vand.u32 %v2786, 4294901760
        %3212 = vmatmul.mubr.f32.gmra.mrb[0].mxu0 %v3211
        %v3213 = vpop.f32.mrb[0].mxu0
        %v3214 = vadd.f32 %v3131, %v3213
        %v3215 = vpop.f32.mrb[0].mxu0
        %3216 = vdwg.mxu0
        %3217 = vmatprep.subr.mxu0 0.0
        %v3218 = vand.u32 %v2789, 4294901760
        %3219 = vmatpush1.xpose.msra.mxu0 %v3218
        %3220 = vmatprep.subr.mxu0 0.0
        %v3221 = vand.u32 %v2792, 4294901760
        %3222 = vmatpush1.xpose.msra.mxu0 %v3221
        %3223 = vmatprep.subr.mxu0 0.0
        %3224 = vmatpush1.xpose.msra.mxu0 0.0
        %3225 = vmatprep.subr.mxu0 0.0
        %3226 = vmatpush1.xpose.msra.mxu0 0.0
        %3227 = vmatprep.subr.mxu0 0.0
        %3228 = vmatpush1.xpose.msra.mxu0 0.0
        %3229 = vmatprep.subr.mxu0 0.0
        %3230 = vmatpush1.xpose.msra.mxu0 0.0
        %3231 = vmatprep.subr.mxu0 0.0
        %3232 = vmatpush1.xpose.msra.mxu0 0.0
        %3233 = vmatprep.subr.mxu0 0.0
        %3234 = vmatpush1.xpose.msra.mxu0 0.0
        %3235 = vmatprep.subr.mxu0 0.0
        %3236 = vmatpush1.xpose.msra.mxu0 0.0
        %3237 = vmatprep.subr.mxu0 0.0
        %3238 = vmatpush1.xpose.msra.mxu0 0.0
        %3239 = vmatprep.subr.mxu0 0.0
        %3240 = vmatpush1.xpose.msra.mxu0 0.0
        %3241 = vmatprep.subr.mxu0 0.0
        %3242 = vmatpush1.xpose.msra.mxu0 0.0
        %3243 = vmatprep.subr.mxu0 0.0
        %3244 = vmatpush1.xpose.msra.mxu0 0.0
        %3245 = vmatprep.subr.mxu0 0.0
        %3246 = vmatpush1.xpose.msra.mxu0 0.0
        %3247 = vmatprep.subr.mxu0 0.0
        %3248 = vmatpush1.xpose.msra.mxu0 0.0
        %3249 = vmatprep.subr.mxu0 0.0
        %3250 = vmatpush1.xpose.msra.mxu0 0.0
        %3251 = vmatprep.subr.mxu0 0.0
        %3252 = vmatpush1.xpose.msra.mxu0 0.0
        %3253 = vmatprep.subr.mxu0 0.0
        %3254 = vmatpush1.xpose.msra.mxu0 0.0
        %3255 = vmatprep.subr.mxu0 0.0
        %3256 = vmatpush1.xpose.msra.mxu0 0.0
        %3257 = vmatprep.subr.mxu0 0.0
        %3258 = vmatpush1.xpose.msra.mxu0 0.0
        %3259 = vmatprep.subr.mxu0 0.0
        %3260 = vmatpush1.xpose.msra.mxu0 0.0
        %3261 = vmatprep.subr.mxu0 0.0
        %3262 = vmatpush1.xpose.msra.mxu0 0.0
        %3263 = vmatprep.subr.mxu0 0.0
        %3264 = vmatpush1.xpose.msra.mxu0 0.0
        %3265 = vmatprep.subr.mxu0 0.0
        %3266 = vmatpush1.xpose.msra.mxu0 0.0
        %3267 = vmatprep.subr.mxu0 0.0
        %3268 = vmatpush1.xpose.msra.mxu0 0.0
        %3269 = vmatprep.subr.mxu0 0.0
        %3270 = vmatpush1.xpose.msra.mxu0 0.0
        %3271 = vmatprep.subr.mxu0 0.0
        %3272 = vmatpush1.xpose.msra.mxu0 0.0
        %3273 = vmatprep.subr.mxu0 0.0
        %3274 = vmatpush1.xpose.msra.mxu0 0.0
        %3275 = vmatprep.subr.mxu0 0.0
        %3276 = vmatpush1.xpose.msra.mxu0 0.0
        %3277 = vmatprep.subr.mxu0 0.0
        %3278 = vmatpush1.xpose.msra.mxu0 0.0
        %3279 = vmatprep.subr.mxu0 0.0
        %3280 = vmatpush1.xpose.msra.mxu0 0.0
        %3281 = vmatprep.subr.mxu0 0.0
        %3282 = vmatpush1.xpose.msra.mxu0 0.0
        %3283 = vmatprep.mubr.f32.mxu0 0.0
        %v3284 = vand.u32 %v2784, 4294901760
        %3285 = vmatmul.mubr.f32.gmra.mrb[0].mxu0 %v3284
        %v3286 = vpop.f32.mrb[0].mxu0
        %v3287 = vadd.f32 %v3208, %v3286
        %v3288 = vpop.f32.mrb[0].mxu0
        %3289 = vmatprep.mubr.f32.mxu0 0.0
        %v3290 = vand.u32 %v2786, 4294901760
        %3291 = vmatmul.mubr.f32.gmra.mrb[0].mxu0 %v3290
        %v3292 = vpop.f32.mrb[0].mxu0
        %v3293 = vadd.f32 %v3214, %v3292
        %v3294 = vpop.f32.mrb[0].mxu0
        %3295 = vdwg.mxu0
        %3296 = vrot.lane.b32.xlu0 %v782, 80
        %v3297 = vpop.permute.xlu0 %3296
        %3298 = vrot.lane.b32.xlu0 %v783, 80
        %v3299 = vpop.permute.xlu0 %3298
        %v3302 = vsel %vm269, %v3297, 0.0
        %3303 = vadd.xlane.f32.xlu0 %v3302
        %v3304 = vpop.xlane.xlu0 %3303
        %v3305 = vsel %vm269, %v3299, 0.0
        %3306 = vadd.xlane.f32.xlu0 %v3305
        %v3307 = vpop.xlane.xlu0 %3306
        %v3308 = vmul.f32 %v3287, 2.0
        %v3309 = vmul.f32 %v3293, 2.0
        %v3310 = vsub.f32 %v3304, %v3308
        %v3311 = vsub.f32 %v3307, %v3309
        %v3312 = vmul.f32 %v2778, %v2778
        %v3313 = vmul.f32 %v2779, %v2779
        %v3314 = vsel %vm269, %v3312, 0.0
        %3315 = vadd.xlane.f32.xlu0 %v3314
        %v3316 = vpop.xlane.xlu0 %3315
        %v3317 = vsel %vm269, %v3313, 0.0
        %3318 = vadd.xlane.f32.xlu0 %v3317
        %v3319 = vpop.xlane.xlu0 %3318
        %v3322 = vlaneseq
        %v3323 = vshrl.u32 %v3322, 7
        %v3324 = vsub.s32 %v813, %v3323
        %v3325 = vrot.slane %v3316, %v3324
        %v3326 = vlaneseq
        %v3327 = vshrl.u32 %v3326, 7
        %v3328 = vsub.s32 %v818, %v3327
        %v3329 = vrot.slane %v3319, %v3328
        %v3330 = vsel %vm823, %v3329, %v3325
        %v3331 = vsel %vm825, %v3330, %v3330
        %v3332 = vsel %vm827, %v3330, %v3331
        %v3333 = vsel %vm829, %v3330, %v3332
        %v3334 = vsel %vm831, %v3330, %v3333
        %v3335 = vsel %vm833, %v3330, %v3334
        %v3336 = vsel %vm835, %v3330, %v3335
        %v3338 = vadd.f32 %v3310, %v3336
        %v3339 = vadd.f32 %v3311, %v3336
        %v3340 = vsel %vm840, %v3338, inf
        %3341 = vmin.xlane.f32.xlu0 %v3340
        %v3342 = vpop.xlane.xlu0 %3341
        %v3343 = vsel %vm840, %v3339, inf
        %3344 = vmin.xlane.f32.xlu0 %v3343
        %v3345 = vpop.xlane.xlu0 %3344
        %vm3346 = vcmp.le.f32.partialorder %v3338, %v3342
        %vm3347 = vcmp.le.f32.partialorder %v3339, %v3345
        %v3348 = vsel %vm3346, %v813, 16
        %v3349 = vsel %vm3347, %v813, 16
        %v3350 = vsel %vm840, %v3348, 2147483647
        %v3351 = vand.u32 %v3350, 65535
        %v3352 = vshra.s32 %v3350, 16
        %v3353 = vcvt.s32.f32 %v3351
        %v3354 = vcvt.s32.f32 %v3352
        %3355 = vmin.xlane.f32.xlu0 %v3354
        %v3356 = vpop.xlane.xlu0 %3355
        %vm3357 = vcmp.eq.f32.partialorder %v3354, %v3356
        %v3358 = vsel %vm3357, %v3353, inf
        %3359 = vmin.xlane.f32.xlu0 %v3358
        %v3360 = vpop.xlane.xlu0 %3359
        %v3361 = vcvt.f32.s32 %v3360
        %v3362 = vcvt.f32.s32 %v3356
        %v3363 = vshll.u32 %v3362, 16
        %v3364 = vadd.s32 %v3363, %v3361
        %v3365 = vsel %vm840, %v3349, 2147483647
        %v3366 = vand.u32 %v3365, 65535
        %v3367 = vshra.s32 %v3365, 16
        %v3368 = vcvt.s32.f32 %v3366
        %v3369 = vcvt.s32.f32 %v3367
        %3370 = vmin.xlane.f32.xlu0 %v3369
        %v3371 = vpop.xlane.xlu0 %3370
        %vm3372 = vcmp.eq.f32.partialorder %v3369, %v3371
        %v3373 = vsel %vm3372, %v3368, inf
        %3374 = vmin.xlane.f32.xlu0 %v3373
        %v3375 = vpop.xlane.xlu0 %3374
        %v3376 = vcvt.f32.s32 %v3375
        %v3377 = vcvt.f32.s32 %v3371
        %v3378 = vshll.u32 %v3377, 16
        %v3379 = vadd.s32 %v3378, %v3376
        %vm3380 = vcmp.eq.s32.totalorder %v813, %v3364
        %vm3381 = vcmp.eq.s32.totalorder %v813, %v3379
        %v3382 = vsel %vm3380, 1, 0
        %v3383 = vsel %vm3381, 1, 0
        %v3384 = vcvt.s32.f32 %v3382
        %v3385 = vcvt.s32.f32 %v3383
        %v3387 = vsel %vm840, %v3384, 0
        %v3390 = vsel %vm840, %v3385, 0
        %3392 = vmatprep.subr.mxu0 0.0
        %v3393 = vand.u32 %v2778, 4294901760
        %3394 = vmatpush1.msra.mxu0 %v3393
        %3395 = vmatprep.subr.mxu0 0.0
        %v3396 = vand.u32 %v2779, 4294901760
        %3397 = vmatpush1.msra.mxu0 %v3396
        %3398 = vmatprep.subr.mxu0 0.0
        %3399 = vmatpush1.msra.mxu0 0.0
        %3400 = vmatprep.subr.mxu0 0.0
        %3401 = vmatpush1.msra.mxu0 0.0
        %3402 = vmatprep.subr.mxu0 0.0
        %3403 = vmatpush1.msra.mxu0 0.0
        %3404 = vmatprep.subr.mxu0 0.0
        %3405 = vmatpush1.msra.mxu0 0.0
        %3406 = vmatprep.subr.mxu0 0.0
        %3407 = vmatpush1.msra.mxu0 0.0
        %3408 = vmatprep.subr.mxu0 0.0
        %3409 = vmatpush1.msra.mxu0 0.0
        %3410 = vmatprep.subr.mxu0 0.0
        %3411 = vmatpush1.msra.mxu0 0.0
        %3412 = vmatprep.subr.mxu0 0.0
        %3413 = vmatpush1.msra.mxu0 0.0
        %3414 = vmatprep.subr.mxu0 0.0
        %3415 = vmatpush1.msra.mxu0 0.0
        %3416 = vmatprep.subr.mxu0 0.0
        %3417 = vmatpush1.msra.mxu0 0.0
        %3418 = vmatprep.subr.mxu0 0.0
        %3419 = vmatpush1.msra.mxu0 0.0
        %3420 = vmatprep.subr.mxu0 0.0
        %3421 = vmatpush1.msra.mxu0 0.0
        %3422 = vmatprep.subr.mxu0 0.0
        %3423 = vmatpush1.msra.mxu0 0.0
        %3424 = vmatprep.subr.mxu0 0.0
        %3425 = vmatpush1.msra.mxu0 0.0
        %3426 = vmatprep.subr.mxu0 0.0
        %3427 = vmatpush1.msra.mxu0 0.0
        %3428 = vmatprep.subr.mxu0 0.0
        %3429 = vmatpush1.msra.mxu0 0.0
        %3430 = vmatprep.subr.mxu0 0.0
        %3431 = vmatpush1.msra.mxu0 0.0
        %3432 = vmatprep.subr.mxu0 0.0
        %3433 = vmatpush1.msra.mxu0 0.0
        %3434 = vmatprep.subr.mxu0 0.0
        %3435 = vmatpush1.msra.mxu0 0.0
        %3436 = vmatprep.subr.mxu0 0.0
        %3437 = vmatpush1.msra.mxu0 0.0
        %3438 = vmatprep.subr.mxu0 0.0
        %3439 = vmatpush1.msra.mxu0 0.0
        %3440 = vmatprep.subr.mxu0 0.0
        %3441 = vmatpush1.msra.mxu0 0.0
        %3442 = vmatprep.subr.mxu0 0.0
        %3443 = vmatpush1.msra.mxu0 0.0
        %3444 = vmatprep.subr.mxu0 0.0
        %3445 = vmatpush1.msra.mxu0 0.0
        %3446 = vmatprep.subr.mxu0 0.0
        %3447 = vmatpush1.msra.mxu0 0.0
        %3448 = vmatprep.subr.mxu0 0.0
        %3449 = vmatpush1.msra.mxu0 0.0
        %3450 = vmatprep.subr.mxu0 0.0
        %3451 = vmatpush1.msra.mxu0 0.0
        %3452 = vmatprep.subr.mxu0 0.0
        %3453 = vmatpush1.msra.mxu0 0.0
        %3454 = vmatprep.subr.mxu0 0.0
        %3455 = vmatpush1.msra.mxu0 0.0
        %3456 = vmatprep.subr.mxu0 0.0
        %3457 = vmatpush1.msra.mxu0 0.0
        %3458 = vmatprep.mubr.f32.mxu0 0.0
        %v3459 = vand.u32 %v3387, 4294901760
        %v3460 = vsub.f32 %v3387, %v3459
        %v3461 = vand.u32 %v3460, 4294901760
        %v3462 = vsub.f32 %v3460, %v3461
        %v3463 = vand.u32 %v3462, 4294901760
        %3464 = vmatmul.mubr.f32.gmra.mrb[0].mxu0 %v3463
        %v3465 = vpop.f32.mrb[0].mxu0
        %v3466 = vadd.f32 0.0, %v3465
        %v3467 = vpop.f32.mrb[0].mxu0
        %3468 = vmatprep.mubr.f32.mxu0 0.0
        %v3469 = vand.u32 %v3390, 4294901760
        %v3470 = vsub.f32 %v3390, %v3469
        %v3471 = vand.u32 %v3470, 4294901760
        %v3472 = vsub.f32 %v3470, %v3471
        %v3473 = vand.u32 %v3472, 4294901760
        %3474 = vmatmul.mubr.f32.gmra.mrb[0].mxu0 %v3473
        %v3475 = vpop.f32.mrb[0].mxu0
        %v3476 = vadd.f32 0.0, %v3475
        %v3477 = vpop.f32.mrb[0].mxu0
        %3478 = vdwg.mxu0
        %3479 = vmatprep.subr.mxu0 0.0
        %v3480 = vand.u32 %v2778, 4294901760
        %v3481 = vsub.f32 %v2778, %v3480
        %v3482 = vand.u32 %v3481, 4294901760
        %v3483 = vsub.f32 %v3481, %v3482
        %v3484 = vand.u32 %v3483, 4294901760
        %3485 = vmatpush1.msra.mxu0 %v3484
        %3486 = vmatprep.subr.mxu0 0.0
        %v3487 = vand.u32 %v2779, 4294901760
        %v3488 = vsub.f32 %v2779, %v3487
        %v3489 = vand.u32 %v3488, 4294901760
        %v3490 = vsub.f32 %v3488, %v3489
        %v3491 = vand.u32 %v3490, 4294901760
        %3492 = vmatpush1.msra.mxu0 %v3491
        %3493 = vmatprep.subr.mxu0 0.0
        %3494 = vmatpush1.msra.mxu0 0.0
        %3495 = vmatprep.subr.mxu0 0.0
        %3496 = vmatpush1.msra.mxu0 0.0
        %3497 = vmatprep.subr.mxu0 0.0
        %3498 = vmatpush1.msra.mxu0 0.0
        %3499 = vmatprep.subr.mxu0 0.0
        %3500 = vmatpush1.msra.mxu0 0.0
        %3501 = vmatprep.subr.mxu0 0.0
        %3502 = vmatpush1.msra.mxu0 0.0
        %3503 = vmatprep.subr.mxu0 0.0
        %3504 = vmatpush1.msra.mxu0 0.0
        %3505 = vmatprep.subr.mxu0 0.0
        %3506 = vmatpush1.msra.mxu0 0.0
        %3507 = vmatprep.subr.mxu0 0.0
        %3508 = vmatpush1.msra.mxu0 0.0
        %3509 = vmatprep.subr.mxu0 0.0
        %3510 = vmatpush1.msra.mxu0 0.0
        %3511 = vmatprep.subr.mxu0 0.0
        %3512 = vmatpush1.msra.mxu0 0.0
        %3513 = vmatprep.subr.mxu0 0.0
        %3514 = vmatpush1.msra.mxu0 0.0
        %3515 = vmatprep.subr.mxu0 0.0
        %3516 = vmatpush1.msra.mxu0 0.0
        %3517 = vmatprep.subr.mxu0 0.0
        %3518 = vmatpush1.msra.mxu0 0.0
        %3519 = vmatprep.subr.mxu0 0.0
        %3520 = vmatpush1.msra.mxu0 0.0
        %3521 = vmatprep.subr.mxu0 0.0
        %3522 = vmatpush1.msra.mxu0 0.0
        %3523 = vmatprep.subr.mxu0 0.0
        %3524 = vmatpush1.msra.mxu0 0.0
        %3525 = vmatprep.subr.mxu0 0.0
        %3526 = vmatpush1.msra.mxu0 0.0
        %3527 = vmatprep.subr.mxu0 0.0
        %3528 = vmatpush1.msra.mxu0 0.0
        %3529 = vmatprep.subr.mxu0 0.0
        %3530 = vmatpush1.msra.mxu0 0.0
        %3531 = vmatprep.subr.mxu0 0.0
        %3532 = vmatpush1.msra.mxu0 0.0
        %3533 = vmatprep.subr.mxu0 0.0
        %3534 = vmatpush1.msra.mxu0 0.0
        %3535 = vmatprep.subr.mxu0 0.0
        %3536 = vmatpush1.msra.mxu0 0.0
        %3537 = vmatprep.subr.mxu0 0.0
        %3538 = vmatpush1.msra.mxu0 0.0
        %3539 = vmatprep.subr.mxu0 0.0
        %3540 = vmatpush1.msra.mxu0 0.0
        %3541 = vmatprep.subr.mxu0 0.0
        %3542 = vmatpush1.msra.mxu0 0.0
        %3543 = vmatprep.subr.mxu0 0.0
        %3544 = vmatpush1.msra.mxu0 0.0
        %3545 = vmatprep.subr.mxu0 0.0
        %3546 = vmatpush1.msra.mxu0 0.0
        %3547 = vmatprep.subr.mxu0 0.0
        %3548 = vmatpush1.msra.mxu0 0.0
        %3549 = vmatprep.subr.mxu0 0.0
        %3550 = vmatpush1.msra.mxu0 0.0
        %3551 = vmatprep.subr.mxu0 0.0
        %3552 = vmatpush1.msra.mxu0 0.0
        %3553 = vmatprep.mubr.f32.mxu0 0.0
        %v3554 = vand.u32 %v3387, 4294901760
        %3555 = vmatmul.mubr.f32.gmra.mrb[0].mxu0 %v3554
        %v3556 = vpop.f32.mrb[0].mxu0
        %v3557 = vadd.f32 %v3466, %v3556
        %v3558 = vpop.f32.mrb[0].mxu0
        %3559 = vmatprep.mubr.f32.mxu0 0.0
        %v3560 = vand.u32 %v3390, 4294901760
        %3561 = vmatmul.mubr.f32.gmra.mrb[0].mxu0 %v3560
        %v3562 = vpop.f32.mrb[0].mxu0
        %v3563 = vadd.f32 %v3476, %v3562
        %v3564 = vpop.f32.mrb[0].mxu0
        %3565 = vdwg.mxu0
        %3566 = vmatprep.subr.mxu0 0.0
        %v3567 = vand.u32 %v2778, 4294901760
        %v3568 = vsub.f32 %v2778, %v3567
        %3569 = vmatpush1.msra.mxu0 %v3568
        %3570 = vmatprep.subr.mxu0 0.0
        %v3571 = vand.u32 %v2779, 4294901760
        %v3572 = vsub.f32 %v2779, %v3571
        %3573 = vmatpush1.msra.mxu0 %v3572
        %3574 = vmatprep.subr.mxu0 0.0
        %3575 = vmatpush1.msra.mxu0 0.0
        %3576 = vmatprep.subr.mxu0 0.0
        %3577 = vmatpush1.msra.mxu0 0.0
        %3578 = vmatprep.subr.mxu0 0.0
        %3579 = vmatpush1.msra.mxu0 0.0
        %3580 = vmatprep.subr.mxu0 0.0
        %3581 = vmatpush1.msra.mxu0 0.0
        %3582 = vmatprep.subr.mxu0 0.0
        %3583 = vmatpush1.msra.mxu0 0.0
        %3584 = vmatprep.subr.mxu0 0.0
        %3585 = vmatpush1.msra.mxu0 0.0
        %3586 = vmatprep.subr.mxu0 0.0
        %3587 = vmatpush1.msra.mxu0 0.0
        %3588 = vmatprep.subr.mxu0 0.0
        %3589 = vmatpush1.msra.mxu0 0.0
        %3590 = vmatprep.subr.mxu0 0.0
        %3591 = vmatpush1.msra.mxu0 0.0
        %3592 = vmatprep.subr.mxu0 0.0
        %3593 = vmatpush1.msra.mxu0 0.0
        %3594 = vmatprep.subr.mxu0 0.0
        %3595 = vmatpush1.msra.mxu0 0.0
        %3596 = vmatprep.subr.mxu0 0.0
        %3597 = vmatpush1.msra.mxu0 0.0
        %3598 = vmatprep.subr.mxu0 0.0
        %3599 = vmatpush1.msra.mxu0 0.0
        %3600 = vmatprep.subr.mxu0 0.0
        %3601 = vmatpush1.msra.mxu0 0.0
        %3602 = vmatprep.subr.mxu0 0.0
        %3603 = vmatpush1.msra.mxu0 0.0
        %3604 = vmatprep.subr.mxu0 0.0
        %3605 = vmatpush1.msra.mxu0 0.0
        %3606 = vmatprep.subr.mxu0 0.0
        %3607 = vmatpush1.msra.mxu0 0.0
        %3608 = vmatprep.subr.mxu0 0.0
        %3609 = vmatpush1.msra.mxu0 0.0
        %3610 = vmatprep.subr.mxu0 0.0
        %3611 = vmatpush1.msra.mxu0 0.0
        %3612 = vmatprep.subr.mxu0 0.0
        %3613 = vmatpush1.msra.mxu0 0.0
        %3614 = vmatprep.subr.mxu0 0.0
        %3615 = vmatpush1.msra.mxu0 0.0
        %3616 = vmatprep.subr.mxu0 0.0
        %3617 = vmatpush1.msra.mxu0 0.0
        %3618 = vmatprep.subr.mxu0 0.0
        %3619 = vmatpush1.msra.mxu0 0.0
        %3620 = vmatprep.subr.mxu0 0.0
        %3621 = vmatpush1.msra.mxu0 0.0
        %3622 = vmatprep.subr.mxu0 0.0
        %3623 = vmatpush1.msra.mxu0 0.0
        %3624 = vmatprep.subr.mxu0 0.0
        %3625 = vmatpush1.msra.mxu0 0.0
        %3626 = vmatprep.subr.mxu0 0.0
        %3627 = vmatpush1.msra.mxu0 0.0
        %3628 = vmatprep.subr.mxu0 0.0
        %3629 = vmatpush1.msra.mxu0 0.0
        %3630 = vmatprep.subr.mxu0 0.0
        %3631 = vmatpush1.msra.mxu0 0.0
        %3632 = vmatprep.subr.mxu0 0.0
        %3633 = vmatpush1.msra.mxu0 0.0
        %3634 = vmatprep.mubr.f32.mxu0 0.0
        %v3635 = vand.u32 %v3387, 4294901760
        %v3636 = vsub.f32 %v3387, %v3635
        %3637 = vmatmul.mubr.f32.gmra.mrb[0].mxu0 %v3636
        %v3638 = vpop.f32.mrb[0].mxu0
        %v3639 = vadd.f32 %v3557, %v3638
        %v3640 = vpop.f32.mrb[0].mxu0
        %3641 = vmatprep.mubr.f32.mxu0 0.0
        %v3642 = vand.u32 %v3390, 4294901760
        %v3643 = vsub.f32 %v3390, %v3642
        %3644 = vmatmul.mubr.f32.gmra.mrb[0].mxu0 %v3643
        %v3645 = vpop.f32.mrb[0].mxu0
        %v3646 = vadd.f32 %v3563, %v3645
        %v3647 = vpop.f32.mrb[0].mxu0
        %3648 = vdwg.mxu0
        %3649 = vmatprep.subr.mxu0 0.0
        %v3650 = vand.u32 %v2778, 4294901760
        %3651 = vmatpush1.msra.mxu0 %v3650
        %3652 = vmatprep.subr.mxu0 0.0
        %v3653 = vand.u32 %v2779, 4294901760
        %3654 = vmatpush1.msra.mxu0 %v3653
        %3655 = vmatprep.subr.mxu0 0.0
        %3656 = vmatpush1.msra.mxu0 0.0
        %3657 = vmatprep.subr.mxu0 0.0
        %3658 = vmatpush1.msra.mxu0 0.0
        %3659 = vmatprep.subr.mxu0 0.0
        %3660 = vmatpush1.msra.mxu0 0.0
        %3661 = vmatprep.subr.mxu0 0.0
        %3662 = vmatpush1.msra.mxu0 0.0
        %3663 = vmatprep.subr.mxu0 0.0
        %3664 = vmatpush1.msra.mxu0 0.0
        %3665 = vmatprep.subr.mxu0 0.0
        %3666 = vmatpush1.msra.mxu0 0.0
        %3667 = vmatprep.subr.mxu0 0.0
        %3668 = vmatpush1.msra.mxu0 0.0
        %3669 = vmatprep.subr.mxu0 0.0
        %3670 = vmatpush1.msra.mxu0 0.0
        %3671 = vmatprep.subr.mxu0 0.0
        %3672 = vmatpush1.msra.mxu0 0.0
        %3673 = vmatprep.subr.mxu0 0.0
        %3674 = vmatpush1.msra.mxu0 0.0
        %3675 = vmatprep.subr.mxu0 0.0
        %3676 = vmatpush1.msra.mxu0 0.0
        %3677 = vmatprep.subr.mxu0 0.0
        %3678 = vmatpush1.msra.mxu0 0.0
        %3679 = vmatprep.subr.mxu0 0.0
        %3680 = vmatpush1.msra.mxu0 0.0
        %3681 = vmatprep.subr.mxu0 0.0
        %3682 = vmatpush1.msra.mxu0 0.0
        %3683 = vmatprep.subr.mxu0 0.0
        %3684 = vmatpush1.msra.mxu0 0.0
        %3685 = vmatprep.subr.mxu0 0.0
        %3686 = vmatpush1.msra.mxu0 0.0
        %3687 = vmatprep.subr.mxu0 0.0
        %3688 = vmatpush1.msra.mxu0 0.0
        %3689 = vmatprep.subr.mxu0 0.0
        %3690 = vmatpush1.msra.mxu0 0.0
        %3691 = vmatprep.subr.mxu0 0.0
        %3692 = vmatpush1.msra.mxu0 0.0
        %3693 = vmatprep.subr.mxu0 0.0
        %3694 = vmatpush1.msra.mxu0 0.0
        %3695 = vmatprep.subr.mxu0 0.0
        %3696 = vmatpush1.msra.mxu0 0.0
        %3697 = vmatprep.subr.mxu0 0.0
        %3698 = vmatpush1.msra.mxu0 0.0
        %3699 = vmatprep.subr.mxu0 0.0
        %3700 = vmatpush1.msra.mxu0 0.0
        %3701 = vmatprep.subr.mxu0 0.0
        %3702 = vmatpush1.msra.mxu0 0.0
        %3703 = vmatprep.subr.mxu0 0.0
        %3704 = vmatpush1.msra.mxu0 0.0
        %3705 = vmatprep.subr.mxu0 0.0
        %3706 = vmatpush1.msra.mxu0 0.0
        %3707 = vmatprep.subr.mxu0 0.0
        %3708 = vmatpush1.msra.mxu0 0.0
        %3709 = vmatprep.subr.mxu0 0.0
        %3710 = vmatpush1.msra.mxu0 0.0
        %3711 = vmatprep.subr.mxu0 0.0
        %3712 = vmatpush1.msra.mxu0 0.0
        %3713 = vmatprep.subr.mxu0 0.0
        %3714 = vmatpush1.msra.mxu0 0.0
        %3715 = vmatprep.mubr.f32.mxu0 0.0
        %v3716 = vand.u32 %v3387, 4294901760
        %v3717 = vsub.f32 %v3387, %v3716
        %v3718 = vand.u32 %v3717, 4294901760
        %3719 = vmatmul.mubr.f32.gmra.mrb[0].mxu0 %v3718
        %v3720 = vpop.f32.mrb[0].mxu0
        %v3721 = vadd.f32 %v3639, %v3720
        %v3722 = vpop.f32.mrb[0].mxu0
        %3723 = vmatprep.mubr.f32.mxu0 0.0
        %v3724 = vand.u32 %v3390, 4294901760
        %v3725 = vsub.f32 %v3390, %v3724
        %v3726 = vand.u32 %v3725, 4294901760
        %3727 = vmatmul.mubr.f32.gmra.mrb[0].mxu0 %v3726
        %v3728 = vpop.f32.mrb[0].mxu0
        %v3729 = vadd.f32 %v3646, %v3728
        %v3730 = vpop.f32.mrb[0].mxu0
        %3731 = vdwg.mxu0
        %3732 = vmatprep.subr.mxu0 0.0
        %v3733 = vand.u32 %v2778, 4294901760
        %v3734 = vsub.f32 %v2778, %v3733
        %v3735 = vand.u32 %v3734, 4294901760
        %3736 = vmatpush1.msra.mxu0 %v3735
        %3737 = vmatprep.subr.mxu0 0.0
        %v3738 = vand.u32 %v2779, 4294901760
        %v3739 = vsub.f32 %v2779, %v3738
        %v3740 = vand.u32 %v3739, 4294901760
        %3741 = vmatpush1.msra.mxu0 %v3740
        %3742 = vmatprep.subr.mxu0 0.0
        %3743 = vmatpush1.msra.mxu0 0.0
        %3744 = vmatprep.subr.mxu0 0.0
        %3745 = vmatpush1.msra.mxu0 0.0
        %3746 = vmatprep.subr.mxu0 0.0
        %3747 = vmatpush1.msra.mxu0 0.0
        %3748 = vmatprep.subr.mxu0 0.0
        %3749 = vmatpush1.msra.mxu0 0.0
        %3750 = vmatprep.subr.mxu0 0.0
        %3751 = vmatpush1.msra.mxu0 0.0
        %3752 = vmatprep.subr.mxu0 0.0
        %3753 = vmatpush1.msra.mxu0 0.0
        %3754 = vmatprep.subr.mxu0 0.0
        %3755 = vmatpush1.msra.mxu0 0.0
        %3756 = vmatprep.subr.mxu0 0.0
        %3757 = vmatpush1.msra.mxu0 0.0
        %3758 = vmatprep.subr.mxu0 0.0
        %3759 = vmatpush1.msra.mxu0 0.0
        %3760 = vmatprep.subr.mxu0 0.0
        %3761 = vmatpush1.msra.mxu0 0.0
        %3762 = vmatprep.subr.mxu0 0.0
        %3763 = vmatpush1.msra.mxu0 0.0
        %3764 = vmatprep.subr.mxu0 0.0
        %3765 = vmatpush1.msra.mxu0 0.0
        %3766 = vmatprep.subr.mxu0 0.0
        %3767 = vmatpush1.msra.mxu0 0.0
        %3768 = vmatprep.subr.mxu0 0.0
        %3769 = vmatpush1.msra.mxu0 0.0
        %3770 = vmatprep.subr.mxu0 0.0
        %3771 = vmatpush1.msra.mxu0 0.0
        %3772 = vmatprep.subr.mxu0 0.0
        %3773 = vmatpush1.msra.mxu0 0.0
        %3774 = vmatprep.subr.mxu0 0.0
        %3775 = vmatpush1.msra.mxu0 0.0
        %3776 = vmatprep.subr.mxu0 0.0
        %3777 = vmatpush1.msra.mxu0 0.0
        %3778 = vmatprep.subr.mxu0 0.0
        %3779 = vmatpush1.msra.mxu0 0.0
        %3780 = vmatprep.subr.mxu0 0.0
        %3781 = vmatpush1.msra.mxu0 0.0
        %3782 = vmatprep.subr.mxu0 0.0
        %3783 = vmatpush1.msra.mxu0 0.0
        %3784 = vmatprep.subr.mxu0 0.0
        %3785 = vmatpush1.msra.mxu0 0.0
        %3786 = vmatprep.subr.mxu0 0.0
        %3787 = vmatpush1.msra.mxu0 0.0
        %3788 = vmatprep.subr.mxu0 0.0
        %3789 = vmatpush1.msra.mxu0 0.0
        %3790 = vmatprep.subr.mxu0 0.0
        %3791 = vmatpush1.msra.mxu0 0.0
        %3792 = vmatprep.subr.mxu0 0.0
        %3793 = vmatpush1.msra.mxu0 0.0
        %3794 = vmatprep.subr.mxu0 0.0
        %3795 = vmatpush1.msra.mxu0 0.0
        %3796 = vmatprep.subr.mxu0 0.0
        %3797 = vmatpush1.msra.mxu0 0.0
        %3798 = vmatprep.subr.mxu0 0.0
        %3799 = vmatpush1.msra.mxu0 0.0
        %3800 = vmatprep.subr.mxu0 0.0
        %3801 = vmatpush1.msra.mxu0 0.0
        %3802 = vmatprep.mubr.f32.mxu0 0.0
        %v3803 = vand.u32 %v3387, 4294901760
        %3804 = vmatmul.mubr.f32.gmra.mrb[0].mxu0 %v3803
        %v3805 = vpop.f32.mrb[0].mxu0
        %v3806 = vadd.f32 %v3721, %v3805
        %v3807 = vpop.f32.mrb[0].mxu0
        %3808 = vmatprep.mubr.f32.mxu0 0.0
        %v3809 = vand.u32 %v3390, 4294901760
        %3810 = vmatmul.mubr.f32.gmra.mrb[0].mxu0 %v3809
        %v3811 = vpop.f32.mrb[0].mxu0
        %v3812 = vadd.f32 %v3729, %v3811
        %v3813 = vpop.f32.mrb[0].mxu0
        %3814 = vdwg.mxu0
        %3815 = vmatprep.subr.mxu0 0.0
        %v3816 = vand.u32 %v2778, 4294901760
        %3817 = vmatpush1.msra.mxu0 %v3816
        %3818 = vmatprep.subr.mxu0 0.0
        %v3819 = vand.u32 %v2779, 4294901760
        %3820 = vmatpush1.msra.mxu0 %v3819
        %3821 = vmatprep.subr.mxu0 0.0
        %3822 = vmatpush1.msra.mxu0 0.0
        %3823 = vmatprep.subr.mxu0 0.0
        %3824 = vmatpush1.msra.mxu0 0.0
        %3825 = vmatprep.subr.mxu0 0.0
        %3826 = vmatpush1.msra.mxu0 0.0
        %3827 = vmatprep.subr.mxu0 0.0
        %3828 = vmatpush1.msra.mxu0 0.0
        %3829 = vmatprep.subr.mxu0 0.0
        %3830 = vmatpush1.msra.mxu0 0.0
        %3831 = vmatprep.subr.mxu0 0.0
        %3832 = vmatpush1.msra.mxu0 0.0
        %3833 = vmatprep.subr.mxu0 0.0
        %3834 = vmatpush1.msra.mxu0 0.0
        %3835 = vmatprep.subr.mxu0 0.0
        %3836 = vmatpush1.msra.mxu0 0.0
        %3837 = vmatprep.subr.mxu0 0.0
        %3838 = vmatpush1.msra.mxu0 0.0
        %3839 = vmatprep.subr.mxu0 0.0
        %3840 = vmatpush1.msra.mxu0 0.0
        %3841 = vmatprep.subr.mxu0 0.0
        %3842 = vmatpush1.msra.mxu0 0.0
        %3843 = vmatprep.subr.mxu0 0.0
        %3844 = vmatpush1.msra.mxu0 0.0
        %3845 = vmatprep.subr.mxu0 0.0
        %3846 = vmatpush1.msra.mxu0 0.0
        %3847 = vmatprep.subr.mxu0 0.0
        %3848 = vmatpush1.msra.mxu0 0.0
        %3849 = vmatprep.subr.mxu0 0.0
        %3850 = vmatpush1.msra.mxu0 0.0
        %3851 = vmatprep.subr.mxu0 0.0
        %3852 = vmatpush1.msra.mxu0 0.0
        %3853 = vmatprep.subr.mxu0 0.0
        %3854 = vmatpush1.msra.mxu0 0.0
        %3855 = vmatprep.subr.mxu0 0.0
        %3856 = vmatpush1.msra.mxu0 0.0
        %3857 = vmatprep.subr.mxu0 0.0
        %3858 = vmatpush1.msra.mxu0 0.0
        %3859 = vmatprep.subr.mxu0 0.0
        %3860 = vmatpush1.msra.mxu0 0.0
        %3861 = vmatprep.subr.mxu0 0.0
        %3862 = vmatpush1.msra.mxu0 0.0
        %3863 = vmatprep.subr.mxu0 0.0
        %3864 = vmatpush1.msra.mxu0 0.0
        %3865 = vmatprep.subr.mxu0 0.0
        %3866 = vmatpush1.msra.mxu0 0.0
        %3867 = vmatprep.subr.mxu0 0.0
        %3868 = vmatpush1.msra.mxu0 0.0
        %3869 = vmatprep.subr.mxu0 0.0
        %3870 = vmatpush1.msra.mxu0 0.0
        %3871 = vmatprep.subr.mxu0 0.0
        %3872 = vmatpush1.msra.mxu0 0.0
        %3873 = vmatprep.subr.mxu0 0.0
        %3874 = vmatpush1.msra.mxu0 0.0
        %3875 = vmatprep.subr.mxu0 0.0
        %3876 = vmatpush1.msra.mxu0 0.0
        %3877 = vmatprep.subr.mxu0 0.0
        %3878 = vmatpush1.msra.mxu0 0.0
        %3879 = vmatprep.subr.mxu0 0.0
        %3880 = vmatpush1.msra.mxu0 0.0
        %3881 = vmatprep.mubr.f32.mxu0 0.0
        %v3882 = vand.u32 %v3387, 4294901760
        %3883 = vmatmul.mubr.f32.gmra.mrb[0].mxu0 %v3882
        %v3884 = vpop.f32.mrb[0].mxu0
        %v3885 = vadd.f32 %v3806, %v3884
        %v3886 = vpop.f32.mrb[0].mxu0
        %3887 = vmatprep.mubr.f32.mxu0 0.0
        %v3888 = vand.u32 %v3390, 4294901760
        %3889 = vmatmul.mubr.f32.gmra.mrb[0].mxu0 %v3888
        %v3890 = vpop.f32.mrb[0].mxu0
        %v3891 = vadd.f32 %v3812, %v3890
        %v3892 = vpop.f32.mrb[0].mxu0
        %3893 = vdwg.mxu0
        %v3894 = vpack.c.bf16 %v3891, %v3885
        %3895 = vrot.lane.b32.xlu0 %v1395, 112
        %v3896 = vpop.permute.xlu0 %3895
        %v3898 = vsel %vm269, %v3896, 0
        %v3901 = vsel %vm269, %v3894, 0
        %3903 = vmatprep.subr.bf16.mxu0 0
        %3904 = vmatpush1.bf16.xpose.msra.mxu0 %v3901
        %3905 = vmatprep.subr.bf16.mxu0 0
        %3906 = vmatpush1.bf16.xpose.msra.mxu0 0
        %3907 = vmatprep.subr.bf16.mxu0 0
        %3908 = vmatpush1.bf16.xpose.msra.mxu0 0
        %3909 = vmatprep.subr.bf16.mxu0 0
        %3910 = vmatpush1.bf16.xpose.msra.mxu0 0
        %3911 = vmatprep.subr.bf16.mxu0 0
        %3912 = vmatpush1.bf16.xpose.msra.mxu0 0
        %3913 = vmatprep.subr.bf16.mxu0 0
        %3914 = vmatpush1.bf16.xpose.msra.mxu0 0
        %3915 = vmatprep.subr.bf16.mxu0 0
        %3916 = vmatpush1.bf16.xpose.msra.mxu0 0
        %3917 = vmatprep.subr.bf16.mxu0 0
        %3918 = vmatpush1.bf16.xpose.msra.mxu0 0
        %3919 = vmatprep.subr.bf16.mxu0 0
        %3920 = vmatpush1.bf16.xpose.msra.mxu0 0
        %3921 = vmatprep.subr.bf16.mxu0 0
        %3922 = vmatpush1.bf16.xpose.msra.mxu0 0
        %3923 = vmatprep.subr.bf16.mxu0 0
        %3924 = vmatpush1.bf16.xpose.msra.mxu0 0
        %3925 = vmatprep.subr.bf16.mxu0 0
        %3926 = vmatpush1.bf16.xpose.msra.mxu0 0
        %3927 = vmatprep.subr.bf16.mxu0 0
        %3928 = vmatpush1.bf16.xpose.msra.mxu0 0
        %3929 = vmatprep.subr.bf16.mxu0 0
        %3930 = vmatpush1.bf16.xpose.msra.mxu0 0
        %3931 = vmatprep.subr.bf16.mxu0 0
        %3932 = vmatpush1.bf16.xpose.msra.mxu0 0
        %3933 = vmatprep.subr.bf16.mxu0 0
        %3934 = vmatpush1.bf16.xpose.msra.mxu0 0
        %3935 = vmatprep.mubr.bf16.mxu0 0
        %3936 = vmatmul.mubr.bf16.gmra.mrb[0].mxu0 %v3898
        %v3937 = vpop.f32.mrb[0].mxu0
        %v3938 = vadd.f32 0.0, %v3937
        %v3939 = vpop.f32.mrb[0].mxu0
        %v3940 = vpop.f32.mrb[0].mxu0
        %v3941 = vadd.f32 0.0, %v3940
        %v3942 = vpop.f32.mrb[0].mxu0
        %3943 = vdwg.mxu0
        %v3944 = vmul.f32 %v3938, 0.35355338
        %v3945 = vmul.f32 %v3941, 0.35355338
        %v3946 = vsel %vm1449, %v3944, -1e+30
        %v3947 = vsel %vm1450, %v3945, -1e+30
        %v3948 = vsel %vm840, %v3946, -inf
        %3949 = vmax.xlane.f32.xlu0 %v3948
        %v3950 = vpop.xlane.xlu0 %3949
        %v3951 = vsel %vm840, %v3947, -inf
        %3952 = vmax.xlane.f32.xlu0 %v3951
        %v3953 = vpop.xlane.xlu0 %3952
        %v3954 = vsub.f32 %v3946, %v3950
        %v3955 = vsub.f32 %v3947, %v3953
        %v3956 = vmul.f32 %v3954, 1.442695
        %v3957 = vpow.pop %v3956
        %v3958 = vmul.f32 %v3955, 1.442695
        %v3959 = vpow.pop %v3958
        %v3960 = vsel %vm840, %v3957, 0.0
        %3961 = vadd.xlane.f32.xlu0 %v3960
        %v3962 = vpop.xlane.xlu0 %3961
        %v3963 = vsel %vm840, %v3959, 0.0
        %3964 = vadd.xlane.f32.xlu0 %v3963
        %v3965 = vpop.xlane.xlu0 %3964
        %v3966 = vrcp.pop %v3962
        %v3967 = vmul.f32 %v3957, %v3966
        %v3968 = vrcp.pop %v3965
        %v3969 = vmul.f32 %v3959, %v3968
        %v3970 = vpack.c.bf16 %v3969, %v3967
        %3971 = vrot.lane.b32.xlu0 %v1395, 48
        %v3972 = vpop.permute.xlu0 %3971
        %v3975 = vsel %vm840, %v3970, 0
        %3977 = vmatprep.subr.bf16.mxu0 0
        %3978 = vmatpush1.bf16.msra.mxu0 %v3972
        %3979 = vmatprep.subr.bf16.mxu0 0
        %3980 = vmatpush1.bf16.msra.mxu0 0
        %3981 = vmatprep.subr.bf16.mxu0 0
        %3982 = vmatpush1.bf16.msra.mxu0 0
        %3983 = vmatprep.subr.bf16.mxu0 0
        %3984 = vmatpush1.bf16.msra.mxu0 0
        %3985 = vmatprep.subr.bf16.mxu0 0
        %3986 = vmatpush1.bf16.msra.mxu0 0
        %3987 = vmatprep.subr.bf16.mxu0 0
        %3988 = vmatpush1.bf16.msra.mxu0 0
        %3989 = vmatprep.subr.bf16.mxu0 0
        %3990 = vmatpush1.bf16.msra.mxu0 0
        %3991 = vmatprep.subr.bf16.mxu0 0
        %3992 = vmatpush1.bf16.msra.mxu0 0
        %3993 = vmatprep.subr.bf16.mxu0 0
        %3994 = vmatpush1.bf16.msra.mxu0 0
        %3995 = vmatprep.subr.bf16.mxu0 0
        %3996 = vmatpush1.bf16.msra.mxu0 0
        %3997 = vmatprep.subr.bf16.mxu0 0
        %3998 = vmatpush1.bf16.msra.mxu0 0
        %3999 = vmatprep.subr.bf16.mxu0 0
        %4000 = vmatpush1.bf16.msra.mxu0 0
        %4001 = vmatprep.subr.bf16.mxu0 0
        %4002 = vmatpush1.bf16.msra.mxu0 0
        %4003 = vmatprep.subr.bf16.mxu0 0
        %4004 = vmatpush1.bf16.msra.mxu0 0
        %4005 = vmatprep.subr.bf16.mxu0 0
        %4006 = vmatpush1.bf16.msra.mxu0 0
        %4007 = vmatprep.subr.bf16.mxu0 0
        %4008 = vmatpush1.bf16.msra.mxu0 0
        %4009 = vmatprep.mubr.bf16.mxu0 0
        %4010 = vmatmul.mubr.bf16.gmra.mrb[0].mxu0 %v3975
        %v4011 = vpop.f32.mrb[0].mxu0
        %v4012 = vadd.f32 0.0, %v4011
        %v4013 = vpop.f32.mrb[0].mxu0
        %v4014 = vpop.f32.mrb[0].mxu0
        %v4015 = vadd.f32 0.0, %v4014
        %v4016 = vpop.f32.mrb[0].mxu0
        %4017 = vdwg.mxu0
        %4020 = vrot.lane.b32.xlu0 %v4012, 16
        %v4021 = vpop.permute.xlu0 %4020
        %4022 = vrot.lane.b32.xlu0 %v4015, 16
        %v4023 = vpop.permute.xlu0 %4022
        %vm4026 = vcmask 195712
        %4027 = vst.msk [vmem:[#allocation2] sm:$0xff] %vm4026, %v4021
        %4028 = vst.msk [vmem:[#allocation2 + $0x8] sm:$0xff] %vm4026, %v4023
        %s4029 = scalar_lea.vmem %s2, 48
        %v4030 = vld [vmem:[%s4029] sm:$0xff]
        %v4031 = vld [vmem:[%s4029 + $0x8] sm:$0xff]
        %4032 = vrot.lane.b32.xlu0 %v255, 72
        %v4033 = vpop.permute.xlu0 %4032
        %4034 = vrot.lane.b32.xlu0 %v258, 72
        %v4035 = vpop.permute.xlu0 %4034
        %v4036 = vsel %vm269, %v4033, 0
        %v4038 = vsel %vm269, %v4035, 0
        %v4041 = vsel %vm269, %v4030, 0
        %v4044 = vsel %vm269, %v4031, 0
        %4046 = vmatprep.subr.mxu0 0.0
        %v4047 = vand.u32 %v4041, 4294901760
        %4048 = vmatpush1.xpose.msra.mxu0 %v4047
        %4049 = vmatprep.subr.mxu0 0.0
        %v4050 = vand.u32 %v4044, 4294901760
        %4051 = vmatpush1.xpose.msra.mxu0 %v4050
        %4052 = vmatprep.subr.mxu0 0.0
        %4053 = vmatpush1.xpose.msra.mxu0 0.0
        %4054 = vmatprep.subr.mxu0 0.0
        %4055 = vmatpush1.xpose.msra.mxu0 0.0
        %4056 = vmatprep.subr.mxu0 0.0
        %4057 = vmatpush1.xpose.msra.mxu0 0.0
        %4058 = vmatprep.subr.mxu0 0.0
        %4059 = vmatpush1.xpose.msra.mxu0 0.0
        %4060 = vmatprep.subr.mxu0 0.0
        %4061 = vmatpush1.xpose.msra.mxu0 0.0
        %4062 = vmatprep.subr.mxu0 0.0
        %4063 = vmatpush1.xpose.msra.mxu0 0.0
        %4064 = vmatprep.subr.mxu0 0.0
        %4065 = vmatpush1.xpose.msra.mxu0 0.0
        %4066 = vmatprep.subr.mxu0 0.0
        %4067 = vmatpush1.xpose.msra.mxu0 0.0
        %4068 = vmatprep.subr.mxu0 0.0
        %4069 = vmatpush1.xpose.msra.mxu0 0.0
        %4070 = vmatprep.subr.mxu0 0.0
        %4071 = vmatpush1.xpose.msra.mxu0 0.0
        %4072 = vmatprep.subr.mxu0 0.0
        %4073 = vmatpush1.xpose.msra.mxu0 0.0
        %4074 = vmatprep.subr.mxu0 0.0
        %4075 = vmatpush1.xpose.msra.mxu0 0.0
        %4076 = vmatprep.subr.mxu0 0.0
        %4077 = vmatpush1.xpose.msra.mxu0 0.0
        %4078 = vmatprep.subr.mxu0 0.0
        %4079 = vmatpush1.xpose.msra.mxu0 0.0
        %4080 = vmatprep.subr.mxu0 0.0
        %4081 = vmatpush1.xpose.msra.mxu0 0.0
        %4082 = vmatprep.subr.mxu0 0.0
        %4083 = vmatpush1.xpose.msra.mxu0 0.0
        %4084 = vmatprep.subr.mxu0 0.0
        %4085 = vmatpush1.xpose.msra.mxu0 0.0
        %4086 = vmatprep.subr.mxu0 0.0
        %4087 = vmatpush1.xpose.msra.mxu0 0.0
        %4088 = vmatprep.subr.mxu0 0.0
        %4089 = vmatpush1.xpose.msra.mxu0 0.0
        %4090 = vmatprep.subr.mxu0 0.0
        %4091 = vmatpush1.xpose.msra.mxu0 0.0
        %4092 = vmatprep.subr.mxu0 0.0
        %4093 = vmatpush1.xpose.msra.mxu0 0.0
        %4094 = vmatprep.subr.mxu0 0.0
        %4095 = vmatpush1.xpose.msra.mxu0 0.0
        %4096 = vmatprep.subr.mxu0 0.0
        %4097 = vmatpush1.xpose.msra.mxu0 0.0
        %4098 = vmatprep.subr.mxu0 0.0
        %4099 = vmatpush1.xpose.msra.mxu0 0.0
        %4100 = vmatprep.subr.mxu0 0.0
        %4101 = vmatpush1.xpose.msra.mxu0 0.0
        %4102 = vmatprep.subr.mxu0 0.0
        %4103 = vmatpush1.xpose.msra.mxu0 0.0
        %4104 = vmatprep.subr.mxu0 0.0
        %4105 = vmatpush1.xpose.msra.mxu0 0.0
        %4106 = vmatprep.subr.mxu0 0.0
        %4107 = vmatpush1.xpose.msra.mxu0 0.0
        %4108 = vmatprep.subr.mxu0 0.0
        %4109 = vmatpush1.xpose.msra.mxu0 0.0
        %4110 = vmatprep.subr.mxu0 0.0
        %4111 = vmatpush1.xpose.msra.mxu0 0.0
        %4112 = vmatprep.mubr.f32.mxu0 0.0
        %v4113 = vand.u32 %v4036, 4294901760
        %v4114 = vsub.f32 %v4036, %v4113
        %v4115 = vand.u32 %v4114, 4294901760
        %v4116 = vsub.f32 %v4114, %v4115
        %v4117 = vand.u32 %v4116, 4294901760
        %4118 = vmatmul.mubr.f32.gmra.mrb[0].mxu0 %v4117
        %v4119 = vpop.f32.mrb[0].mxu0
        %v4120 = vadd.f32 0.0, %v4119
        %v4121 = vpop.f32.mrb[0].mxu0
        %4122 = vmatprep.mubr.f32.mxu0 0.0
        %v4123 = vand.u32 %v4038, 4294901760
        %v4124 = vsub.f32 %v4038, %v4123
        %v4125 = vand.u32 %v4124, 4294901760
        %v4126 = vsub.f32 %v4124, %v4125
        %v4127 = vand.u32 %v4126, 4294901760
        %4128 = vmatmul.mubr.f32.gmra.mrb[0].mxu0 %v4127
        %v4129 = vpop.f32.mrb[0].mxu0
        %v4130 = vadd.f32 0.0, %v4129
        %v4131 = vpop.f32.mrb[0].mxu0
        %4132 = vdwg.mxu0
        %4133 = vmatprep.subr.mxu0 0.0
        %v4134 = vand.u32 %v4041, 4294901760
        %v4135 = vsub.f32 %v4041, %v4134
        %v4136 = vand.u32 %v4135, 4294901760
        %v4137 = vsub.f32 %v4135, %v4136
        %v4138 = vand.u32 %v4137, 4294901760
        %4139 = vmatpush1.xpose.msra.mxu0 %v4138
        %4140 = vmatprep.subr.mxu0 0.0
        %v4141 = vand.u32 %v4044, 4294901760
        %v4142 = vsub.f32 %v4044, %v4141
        %v4143 = vand.u32 %v4142, 4294901760
        %v4144 = vsub.f32 %v4142, %v4143
        %v4145 = vand.u32 %v4144, 4294901760
        %4146 = vmatpush1.xpose.msra.mxu0 %v4145
        %4147 = vmatprep.subr.mxu0 0.0
        %4148 = vmatpush1.xpose.msra.mxu0 0.0
        %4149 = vmatprep.subr.mxu0 0.0
        %4150 = vmatpush1.xpose.msra.mxu0 0.0
        %4151 = vmatprep.subr.mxu0 0.0
        %4152 = vmatpush1.xpose.msra.mxu0 0.0
        %4153 = vmatprep.subr.mxu0 0.0
        %4154 = vmatpush1.xpose.msra.mxu0 0.0
        %4155 = vmatprep.subr.mxu0 0.0
        %4156 = vmatpush1.xpose.msra.mxu0 0.0
        %4157 = vmatprep.subr.mxu0 0.0
        %4158 = vmatpush1.xpose.msra.mxu0 0.0
        %4159 = vmatprep.subr.mxu0 0.0
        %4160 = vmatpush1.xpose.msra.mxu0 0.0
        %4161 = vmatprep.subr.mxu0 0.0
        %4162 = vmatpush1.xpose.msra.mxu0 0.0
        %4163 = vmatprep.subr.mxu0 0.0
        %4164 = vmatpush1.xpose.msra.mxu0 0.0
        %4165 = vmatprep.subr.mxu0 0.0
        %4166 = vmatpush1.xpose.msra.mxu0 0.0
        %4167 = vmatprep.subr.mxu0 0.0
        %4168 = vmatpush1.xpose.msra.mxu0 0.0
        %4169 = vmatprep.subr.mxu0 0.0
        %4170 = vmatpush1.xpose.msra.mxu0 0.0
        %4171 = vmatprep.subr.mxu0 0.0
        %4172 = vmatpush1.xpose.msra.mxu0 0.0
        %4173 = vmatprep.subr.mxu0 0.0
        %4174 = vmatpush1.xpose.msra.mxu0 0.0
        %4175 = vmatprep.subr.mxu0 0.0
        %4176 = vmatpush1.xpose.msra.mxu0 0.0
        %4177 = vmatprep.subr.mxu0 0.0
        %4178 = vmatpush1.xpose.msra.mxu0 0.0
        %4179 = vmatprep.subr.mxu0 0.0
        %4180 = vmatpush1.xpose.msra.mxu0 0.0
        %4181 = vmatprep.subr.mxu0 0.0
        %4182 = vmatpush1.xpose.msra.mxu0 0.0
        %4183 = vmatprep.subr.mxu0 0.0
        %4184 = vmatpush1.xpose.msra.mxu0 0.0
        %4185 = vmatprep.subr.mxu0 0.0
        %4186 = vmatpush1.xpose.msra.mxu0 0.0
        %4187 = vmatprep.subr.mxu0 0.0
        %4188 = vmatpush1.xpose.msra.mxu0 0.0
        %4189 = vmatprep.subr.mxu0 0.0
        %4190 = vmatpush1.xpose.msra.mxu0 0.0
        %4191 = vmatprep.subr.mxu0 0.0
        %4192 = vmatpush1.xpose.msra.mxu0 0.0
        %4193 = vmatprep.subr.mxu0 0.0
        %4194 = vmatpush1.xpose.msra.mxu0 0.0
        %4195 = vmatprep.subr.mxu0 0.0
        %4196 = vmatpush1.xpose.msra.mxu0 0.0
        %4197 = vmatprep.subr.mxu0 0.0
        %4198 = vmatpush1.xpose.msra.mxu0 0.0
        %4199 = vmatprep.subr.mxu0 0.0
        %4200 = vmatpush1.xpose.msra.mxu0 0.0
        %4201 = vmatprep.subr.mxu0 0.0
        %4202 = vmatpush1.xpose.msra.mxu0 0.0
        %4203 = vmatprep.subr.mxu0 0.0
        %4204 = vmatpush1.xpose.msra.mxu0 0.0
        %4205 = vmatprep.subr.mxu0 0.0
        %4206 = vmatpush1.xpose.msra.mxu0 0.0
        %4207 = vmatprep.mubr.f32.mxu0 0.0
        %v4208 = vand.u32 %v4036, 4294901760
        %4209 = vmatmul.mubr.f32.gmra.mrb[0].mxu0 %v4208
        %v4210 = vpop.f32.mrb[0].mxu0
        %v4211 = vadd.f32 %v4120, %v4210
        %v4212 = vpop.f32.mrb[0].mxu0
        %4213 = vmatprep.mubr.f32.mxu0 0.0
        %v4214 = vand.u32 %v4038, 4294901760
        %4215 = vmatmul.mubr.f32.gmra.mrb[0].mxu0 %v4214
        %v4216 = vpop.f32.mrb[0].mxu0
        %v4217 = vadd.f32 %v4130, %v4216
        %v4218 = vpop.f32.mrb[0].mxu0
        %4219 = vdwg.mxu0
        %4220 = vmatprep.subr.mxu0 0.0
        %v4221 = vand.u32 %v4041, 4294901760
        %v4222 = vsub.f32 %v4041, %v4221
        %4223 = vmatpush1.xpose.msra.mxu0 %v4222
        %4224 = vmatprep.subr.mxu0 0.0
        %v4225 = vand.u32 %v4044, 4294901760
        %v4226 = vsub.f32 %v4044, %v4225
        %4227 = vmatpush1.xpose.msra.mxu0 %v4226
        %4228 = vmatprep.subr.mxu0 0.0
        %4229 = vmatpush1.xpose.msra.mxu0 0.0
        %4230 = vmatprep.subr.mxu0 0.0
        %4231 = vmatpush1.xpose.msra.mxu0 0.0
        %4232 = vmatprep.subr.mxu0 0.0
        %4233 = vmatpush1.xpose.msra.mxu0 0.0
        %4234 = vmatprep.subr.mxu0 0.0
        %4235 = vmatpush1.xpose.msra.mxu0 0.0
        %4236 = vmatprep.subr.mxu0 0.0
        %4237 = vmatpush1.xpose.msra.mxu0 0.0
        %4238 = vmatprep.subr.mxu0 0.0
        %4239 = vmatpush1.xpose.msra.mxu0 0.0
        %4240 = vmatprep.subr.mxu0 0.0
        %4241 = vmatpush1.xpose.msra.mxu0 0.0
        %4242 = vmatprep.subr.mxu0 0.0
        %4243 = vmatpush1.xpose.msra.mxu0 0.0
        %4244 = vmatprep.subr.mxu0 0.0
        %4245 = vmatpush1.xpose.msra.mxu0 0.0
        %4246 = vmatprep.subr.mxu0 0.0
        %4247 = vmatpush1.xpose.msra.mxu0 0.0
        %4248 = vmatprep.subr.mxu0 0.0
        %4249 = vmatpush1.xpose.msra.mxu0 0.0
        %4250 = vmatprep.subr.mxu0 0.0
        %4251 = vmatpush1.xpose.msra.mxu0 0.0
        %4252 = vmatprep.subr.mxu0 0.0
        %4253 = vmatpush1.xpose.msra.mxu0 0.0
        %4254 = vmatprep.subr.mxu0 0.0
        %4255 = vmatpush1.xpose.msra.mxu0 0.0
        %4256 = vmatprep.subr.mxu0 0.0
        %4257 = vmatpush1.xpose.msra.mxu0 0.0
        %4258 = vmatprep.subr.mxu0 0.0
        %4259 = vmatpush1.xpose.msra.mxu0 0.0
        %4260 = vmatprep.subr.mxu0 0.0
        %4261 = vmatpush1.xpose.msra.mxu0 0.0
        %4262 = vmatprep.subr.mxu0 0.0
        %4263 = vmatpush1.xpose.msra.mxu0 0.0
        %4264 = vmatprep.subr.mxu0 0.0
        %4265 = vmatpush1.xpose.msra.mxu0 0.0
        %4266 = vmatprep.subr.mxu0 0.0
        %4267 = vmatpush1.xpose.msra.mxu0 0.0
        %4268 = vmatprep.subr.mxu0 0.0
        %4269 = vmatpush1.xpose.msra.mxu0 0.0
        %4270 = vmatprep.subr.mxu0 0.0
        %4271 = vmatpush1.xpose.msra.mxu0 0.0
        %4272 = vmatprep.subr.mxu0 0.0
        %4273 = vmatpush1.xpose.msra.mxu0 0.0
        %4274 = vmatprep.subr.mxu0 0.0
        %4275 = vmatpush1.xpose.msra.mxu0 0.0
        %4276 = vmatprep.subr.mxu0 0.0
        %4277 = vmatpush1.xpose.msra.mxu0 0.0
        %4278 = vmatprep.subr.mxu0 0.0
        %4279 = vmatpush1.xpose.msra.mxu0 0.0
        %4280 = vmatprep.subr.mxu0 0.0
        %4281 = vmatpush1.xpose.msra.mxu0 0.0
        %4282 = vmatprep.subr.mxu0 0.0
        %4283 = vmatpush1.xpose.msra.mxu0 0.0
        %4284 = vmatprep.subr.mxu0 0.0
        %4285 = vmatpush1.xpose.msra.mxu0 0.0
        %4286 = vmatprep.subr.mxu0 0.0
        %4287 = vmatpush1.xpose.msra.mxu0 0.0
        %4288 = vmatprep.mubr.f32.mxu0 0.0
        %v4289 = vand.u32 %v4036, 4294901760
        %v4290 = vsub.f32 %v4036, %v4289
        %4291 = vmatmul.mubr.f32.gmra.mrb[0].mxu0 %v4290
        %v4292 = vpop.f32.mrb[0].mxu0
        %v4293 = vadd.f32 %v4211, %v4292
        %v4294 = vpop.f32.mrb[0].mxu0
        %4295 = vmatprep.mubr.f32.mxu0 0.0
        %v4296 = vand.u32 %v4038, 4294901760
        %v4297 = vsub.f32 %v4038, %v4296
        %4298 = vmatmul.mubr.f32.gmra.mrb[0].mxu0 %v4297
        %v4299 = vpop.f32.mrb[0].mxu0
        %v4300 = vadd.f32 %v4217, %v4299
        %v4301 = vpop.f32.mrb[0].mxu0
        %4302 = vdwg.mxu0
        %4303 = vmatprep.subr.mxu0 0.0
        %v4304 = vand.u32 %v4041, 4294901760
        %4305 = vmatpush1.xpose.msra.mxu0 %v4304
        %4306 = vmatprep.subr.mxu0 0.0
        %v4307 = vand.u32 %v4044, 4294901760
        %4308 = vmatpush1.xpose.msra.mxu0 %v4307
        %4309 = vmatprep.subr.mxu0 0.0
        %4310 = vmatpush1.xpose.msra.mxu0 0.0
        %4311 = vmatprep.subr.mxu0 0.0
        %4312 = vmatpush1.xpose.msra.mxu0 0.0
        %4313 = vmatprep.subr.mxu0 0.0
        %4314 = vmatpush1.xpose.msra.mxu0 0.0
        %4315 = vmatprep.subr.mxu0 0.0
        %4316 = vmatpush1.xpose.msra.mxu0 0.0
        %4317 = vmatprep.subr.mxu0 0.0
        %4318 = vmatpush1.xpose.msra.mxu0 0.0
        %4319 = vmatprep.subr.mxu0 0.0
        %4320 = vmatpush1.xpose.msra.mxu0 0.0
        %4321 = vmatprep.subr.mxu0 0.0
        %4322 = vmatpush1.xpose.msra.mxu0 0.0
        %4323 = vmatprep.subr.mxu0 0.0
        %4324 = vmatpush1.xpose.msra.mxu0 0.0
        %4325 = vmatprep.subr.mxu0 0.0
        %4326 = vmatpush1.xpose.msra.mxu0 0.0
        %4327 = vmatprep.subr.mxu0 0.0
        %4328 = vmatpush1.xpose.msra.mxu0 0.0
        %4329 = vmatprep.subr.mxu0 0.0
        %4330 = vmatpush1.xpose.msra.mxu0 0.0
        %4331 = vmatprep.subr.mxu0 0.0
        %4332 = vmatpush1.xpose.msra.mxu0 0.0
        %4333 = vmatprep.subr.mxu0 0.0
        %4334 = vmatpush1.xpose.msra.mxu0 0.0
        %4335 = vmatprep.subr.mxu0 0.0
        %4336 = vmatpush1.xpose.msra.mxu0 0.0
        %4337 = vmatprep.subr.mxu0 0.0
        %4338 = vmatpush1.xpose.msra.mxu0 0.0
        %4339 = vmatprep.subr.mxu0 0.0
        %4340 = vmatpush1.xpose.msra.mxu0 0.0
        %4341 = vmatprep.subr.mxu0 0.0
        %4342 = vmatpush1.xpose.msra.mxu0 0.0
        %4343 = vmatprep.subr.mxu0 0.0
        %4344 = vmatpush1.xpose.msra.mxu0 0.0
        %4345 = vmatprep.subr.mxu0 0.0
        %4346 = vmatpush1.xpose.msra.mxu0 0.0
        %4347 = vmatprep.subr.mxu0 0.0
        %4348 = vmatpush1.xpose.msra.mxu0 0.0
        %4349 = vmatprep.subr.mxu0 0.0
        %4350 = vmatpush1.xpose.msra.mxu0 0.0
        %4351 = vmatprep.subr.mxu0 0.0
        %4352 = vmatpush1.xpose.msra.mxu0 0.0
        %4353 = vmatprep.subr.mxu0 0.0
        %4354 = vmatpush1.xpose.msra.mxu0 0.0
        %4355 = vmatprep.subr.mxu0 0.0
        %4356 = vmatpush1.xpose.msra.mxu0 0.0
        %4357 = vmatprep.subr.mxu0 0.0
        %4358 = vmatpush1.xpose.msra.mxu0 0.0
        %4359 = vmatprep.subr.mxu0 0.0
        %4360 = vmatpush1.xpose.msra.mxu0 0.0
        %4361 = vmatprep.subr.mxu0 0.0
        %4362 = vmatpush1.xpose.msra.mxu0 0.0
        %4363 = vmatprep.subr.mxu0 0.0
        %4364 = vmatpush1.xpose.msra.mxu0 0.0
        %4365 = vmatprep.subr.mxu0 0.0
        %4366 = vmatpush1.xpose.msra.mxu0 0.0
        %4367 = vmatprep.subr.mxu0 0.0
        %4368 = vmatpush1.xpose.msra.mxu0 0.0
        %4369 = vmatprep.mubr.f32.mxu0 0.0
        %v4370 = vand.u32 %v4036, 4294901760
        %v4371 = vsub.f32 %v4036, %v4370
        %v4372 = vand.u32 %v4371, 4294901760
        %4373 = vmatmul.mubr.f32.gmra.mrb[0].mxu0 %v4372
        %v4374 = vpop.f32.mrb[0].mxu0
        %v4375 = vadd.f32 %v4293, %v4374
        %v4376 = vpop.f32.mrb[0].mxu0
        %4377 = vmatprep.mubr.f32.mxu0 0.0
        %v4378 = vand.u32 %v4038, 4294901760
        %v4379 = vsub.f32 %v4038, %v4378
        %v4380 = vand.u32 %v4379, 4294901760
        %4381 = vmatmul.mubr.f32.gmra.mrb[0].mxu0 %v4380
        %v4382 = vpop.f32.mrb[0].mxu0
        %v4383 = vadd.f32 %v4300, %v4382
        %v4384 = vpop.f32.mrb[0].mxu0
        %4385 = vdwg.mxu0
        %4386 = vmatprep.subr.mxu0 0.0
        %v4387 = vand.u32 %v4041, 4294901760
        %v4388 = vsub.f32 %v4041, %v4387
        %v4389 = vand.u32 %v4388, 4294901760
        %4390 = vmatpush1.xpose.msra.mxu0 %v4389
        %4391 = vmatprep.subr.mxu0 0.0
        %v4392 = vand.u32 %v4044, 4294901760
        %v4393 = vsub.f32 %v4044, %v4392
        %v4394 = vand.u32 %v4393, 4294901760
        %4395 = vmatpush1.xpose.msra.mxu0 %v4394
        %4396 = vmatprep.subr.mxu0 0.0
        %4397 = vmatpush1.xpose.msra.mxu0 0.0
        %4398 = vmatprep.subr.mxu0 0.0
        %4399 = vmatpush1.xpose.msra.mxu0 0.0
        %4400 = vmatprep.subr.mxu0 0.0
        %4401 = vmatpush1.xpose.msra.mxu0 0.0
        %4402 = vmatprep.subr.mxu0 0.0
        %4403 = vmatpush1.xpose.msra.mxu0 0.0
        %4404 = vmatprep.subr.mxu0 0.0
        %4405 = vmatpush1.xpose.msra.mxu0 0.0
        %4406 = vmatprep.subr.mxu0 0.0
        %4407 = vmatpush1.xpose.msra.mxu0 0.0
        %4408 = vmatprep.subr.mxu0 0.0
        %4409 = vmatpush1.xpose.msra.mxu0 0.0
        %4410 = vmatprep.subr.mxu0 0.0
        %4411 = vmatpush1.xpose.msra.mxu0 0.0
        %4412 = vmatprep.subr.mxu0 0.0
        %4413 = vmatpush1.xpose.msra.mxu0 0.0
        %4414 = vmatprep.subr.mxu0 0.0
        %4415 = vmatpush1.xpose.msra.mxu0 0.0
        %4416 = vmatprep.subr.mxu0 0.0
        %4417 = vmatpush1.xpose.msra.mxu0 0.0
        %4418 = vmatprep.subr.mxu0 0.0
        %4419 = vmatpush1.xpose.msra.mxu0 0.0
        %4420 = vmatprep.subr.mxu0 0.0
        %4421 = vmatpush1.xpose.msra.mxu0 0.0
        %4422 = vmatprep.subr.mxu0 0.0
        %4423 = vmatpush1.xpose.msra.mxu0 0.0
        %4424 = vmatprep.subr.mxu0 0.0
        %4425 = vmatpush1.xpose.msra.mxu0 0.0
        %4426 = vmatprep.subr.mxu0 0.0
        %4427 = vmatpush1.xpose.msra.mxu0 0.0
        %4428 = vmatprep.subr.mxu0 0.0
        %4429 = vmatpush1.xpose.msra.mxu0 0.0
        %4430 = vmatprep.subr.mxu0 0.0
        %4431 = vmatpush1.xpose.msra.mxu0 0.0
        %4432 = vmatprep.subr.mxu0 0.0
        %4433 = vmatpush1.xpose.msra.mxu0 0.0
        %4434 = vmatprep.subr.mxu0 0.0
        %4435 = vmatpush1.xpose.msra.mxu0 0.0
        %4436 = vmatprep.subr.mxu0 0.0
        %4437 = vmatpush1.xpose.msra.mxu0 0.0
        %4438 = vmatprep.subr.mxu0 0.0
        %4439 = vmatpush1.xpose.msra.mxu0 0.0
        %4440 = vmatprep.subr.mxu0 0.0
        %4441 = vmatpush1.xpose.msra.mxu0 0.0
        %4442 = vmatprep.subr.mxu0 0.0
        %4443 = vmatpush1.xpose.msra.mxu0 0.0
        %4444 = vmatprep.subr.mxu0 0.0
        %4445 = vmatpush1.xpose.msra.mxu0 0.0
        %4446 = vmatprep.subr.mxu0 0.0
        %4447 = vmatpush1.xpose.msra.mxu0 0.0
        %4448 = vmatprep.subr.mxu0 0.0
        %4449 = vmatpush1.xpose.msra.mxu0 0.0
        %4450 = vmatprep.subr.mxu0 0.0
        %4451 = vmatpush1.xpose.msra.mxu0 0.0
        %4452 = vmatprep.subr.mxu0 0.0
        %4453 = vmatpush1.xpose.msra.mxu0 0.0
        %4454 = vmatprep.subr.mxu0 0.0
        %4455 = vmatpush1.xpose.msra.mxu0 0.0
        %4456 = vmatprep.mubr.f32.mxu0 0.0
        %v4457 = vand.u32 %v4036, 4294901760
        %4458 = vmatmul.mubr.f32.gmra.mrb[0].mxu0 %v4457
        %v4459 = vpop.f32.mrb[0].mxu0
        %v4460 = vadd.f32 %v4375, %v4459
        %v4461 = vpop.f32.mrb[0].mxu0
        %4462 = vmatprep.mubr.f32.mxu0 0.0
        %v4463 = vand.u32 %v4038, 4294901760
        %4464 = vmatmul.mubr.f32.gmra.mrb[0].mxu0 %v4463
        %v4465 = vpop.f32.mrb[0].mxu0
        %v4466 = vadd.f32 %v4383, %v4465
        %v4467 = vpop.f32.mrb[0].mxu0
        %4468 = vdwg.mxu0
        %4469 = vmatprep.subr.mxu0 0.0
        %v4470 = vand.u32 %v4041, 4294901760
        %4471 = vmatpush1.xpose.msra.mxu0 %v4470
        %4472 = vmatprep.subr.mxu0 0.0
        %v4473 = vand.u32 %v4044, 4294901760
        %4474 = vmatpush1.xpose.msra.mxu0 %v4473
        %4475 = vmatprep.subr.mxu0 0.0
        %4476 = vmatpush1.xpose.msra.mxu0 0.0
        %4477 = vmatprep.subr.mxu0 0.0
        %4478 = vmatpush1.xpose.msra.mxu0 0.0
        %4479 = vmatprep.subr.mxu0 0.0
        %4480 = vmatpush1.xpose.msra.mxu0 0.0
        %4481 = vmatprep.subr.mxu0 0.0
        %4482 = vmatpush1.xpose.msra.mxu0 0.0
        %4483 = vmatprep.subr.mxu0 0.0
        %4484 = vmatpush1.xpose.msra.mxu0 0.0
        %4485 = vmatprep.subr.mxu0 0.0
        %4486 = vmatpush1.xpose.msra.mxu0 0.0
        %4487 = vmatprep.subr.mxu0 0.0
        %4488 = vmatpush1.xpose.msra.mxu0 0.0
        %4489 = vmatprep.subr.mxu0 0.0
        %4490 = vmatpush1.xpose.msra.mxu0 0.0
        %4491 = vmatprep.subr.mxu0 0.0
        %4492 = vmatpush1.xpose.msra.mxu0 0.0
        %4493 = vmatprep.subr.mxu0 0.0
        %4494 = vmatpush1.xpose.msra.mxu0 0.0
        %4495 = vmatprep.subr.mxu0 0.0
        %4496 = vmatpush1.xpose.msra.mxu0 0.0
        %4497 = vmatprep.subr.mxu0 0.0
        %4498 = vmatpush1.xpose.msra.mxu0 0.0
        %4499 = vmatprep.subr.mxu0 0.0
        %4500 = vmatpush1.xpose.msra.mxu0 0.0
        %4501 = vmatprep.subr.mxu0 0.0
        %4502 = vmatpush1.xpose.msra.mxu0 0.0
        %4503 = vmatprep.subr.mxu0 0.0
        %4504 = vmatpush1.xpose.msra.mxu0 0.0
        %4505 = vmatprep.subr.mxu0 0.0
        %4506 = vmatpush1.xpose.msra.mxu0 0.0
        %4507 = vmatprep.subr.mxu0 0.0
        %4508 = vmatpush1.xpose.msra.mxu0 0.0
        %4509 = vmatprep.subr.mxu0 0.0
        %4510 = vmatpush1.xpose.msra.mxu0 0.0
        %4511 = vmatprep.subr.mxu0 0.0
        %4512 = vmatpush1.xpose.msra.mxu0 0.0
        %4513 = vmatprep.subr.mxu0 0.0
        %4514 = vmatpush1.xpose.msra.mxu0 0.0
        %4515 = vmatprep.subr.mxu0 0.0
        %4516 = vmatpush1.xpose.msra.mxu0 0.0
        %4517 = vmatprep.subr.mxu0 0.0
        %4518 = vmatpush1.xpose.msra.mxu0 0.0
        %4519 = vmatprep.subr.mxu0 0.0
        %4520 = vmatpush1.xpose.msra.mxu0 0.0
        %4521 = vmatprep.subr.mxu0 0.0
        %4522 = vmatpush1.xpose.msra.mxu0 0.0
        %4523 = vmatprep.subr.mxu0 0.0
        %4524 = vmatpush1.xpose.msra.mxu0 0.0
        %4525 = vmatprep.subr.mxu0 0.0
        %4526 = vmatpush1.xpose.msra.mxu0 0.0
        %4527 = vmatprep.subr.mxu0 0.0
        %4528 = vmatpush1.xpose.msra.mxu0 0.0
        %4529 = vmatprep.subr.mxu0 0.0
        %4530 = vmatpush1.xpose.msra.mxu0 0.0
        %4531 = vmatprep.subr.mxu0 0.0
        %4532 = vmatpush1.xpose.msra.mxu0 0.0
        %4533 = vmatprep.subr.mxu0 0.0
        %4534 = vmatpush1.xpose.msra.mxu0 0.0
        %4535 = vmatprep.mubr.f32.mxu0 0.0
        %v4536 = vand.u32 %v4036, 4294901760
        %4537 = vmatmul.mubr.f32.gmra.mrb[0].mxu0 %v4536
        %v4538 = vpop.f32.mrb[0].mxu0
        %v4539 = vadd.f32 %v4460, %v4538
        %v4540 = vpop.f32.mrb[0].mxu0
        %4541 = vmatprep.mubr.f32.mxu0 0.0
        %v4542 = vand.u32 %v4038, 4294901760
        %4543 = vmatmul.mubr.f32.gmra.mrb[0].mxu0 %v4542
        %v4544 = vpop.f32.mrb[0].mxu0
        %v4545 = vadd.f32 %v4466, %v4544
        %v4546 = vpop.f32.mrb[0].mxu0
        %4547 = vdwg.mxu0
        %4548 = vrot.lane.b32.xlu0 %v782, 72
        %v4549 = vpop.permute.xlu0 %4548
        %4550 = vrot.lane.b32.xlu0 %v783, 72
        %v4551 = vpop.permute.xlu0 %4550
        %v4554 = vsel %vm269, %v4549, 0.0
        %4555 = vadd.xlane.f32.xlu0 %v4554
        %v4556 = vpop.xlane.xlu0 %4555
        %v4557 = vsel %vm269, %v4551, 0.0
        %4558 = vadd.xlane.f32.xlu0 %v4557
        %v4559 = vpop.xlane.xlu0 %4558
        %v4560 = vmul.f32 %v4539, 2.0
        %v4561 = vmul.f32 %v4545, 2.0
        %v4562 = vsub.f32 %v4556, %v4560
        %v4563 = vsub.f32 %v4559, %v4561
        %v4564 = vmul.f32 %v4030, %v4030
        %v4565 = vmul.f32 %v4031, %v4031
        %v4566 = vsel %vm269, %v4564, 0.0
        %4567 = vadd.xlane.f32.xlu0 %v4566
        %v4568 = vpop.xlane.xlu0 %4567
        %v4569 = vsel %vm269, %v4565, 0.0
        %4570 = vadd.xlane.f32.xlu0 %v4569
        %v4571 = vpop.xlane.xlu0 %4570
        %v4574 = vlaneseq
        %v4575 = vshrl.u32 %v4574, 7
        %v4576 = vsub.s32 %v813, %v4575
        %v4577 = vrot.slane %v4568, %v4576
        %v4578 = vlaneseq
        %v4579 = vshrl.u32 %v4578, 7
        %v4580 = vsub.s32 %v818, %v4579
        %v4581 = vrot.slane %v4571, %v4580
        %v4582 = vsel %vm823, %v4581, %v4577
        %v4583 = vsel %vm825, %v4582, %v4582
        %v4584 = vsel %vm827, %v4582, %v4583
        %v4585 = vsel %vm829, %v4582, %v4584
        %v4586 = vsel %vm831, %v4582, %v4585
        %v4587 = vsel %vm833, %v4582, %v4586
        %v4588 = vsel %vm835, %v4582, %v4587
        %v4590 = vadd.f32 %v4562, %v4588
        %v4591 = vadd.f32 %v4563, %v4588
        %v4592 = vsel %vm840, %v4590, inf
        %4593 = vmin.xlane.f32.xlu0 %v4592
        %v4594 = vpop.xlane.xlu0 %4593
        %v4595 = vsel %vm840, %v4591, inf
        %4596 = vmin.xlane.f32.xlu0 %v4595
        %v4597 = vpop.xlane.xlu0 %4596
        %vm4598 = vcmp.le.f32.partialorder %v4590, %v4594
        %vm4599 = vcmp.le.f32.partialorder %v4591, %v4597
        %v4600 = vsel %vm4598, %v813, 16
        %v4601 = vsel %vm4599, %v813, 16
        %v4602 = vsel %vm840, %v4600, 2147483647
        %v4603 = vand.u32 %v4602, 65535
        %v4604 = vshra.s32 %v4602, 16
        %v4605 = vcvt.s32.f32 %v4603
        %v4606 = vcvt.s32.f32 %v4604
        %4607 = vmin.xlane.f32.xlu0 %v4606
        %v4608 = vpop.xlane.xlu0 %4607
        %vm4609 = vcmp.eq.f32.partialorder %v4606, %v4608
        %v4610 = vsel %vm4609, %v4605, inf
        %4611 = vmin.xlane.f32.xlu0 %v4610
        %v4612 = vpop.xlane.xlu0 %4611
        %v4613 = vcvt.f32.s32 %v4612
        %v4614 = vcvt.f32.s32 %v4608
        %v4615 = vshll.u32 %v4614, 16
        %v4616 = vadd.s32 %v4615, %v4613
        %v4617 = vsel %vm840, %v4601, 2147483647
        %v4618 = vand.u32 %v4617, 65535
        %v4619 = vshra.s32 %v4617, 16
        %v4620 = vcvt.s32.f32 %v4618
        %v4621 = vcvt.s32.f32 %v4619
        %4622 = vmin.xlane.f32.xlu0 %v4621
        %v4623 = vpop.xlane.xlu0 %4622
        %vm4624 = vcmp.eq.f32.partialorder %v4621, %v4623
        %v4625 = vsel %vm4624, %v4620, inf
        %4626 = vmin.xlane.f32.xlu0 %v4625
        %v4627 = vpop.xlane.xlu0 %4626
        %v4628 = vcvt.f32.s32 %v4627
        %v4629 = vcvt.f32.s32 %v4623
        %v4630 = vshll.u32 %v4629, 16
        %v4631 = vadd.s32 %v4630, %v4628
        %vm4632 = vcmp.eq.s32.totalorder %v813, %v4616
        %vm4633 = vcmp.eq.s32.totalorder %v813, %v4631
        %v4634 = vsel %vm4632, 1, 0
        %v4635 = vsel %vm4633, 1, 0
        %v4636 = vcvt.s32.f32 %v4634
        %v4637 = vcvt.s32.f32 %v4635
        %v4639 = vsel %vm840, %v4636, 0
        %v4642 = vsel %vm840, %v4637, 0
        %4644 = vmatprep.subr.mxu0 0.0
        %v4645 = vand.u32 %v4030, 4294901760
        %4646 = vmatpush1.msra.mxu0 %v4645
        %4647 = vmatprep.subr.mxu0 0.0
        %v4648 = vand.u32 %v4031, 4294901760
        %4649 = vmatpush1.msra.mxu0 %v4648
        %4650 = vmatprep.subr.mxu0 0.0
        %4651 = vmatpush1.msra.mxu0 0.0
        %4652 = vmatprep.subr.mxu0 0.0
        %4653 = vmatpush1.msra.mxu0 0.0
        %4654 = vmatprep.subr.mxu0 0.0
        %4655 = vmatpush1.msra.mxu0 0.0
        %4656 = vmatprep.subr.mxu0 0.0
        %4657 = vmatpush1.msra.mxu0 0.0
        %4658 = vmatprep.subr.mxu0 0.0
        %4659 = vmatpush1.msra.mxu0 0.0
        %4660 = vmatprep.subr.mxu0 0.0
        %4661 = vmatpush1.msra.mxu0 0.0
        %4662 = vmatprep.subr.mxu0 0.0
        %4663 = vmatpush1.msra.mxu0 0.0
        %4664 = vmatprep.subr.mxu0 0.0
        %4665 = vmatpush1.msra.mxu0 0.0
        %4666 = vmatprep.subr.mxu0 0.0
        %4667 = vmatpush1.msra.mxu0 0.0
        %4668 = vmatprep.subr.mxu0 0.0
        %4669 = vmatpush1.msra.mxu0 0.0
        %4670 = vmatprep.subr.mxu0 0.0
        %4671 = vmatpush1.msra.mxu0 0.0
        %4672 = vmatprep.subr.mxu0 0.0
        %4673 = vmatpush1.msra.mxu0 0.0
        %4674 = vmatprep.subr.mxu0 0.0
        %4675 = vmatpush1.msra.mxu0 0.0
        %4676 = vmatprep.subr.mxu0 0.0
        %4677 = vmatpush1.msra.mxu0 0.0
        %4678 = vmatprep.subr.mxu0 0.0
        %4679 = vmatpush1.msra.mxu0 0.0
        %4680 = vmatprep.subr.mxu0 0.0
        %4681 = vmatpush1.msra.mxu0 0.0
        %4682 = vmatprep.subr.mxu0 0.0
        %4683 = vmatpush1.msra.mxu0 0.0
        %4684 = vmatprep.subr.mxu0 0.0
        %4685 = vmatpush1.msra.mxu0 0.0
        %4686 = vmatprep.subr.mxu0 0.0
        %4687 = vmatpush1.msra.mxu0 0.0
        %4688 = vmatprep.subr.mxu0 0.0
        %4689 = vmatpush1.msra.mxu0 0.0
        %4690 = vmatprep.subr.mxu0 0.0
        %4691 = vmatpush1.msra.mxu0 0.0
        %4692 = vmatprep.subr.mxu0 0.0
        %4693 = vmatpush1.msra.mxu0 0.0
        %4694 = vmatprep.subr.mxu0 0.0
        %4695 = vmatpush1.msra.mxu0 0.0
        %4696 = vmatprep.subr.mxu0 0.0
        %4697 = vmatpush1.msra.mxu0 0.0
        %4698 = vmatprep.subr.mxu0 0.0
        %4699 = vmatpush1.msra.mxu0 0.0
        %4700 = vmatprep.subr.mxu0 0.0
        %4701 = vmatpush1.msra.mxu0 0.0
        %4702 = vmatprep.subr.mxu0 0.0
        %4703 = vmatpush1.msra.mxu0 0.0
        %4704 = vmatprep.subr.mxu0 0.0
        %4705 = vmatpush1.msra.mxu0 0.0
        %4706 = vmatprep.subr.mxu0 0.0
        %4707 = vmatpush1.msra.mxu0 0.0
        %4708 = vmatprep.subr.mxu0 0.0
        %4709 = vmatpush1.msra.mxu0 0.0
        %4710 = vmatprep.mubr.f32.mxu0 0.0
        %v4711 = vand.u32 %v4639, 4294901760
        %v4712 = vsub.f32 %v4639, %v4711
        %v4713 = vand.u32 %v4712, 4294901760
        %v4714 = vsub.f32 %v4712, %v4713
        %v4715 = vand.u32 %v4714, 4294901760
        %4716 = vmatmul.mubr.f32.gmra.mrb[0].mxu0 %v4715
        %v4717 = vpop.f32.mrb[0].mxu0
        %v4718 = vadd.f32 0.0, %v4717
        %v4719 = vpop.f32.mrb[0].mxu0
        %4720 = vmatprep.mubr.f32.mxu0 0.0
        %v4721 = vand.u32 %v4642, 4294901760
        %v4722 = vsub.f32 %v4642, %v4721
        %v4723 = vand.u32 %v4722, 4294901760
        %v4724 = vsub.f32 %v4722, %v4723
        %v4725 = vand.u32 %v4724, 4294901760
        %4726 = vmatmul.mubr.f32.gmra.mrb[0].mxu0 %v4725
        %v4727 = vpop.f32.mrb[0].mxu0
        %v4728 = vadd.f32 0.0, %v4727
        %v4729 = vpop.f32.mrb[0].mxu0
        %4730 = vdwg.mxu0
        %4731 = vmatprep.subr.mxu0 0.0
        %v4732 = vand.u32 %v4030, 4294901760
        %v4733 = vsub.f32 %v4030, %v4732
        %v4734 = vand.u32 %v4733, 4294901760
        %v4735 = vsub.f32 %v4733, %v4734
        %v4736 = vand.u32 %v4735, 4294901760
        %4737 = vmatpush1.msra.mxu0 %v4736
        %4738 = vmatprep.subr.mxu0 0.0
        %v4739 = vand.u32 %v4031, 4294901760
        %v4740 = vsub.f32 %v4031, %v4739
        %v4741 = vand.u32 %v4740, 4294901760
        %v4742 = vsub.f32 %v4740, %v4741
        %v4743 = vand.u32 %v4742, 4294901760
        %4744 = vmatpush1.msra.mxu0 %v4743
        %4745 = vmatprep.subr.mxu0 0.0
        %4746 = vmatpush1.msra.mxu0 0.0
        %4747 = vmatprep.subr.mxu0 0.0
        %4748 = vmatpush1.msra.mxu0 0.0
        %4749 = vmatprep.subr.mxu0 0.0
        %4750 = vmatpush1.msra.mxu0 0.0
        %4751 = vmatprep.subr.mxu0 0.0
        %4752 = vmatpush1.msra.mxu0 0.0
        %4753 = vmatprep.subr.mxu0 0.0
        %4754 = vmatpush1.msra.mxu0 0.0
        %4755 = vmatprep.subr.mxu0 0.0
        %4756 = vmatpush1.msra.mxu0 0.0
        %4757 = vmatprep.subr.mxu0 0.0
        %4758 = vmatpush1.msra.mxu0 0.0
        %4759 = vmatprep.subr.mxu0 0.0
        %4760 = vmatpush1.msra.mxu0 0.0
        %4761 = vmatprep.subr.mxu0 0.0
        %4762 = vmatpush1.msra.mxu0 0.0
        %4763 = vmatprep.subr.mxu0 0.0
        %4764 = vmatpush1.msra.mxu0 0.0
        %4765 = vmatprep.subr.mxu0 0.0
        %4766 = vmatpush1.msra.mxu0 0.0
        %4767 = vmatprep.subr.mxu0 0.0
        %4768 = vmatpush1.msra.mxu0 0.0
        %4769 = vmatprep.subr.mxu0 0.0
        %4770 = vmatpush1.msra.mxu0 0.0
        %4771 = vmatprep.subr.mxu0 0.0
        %4772 = vmatpush1.msra.mxu0 0.0
        %4773 = vmatprep.subr.mxu0 0.0
        %4774 = vmatpush1.msra.mxu0 0.0
        %4775 = vmatprep.subr.mxu0 0.0
        %4776 = vmatpush1.msra.mxu0 0.0
        %4777 = vmatprep.subr.mxu0 0.0
        %4778 = vmatpush1.msra.mxu0 0.0
        %4779 = vmatprep.subr.mxu0 0.0
        %4780 = vmatpush1.msra.mxu0 0.0
        %4781 = vmatprep.subr.mxu0 0.0
        %4782 = vmatpush1.msra.mxu0 0.0
        %4783 = vmatprep.subr.mxu0 0.0
        %4784 = vmatpush1.msra.mxu0 0.0
        %4785 = vmatprep.subr.mxu0 0.0
        %4786 = vmatpush1.msra.mxu0 0.0
        %4787 = vmatprep.subr.mxu0 0.0
        %4788 = vmatpush1.msra.mxu0 0.0
        %4789 = vmatprep.subr.mxu0 0.0
        %4790 = vmatpush1.msra.mxu0 0.0
        %4791 = vmatprep.subr.mxu0 0.0
        %4792 = vmatpush1.msra.mxu0 0.0
        %4793 = vmatprep.subr.mxu0 0.0
        %4794 = vmatpush1.msra.mxu0 0.0
        %4795 = vmatprep.subr.mxu0 0.0
        %4796 = vmatpush1.msra.mxu0 0.0
        %4797 = vmatprep.subr.mxu0 0.0
        %4798 = vmatpush1.msra.mxu0 0.0
        %4799 = vmatprep.subr.mxu0 0.0
        %4800 = vmatpush1.msra.mxu0 0.0
        %4801 = vmatprep.subr.mxu0 0.0
        %4802 = vmatpush1.msra.mxu0 0.0
        %4803 = vmatprep.subr.mxu0 0.0
        %4804 = vmatpush1.msra.mxu0 0.0
        %4805 = vmatprep.mubr.f32.mxu0 0.0
        %v4806 = vand.u32 %v4639, 4294901760
        %4807 = vmatmul.mubr.f32.gmra.mrb[0].mxu0 %v4806
        %v4808 = vpop.f32.mrb[0].mxu0
        %v4809 = vadd.f32 %v4718, %v4808
        %v4810 = vpop.f32.mrb[0].mxu0
        %4811 = vmatprep.mubr.f32.mxu0 0.0
        %v4812 = vand.u32 %v4642, 4294901760
        %4813 = vmatmul.mubr.f32.gmra.mrb[0].mxu0 %v4812
        %v4814 = vpop.f32.mrb[0].mxu0
        %v4815 = vadd.f32 %v4728, %v4814
        %v4816 = vpop.f32.mrb[0].mxu0
        %4817 = vdwg.mxu0
        %4818 = vmatprep.subr.mxu0 0.0
        %v4819 = vand.u32 %v4030, 4294901760
        %v4820 = vsub.f32 %v4030, %v4819
        %4821 = vmatpush1.msra.mxu0 %v4820
        %4822 = vmatprep.subr.mxu0 0.0
        %v4823 = vand.u32 %v4031, 4294901760
        %v4824 = vsub.f32 %v4031, %v4823
        %4825 = vmatpush1.msra.mxu0 %v4824
        %4826 = vmatprep.subr.mxu0 0.0
        %4827 = vmatpush1.msra.mxu0 0.0
        %4828 = vmatprep.subr.mxu0 0.0
        %4829 = vmatpush1.msra.mxu0 0.0
        %4830 = vmatprep.subr.mxu0 0.0
        %4831 = vmatpush1.msra.mxu0 0.0
        %4832 = vmatprep.subr.mxu0 0.0
        %4833 = vmatpush1.msra.mxu0 0.0
        %4834 = vmatprep.subr.mxu0 0.0
        %4835 = vmatpush1.msra.mxu0 0.0
        %4836 = vmatprep.subr.mxu0 0.0
        %4837 = vmatpush1.msra.mxu0 0.0
        %4838 = vmatprep.subr.mxu0 0.0
        %4839 = vmatpush1.msra.mxu0 0.0
        %4840 = vmatprep.subr.mxu0 0.0
        %4841 = vmatpush1.msra.mxu0 0.0
        %4842 = vmatprep.subr.mxu0 0.0
        %4843 = vmatpush1.msra.mxu0 0.0
        %4844 = vmatprep.subr.mxu0 0.0
        %4845 = vmatpush1.msra.mxu0 0.0
        %4846 = vmatprep.subr.mxu0 0.0
        %4847 = vmatpush1.msra.mxu0 0.0
        %4848 = vmatprep.subr.mxu0 0.0
        %4849 = vmatpush1.msra.mxu0 0.0
        %4850 = vmatprep.subr.mxu0 0.0
        %4851 = vmatpush1.msra.mxu0 0.0
        %4852 = vmatprep.subr.mxu0 0.0
        %4853 = vmatpush1.msra.mxu0 0.0
        %4854 = vmatprep.subr.mxu0 0.0
        %4855 = vmatpush1.msra.mxu0 0.0
        %4856 = vmatprep.subr.mxu0 0.0
        %4857 = vmatpush1.msra.mxu0 0.0
        %4858 = vmatprep.subr.mxu0 0.0
        %4859 = vmatpush1.msra.mxu0 0.0
        %4860 = vmatprep.subr.mxu0 0.0
        %4861 = vmatpush1.msra.mxu0 0.0
        %4862 = vmatprep.subr.mxu0 0.0
        %4863 = vmatpush1.msra.mxu0 0.0
        %4864 = vmatprep.subr.mxu0 0.0
        %4865 = vmatpush1.msra.mxu0 0.0
        %4866 = vmatprep.subr.mxu0 0.0
        %4867 = vmatpush1.msra.mxu0 0.0
        %4868 = vmatprep.subr.mxu0 0.0
        %4869 = vmatpush1.msra.mxu0 0.0
        %4870 = vmatprep.subr.mxu0 0.0
        %4871 = vmatpush1.msra.mxu0 0.0
        %4872 = vmatprep.subr.mxu0 0.0
        %4873 = vmatpush1.msra.mxu0 0.0
        %4874 = vmatprep.subr.mxu0 0.0
        %4875 = vmatpush1.msra.mxu0 0.0
        %4876 = vmatprep.subr.mxu0 0.0
        %4877 = vmatpush1.msra.mxu0 0.0
        %4878 = vmatprep.subr.mxu0 0.0
        %4879 = vmatpush1.msra.mxu0 0.0
        %4880 = vmatprep.subr.mxu0 0.0
        %4881 = vmatpush1.msra.mxu0 0.0
        %4882 = vmatprep.subr.mxu0 0.0
        %4883 = vmatpush1.msra.mxu0 0.0
        %4884 = vmatprep.subr.mxu0 0.0
        %4885 = vmatpush1.msra.mxu0 0.0
        %4886 = vmatprep.mubr.f32.mxu0 0.0
        %v4887 = vand.u32 %v4639, 4294901760
        %v4888 = vsub.f32 %v4639, %v4887
        %4889 = vmatmul.mubr.f32.gmra.mrb[0].mxu0 %v4888
        %v4890 = vpop.f32.mrb[0].mxu0
        %v4891 = vadd.f32 %v4809, %v4890
        %v4892 = vpop.f32.mrb[0].mxu0
        %4893 = vmatprep.mubr.f32.mxu0 0.0
        %v4894 = vand.u32 %v4642, 4294901760
        %v4895 = vsub.f32 %v4642, %v4894
        %4896 = vmatmul.mubr.f32.gmra.mrb[0].mxu0 %v4895
        %v4897 = vpop.f32.mrb[0].mxu0
        %v4898 = vadd.f32 %v4815, %v4897
        %v4899 = vpop.f32.mrb[0].mxu0
        %4900 = vdwg.mxu0
        %4901 = vmatprep.subr.mxu0 0.0
        %v4902 = vand.u32 %v4030, 4294901760
        %4903 = vmatpush1.msra.mxu0 %v4902
        %4904 = vmatprep.subr.mxu0 0.0
        %v4905 = vand.u32 %v4031, 4294901760
        %4906 = vmatpush1.msra.mxu0 %v4905
        %4907 = vmatprep.subr.mxu0 0.0
        %4908 = vmatpush1.msra.mxu0 0.0
        %4909 = vmatprep.subr.mxu0 0.0
        %4910 = vmatpush1.msra.mxu0 0.0
        %4911 = vmatprep.subr.mxu0 0.0
        %4912 = vmatpush1.msra.mxu0 0.0
        %4913 = vmatprep.subr.mxu0 0.0
        %4914 = vmatpush1.msra.mxu0 0.0
        %4915 = vmatprep.subr.mxu0 0.0
        %4916 = vmatpush1.msra.mxu0 0.0
        %4917 = vmatprep.subr.mxu0 0.0
        %4918 = vmatpush1.msra.mxu0 0.0
        %4919 = vmatprep.subr.mxu0 0.0
        %4920 = vmatpush1.msra.mxu0 0.0
        %4921 = vmatprep.subr.mxu0 0.0
        %4922 = vmatpush1.msra.mxu0 0.0
        %4923 = vmatprep.subr.mxu0 0.0
        %4924 = vmatpush1.msra.mxu0 0.0
        %4925 = vmatprep.subr.mxu0 0.0
        %4926 = vmatpush1.msra.mxu0 0.0
        %4927 = vmatprep.subr.mxu0 0.0
        %4928 = vmatpush1.msra.mxu0 0.0
        %4929 = vmatprep.subr.mxu0 0.0
        %4930 = vmatpush1.msra.mxu0 0.0
        %4931 = vmatprep.subr.mxu0 0.0
        %4932 = vmatpush1.msra.mxu0 0.0
        %4933 = vmatprep.subr.mxu0 0.0
        %4934 = vmatpush1.msra.mxu0 0.0
        %4935 = vmatprep.subr.mxu0 0.0
        %4936 = vmatpush1.msra.mxu0 0.0
        %4937 = vmatprep.subr.mxu0 0.0
        %4938 = vmatpush1.msra.mxu0 0.0
        %4939 = vmatprep.subr.mxu0 0.0
        %4940 = vmatpush1.msra.mxu0 0.0
        %4941 = vmatprep.subr.mxu0 0.0
        %4942 = vmatpush1.msra.mxu0 0.0
        %4943 = vmatprep.subr.mxu0 0.0
        %4944 = vmatpush1.msra.mxu0 0.0
        %4945 = vmatprep.subr.mxu0 0.0
        %4946 = vmatpush1.msra.mxu0 0.0
        %4947 = vmatprep.subr.mxu0 0.0
        %4948 = vmatpush1.msra.mxu0 0.0
        %4949 = vmatprep.subr.mxu0 0.0
        %4950 = vmatpush1.msra.mxu0 0.0
        %4951 = vmatprep.subr.mxu0 0.0
        %4952 = vmatpush1.msra.mxu0 0.0
        %4953 = vmatprep.subr.mxu0 0.0
        %4954 = vmatpush1.msra.mxu0 0.0
        %4955 = vmatprep.subr.mxu0 0.0
        %4956 = vmatpush1.msra.mxu0 0.0
        %4957 = vmatprep.subr.mxu0 0.0
        %4958 = vmatpush1.msra.mxu0 0.0
        %4959 = vmatprep.subr.mxu0 0.0
        %4960 = vmatpush1.msra.mxu0 0.0
        %4961 = vmatprep.subr.mxu0 0.0
        %4962 = vmatpush1.msra.mxu0 0.0
        %4963 = vmatprep.subr.mxu0 0.0
        %4964 = vmatpush1.msra.mxu0 0.0
        %4965 = vmatprep.subr.mxu0 0.0
        %4966 = vmatpush1.msra.mxu0 0.0
        %4967 = vmatprep.mubr.f32.mxu0 0.0
        %v4968 = vand.u32 %v4639, 4294901760
        %v4969 = vsub.f32 %v4639, %v4968
        %v4970 = vand.u32 %v4969, 4294901760
        %4971 = vmatmul.mubr.f32.gmra.mrb[0].mxu0 %v4970
        %v4972 = vpop.f32.mrb[0].mxu0
        %v4973 = vadd.f32 %v4891, %v4972
        %v4974 = vpop.f32.mrb[0].mxu0
        %4975 = vmatprep.mubr.f32.mxu0 0.0
        %v4976 = vand.u32 %v4642, 4294901760
        %v4977 = vsub.f32 %v4642, %v4976
        %v4978 = vand.u32 %v4977, 4294901760
        %4979 = vmatmul.mubr.f32.gmra.mrb[0].mxu0 %v4978
        %v4980 = vpop.f32.mrb[0].mxu0
        %v4981 = vadd.f32 %v4898, %v4980
        %v4982 = vpop.f32.mrb[0].mxu0
        %4983 = vdwg.mxu0
        %4984 = vmatprep.subr.mxu0 0.0
        %v4985 = vand.u32 %v4030, 4294901760
        %v4986 = vsub.f32 %v4030, %v4985
        %v4987 = vand.u32 %v4986, 4294901760
        %4988 = vmatpush1.msra.mxu0 %v4987
        %4989 = vmatprep.subr.mxu0 0.0
        %v4990 = vand.u32 %v4031, 4294901760
        %v4991 = vsub.f32 %v4031, %v4990
        %v4992 = vand.u32 %v4991, 4294901760
        %4993 = vmatpush1.msra.mxu0 %v4992
        %4994 = vmatprep.subr.mxu0 0.0
        %4995 = vmatpush1.msra.mxu0 0.0
        %4996 = vmatprep.subr.mxu0 0.0
        %4997 = vmatpush1.msra.mxu0 0.0
        %4998 = vmatprep.subr.mxu0 0.0
        %4999 = vmatpush1.msra.mxu0 0.0
        %5000 = vmatprep.subr.mxu0 0.0
        %5001 = vmatpush1.msra.mxu0 0.0
        %5002 = vmatprep.subr.mxu0 0.0
        %5003 = vmatpush1.msra.mxu0 0.0
        %5004 = vmatprep.subr.mxu0 0.0
        %5005 = vmatpush1.msra.mxu0 0.0
        %5006 = vmatprep.subr.mxu0 0.0
        %5007 = vmatpush1.msra.mxu0 0.0
        %5008 = vmatprep.subr.mxu0 0.0
        %5009 = vmatpush1.msra.mxu0 0.0
        %5010 = vmatprep.subr.mxu0 0.0
        %5011 = vmatpush1.msra.mxu0 0.0
        %5012 = vmatprep.subr.mxu0 0.0
        %5013 = vmatpush1.msra.mxu0 0.0
        %5014 = vmatprep.subr.mxu0 0.0
        %5015 = vmatpush1.msra.mxu0 0.0
        %5016 = vmatprep.subr.mxu0 0.0
        %5017 = vmatpush1.msra.mxu0 0.0
        %5018 = vmatprep.subr.mxu0 0.0
        %5019 = vmatpush1.msra.mxu0 0.0
        %5020 = vmatprep.subr.mxu0 0.0
        %5021 = vmatpush1.msra.mxu0 0.0
        %5022 = vmatprep.subr.mxu0 0.0
        %5023 = vmatpush1.msra.mxu0 0.0
        %5024 = vmatprep.subr.mxu0 0.0
        %5025 = vmatpush1.msra.mxu0 0.0
        %5026 = vmatprep.subr.mxu0 0.0
        %5027 = vmatpush1.msra.mxu0 0.0
        %5028 = vmatprep.subr.mxu0 0.0
        %5029 = vmatpush1.msra.mxu0 0.0
        %5030 = vmatprep.subr.mxu0 0.0
        %5031 = vmatpush1.msra.mxu0 0.0
        %5032 = vmatprep.subr.mxu0 0.0
        %5033 = vmatpush1.msra.mxu0 0.0
        %5034 = vmatprep.subr.mxu0 0.0
        %5035 = vmatpush1.msra.mxu0 0.0
        %5036 = vmatprep.subr.mxu0 0.0
        %5037 = vmatpush1.msra.mxu0 0.0
        %5038 = vmatprep.subr.mxu0 0.0
        %5039 = vmatpush1.msra.mxu0 0.0
        %5040 = vmatprep.subr.mxu0 0.0
        %5041 = vmatpush1.msra.mxu0 0.0
        %5042 = vmatprep.subr.mxu0 0.0
        %5043 = vmatpush1.msra.mxu0 0.0
        %5044 = vmatprep.subr.mxu0 0.0
        %5045 = vmatpush1.msra.mxu0 0.0
        %5046 = vmatprep.subr.mxu0 0.0
        %5047 = vmatpush1.msra.mxu0 0.0
        %5048 = vmatprep.subr.mxu0 0.0
        %5049 = vmatpush1.msra.mxu0 0.0
        %5050 = vmatprep.subr.mxu0 0.0
        %5051 = vmatpush1.msra.mxu0 0.0
        %5052 = vmatprep.subr.mxu0 0.0
        %5053 = vmatpush1.msra.mxu0 0.0
        %5054 = vmatprep.mubr.f32.mxu0 0.0
        %v5055 = vand.u32 %v4639, 4294901760
        %5056 = vmatmul.mubr.f32.gmra.mrb[0].mxu0 %v5055
        %v5057 = vpop.f32.mrb[0].mxu0
        %v5058 = vadd.f32 %v4973, %v5057
        %v5059 = vpop.f32.mrb[0].mxu0
        %5060 = vmatprep.mubr.f32.mxu0 0.0
        %v5061 = vand.u32 %v4642, 4294901760
        %5062 = vmatmul.mubr.f32.gmra.mrb[0].mxu0 %v5061
        %v5063 = vpop.f32.mrb[0].mxu0
        %v5064 = vadd.f32 %v4981, %v5063
        %v5065 = vpop.f32.mrb[0].mxu0
        %5066 = vdwg.mxu0
        %5067 = vmatprep.subr.mxu0 0.0
        %v5068 = vand.u32 %v4030, 4294901760
        %5069 = vmatpush1.msra.mxu0 %v5068
        %5070 = vmatprep.subr.mxu0 0.0
        %v5071 = vand.u32 %v4031, 4294901760
        %5072 = vmatpush1.msra.mxu0 %v5071
        %5073 = vmatprep.subr.mxu0 0.0
        %5074 = vmatpush1.msra.mxu0 0.0
        %5075 = vmatprep.subr.mxu0 0.0
        %5076 = vmatpush1.msra.mxu0 0.0
        %5077 = vmatprep.subr.mxu0 0.0
        %5078 = vmatpush1.msra.mxu0 0.0
        %5079 = vmatprep.subr.mxu0 0.0
        %5080 = vmatpush1.msra.mxu0 0.0
        %5081 = vmatprep.subr.mxu0 0.0
        %5082 = vmatpush1.msra.mxu0 0.0
        %5083 = vmatprep.subr.mxu0 0.0
        %5084 = vmatpush1.msra.mxu0 0.0
        %5085 = vmatprep.subr.mxu0 0.0
        %5086 = vmatpush1.msra.mxu0 0.0
        %5087 = vmatprep.subr.mxu0 0.0
        %5088 = vmatpush1.msra.mxu0 0.0
        %5089 = vmatprep.subr.mxu0 0.0
        %5090 = vmatpush1.msra.mxu0 0.0
        %5091 = vmatprep.subr.mxu0 0.0
        %5092 = vmatpush1.msra.mxu0 0.0
        %5093 = vmatprep.subr.mxu0 0.0
        %5094 = vmatpush1.msra.mxu0 0.0
        %5095 = vmatprep.subr.mxu0 0.0
        %5096 = vmatpush1.msra.mxu0 0.0
        %5097 = vmatprep.subr.mxu0 0.0
        %5098 = vmatpush1.msra.mxu0 0.0
        %5099 = vmatprep.subr.mxu0 0.0
        %5100 = vmatpush1.msra.mxu0 0.0
        %5101 = vmatprep.subr.mxu0 0.0
        %5102 = vmatpush1.msra.mxu0 0.0
        %5103 = vmatprep.subr.mxu0 0.0
        %5104 = vmatpush1.msra.mxu0 0.0
        %5105 = vmatprep.subr.mxu0 0.0
        %5106 = vmatpush1.msra.mxu0 0.0
        %5107 = vmatprep.subr.mxu0 0.0
        %5108 = vmatpush1.msra.mxu0 0.0
        %5109 = vmatprep.subr.mxu0 0.0
        %5110 = vmatpush1.msra.mxu0 0.0
        %5111 = vmatprep.subr.mxu0 0.0
        %5112 = vmatpush1.msra.mxu0 0.0
        %5113 = vmatprep.subr.mxu0 0.0
        %5114 = vmatpush1.msra.mxu0 0.0
        %5115 = vmatprep.subr.mxu0 0.0
        %5116 = vmatpush1.msra.mxu0 0.0
        %5117 = vmatprep.subr.mxu0 0.0
        %5118 = vmatpush1.msra.mxu0 0.0
        %5119 = vmatprep.subr.mxu0 0.0
        %5120 = vmatpush1.msra.mxu0 0.0
        %5121 = vmatprep.subr.mxu0 0.0
        %5122 = vmatpush1.msra.mxu0 0.0
        %5123 = vmatprep.subr.mxu0 0.0
        %5124 = vmatpush1.msra.mxu0 0.0
        %5125 = vmatprep.subr.mxu0 0.0
        %5126 = vmatpush1.msra.mxu0 0.0
        %5127 = vmatprep.subr.mxu0 0.0
        %5128 = vmatpush1.msra.mxu0 0.0
        %5129 = vmatprep.subr.mxu0 0.0
        %5130 = vmatpush1.msra.mxu0 0.0
        %5131 = vmatprep.subr.mxu0 0.0
        %5132 = vmatpush1.msra.mxu0 0.0
        %5133 = vmatprep.mubr.f32.mxu0 0.0
        %v5134 = vand.u32 %v4639, 4294901760
        %5135 = vmatmul.mubr.f32.gmra.mrb[0].mxu0 %v5134
        %v5136 = vpop.f32.mrb[0].mxu0
        %v5137 = vadd.f32 %v5058, %v5136
        %v5138 = vpop.f32.mrb[0].mxu0
        %5139 = vmatprep.mubr.f32.mxu0 0.0
        %v5140 = vand.u32 %v4642, 4294901760
        %5141 = vmatmul.mubr.f32.gmra.mrb[0].mxu0 %v5140
        %v5142 = vpop.f32.mrb[0].mxu0
        %v5143 = vadd.f32 %v5064, %v5142
        %v5144 = vpop.f32.mrb[0].mxu0
        %5145 = vdwg.mxu0
        %v5146 = vpack.c.bf16 %v5143, %v5137
        %5147 = vrot.lane.b32.xlu0 %v1395, 104
        %v5148 = vpop.permute.xlu0 %5147
        %v5150 = vsel %vm269, %v5148, 0
        %v5153 = vsel %vm269, %v5146, 0
        %5155 = vmatprep.subr.bf16.mxu0 0
        %5156 = vmatpush1.bf16.xpose.msra.mxu0 %v5153
        %5157 = vmatprep.subr.bf16.mxu0 0
        %5158 = vmatpush1.bf16.xpose.msra.mxu0 0
        %5159 = vmatprep.subr.bf16.mxu0 0
        %5160 = vmatpush1.bf16.xpose.msra.mxu0 0
        %5161 = vmatprep.subr.bf16.mxu0 0
        %5162 = vmatpush1.bf16.xpose.msra.mxu0 0
        %5163 = vmatprep.subr.bf16.mxu0 0
        %5164 = vmatpush1.bf16.xpose.msra.mxu0 0
        %5165 = vmatprep.subr.bf16.mxu0 0
        %5166 = vmatpush1.bf16.xpose.msra.mxu0 0
        %5167 = vmatprep.subr.bf16.mxu0 0
        %5168 = vmatpush1.bf16.xpose.msra.mxu0 0
        %5169 = vmatprep.subr.bf16.mxu0 0
        %5170 = vmatpush1.bf16.xpose.msra.mxu0 0
        %5171 = vmatprep.subr.bf16.mxu0 0
        %5172 = vmatpush1.bf16.xpose.msra.mxu0 0
        %5173 = vmatprep.subr.bf16.mxu0 0
        %5174 = vmatpush1.bf16.xpose.msra.mxu0 0
        %5175 = vmatprep.subr.bf16.mxu0 0
        %5176 = vmatpush1.bf16.xpose.msra.mxu0 0
        %5177 = vmatprep.subr.bf16.mxu0 0
        %5178 = vmatpush1.bf16.xpose.msra.mxu0 0
        %5179 = vmatprep.subr.bf16.mxu0 0
        %5180 = vmatpush1.bf16.xpose.msra.mxu0 0
        %5181 = vmatprep.subr.bf16.mxu0 0
        %5182 = vmatpush1.bf16.xpose.msra.mxu0 0
        %5183 = vmatprep.subr.bf16.mxu0 0
        %5184 = vmatpush1.bf16.xpose.msra.mxu0 0
        %5185 = vmatprep.subr.bf16.mxu0 0
        %5186 = vmatpush1.bf16.xpose.msra.mxu0 0
        %5187 = vmatprep.mubr.bf16.mxu0 0
        %5188 = vmatmul.mubr.bf16.gmra.mrb[0].mxu0 %v5150
        %v5189 = vpop.f32.mrb[0].mxu0
        %v5190 = vadd.f32 0.0, %v5189
        %v5191 = vpop.f32.mrb[0].mxu0
        %v5192 = vpop.f32.mrb[0].mxu0
        %v5193 = vadd.f32 0.0, %v5192
        %v5194 = vpop.f32.mrb[0].mxu0
        %5195 = vdwg.mxu0
        %v5196 = vmul.f32 %v5190, 0.35355338
        %v5197 = vmul.f32 %v5193, 0.35355338
        %v5198 = vsel %vm1449, %v5196, -1e+30
        %v5199 = vsel %vm1450, %v5197, -1e+30
        %v5200 = vsel %vm840, %v5198, -inf
        %5201 = vmax.xlane.f32.xlu0 %v5200
        %v5202 = vpop.xlane.xlu0 %5201
        %v5203 = vsel %vm840, %v5199, -inf
        %5204 = vmax.xlane.f32.xlu0 %v5203
        %v5205 = vpop.xlane.xlu0 %5204
        %v5206 = vsub.f32 %v5198, %v5202
        %v5207 = vsub.f32 %v5199, %v5205
        %v5208 = vmul.f32 %v5206, 1.442695
        %v5209 = vpow.pop %v5208
        %v5210 = vmul.f32 %v5207, 1.442695
        %v5211 = vpow.pop %v5210
        %v5212 = vsel %vm840, %v5209, 0.0
        %5213 = vadd.xlane.f32.xlu0 %v5212
        %v5214 = vpop.xlane.xlu0 %5213
        %v5215 = vsel %vm840, %v5211, 0.0
        %5216 = vadd.xlane.f32.xlu0 %v5215
        %v5217 = vpop.xlane.xlu0 %5216
        %v5218 = vrcp.pop %v5214
        %v5219 = vmul.f32 %v5209, %v5218
        %v5220 = vrcp.pop %v5217
        %v5221 = vmul.f32 %v5211, %v5220
        %v5222 = vpack.c.bf16 %v5221, %v5219
        %5223 = vrot.lane.b32.xlu0 %v1395, 40
        %v5224 = vpop.permute.xlu0 %5223
        %v5227 = vsel %vm840, %v5222, 0
        %5229 = vmatprep.subr.bf16.mxu0 0
        %5230 = vmatpush1.bf16.msra.mxu0 %v5224
        %5231 = vmatprep.subr.bf16.mxu0 0
        %5232 = vmatpush1.bf16.msra.mxu0 0
        %5233 = vmatprep.subr.bf16.mxu0 0
        %5234 = vmatpush1.bf16.msra.mxu0 0
        %5235 = vmatprep.subr.bf16.mxu0 0
        %5236 = vmatpush1.bf16.msra.mxu0 0
        %5237 = vmatprep.subr.bf16.mxu0 0
        %5238 = vmatpush1.bf16.msra.mxu0 0
        %5239 = vmatprep.subr.bf16.mxu0 0
        %5240 = vmatpush1.bf16.msra.mxu0 0
        %5241 = vmatprep.subr.bf16.mxu0 0
        %5242 = vmatpush1.bf16.msra.mxu0 0
        %5243 = vmatprep.subr.bf16.mxu0 0
        %5244 = vmatpush1.bf16.msra.mxu0 0
        %5245 = vmatprep.subr.bf16.mxu0 0
        %5246 = vmatpush1.bf16.msra.mxu0 0
        %5247 = vmatprep.subr.bf16.mxu0 0
        %5248 = vmatpush1.bf16.msra.mxu0 0
        %5249 = vmatprep.subr.bf16.mxu0 0
        %5250 = vmatpush1.bf16.msra.mxu0 0
        %5251 = vmatprep.subr.bf16.mxu0 0
        %5252 = vmatpush1.bf16.msra.mxu0 0
        %5253 = vmatprep.subr.bf16.mxu0 0
        %5254 = vmatpush1.bf16.msra.mxu0 0
        %5255 = vmatprep.subr.bf16.mxu0 0
        %5256 = vmatpush1.bf16.msra.mxu0 0
        %5257 = vmatprep.subr.bf16.mxu0 0
        %5258 = vmatpush1.bf16.msra.mxu0 0
        %5259 = vmatprep.subr.bf16.mxu0 0
        %5260 = vmatpush1.bf16.msra.mxu0 0
        %5261 = vmatprep.mubr.bf16.mxu0 0
        %5262 = vmatmul.mubr.bf16.gmra.mrb[0].mxu0 %v5227
        %v5263 = vpop.f32.mrb[0].mxu0
        %v5264 = vadd.f32 0.0, %v5263
        %v5265 = vpop.f32.mrb[0].mxu0
        %v5266 = vpop.f32.mrb[0].mxu0
        %v5267 = vadd.f32 0.0, %v5266
        %v5268 = vpop.f32.mrb[0].mxu0
        %5269 = vdwg.mxu0
        %5272 = vrot.lane.b32.xlu0 %v5264, 24
        %v5273 = vpop.permute.xlu0 %5272
        %5274 = vrot.lane.b32.xlu0 %v5267, 24
        %v5275 = vpop.permute.xlu0 %5274
        %vm5278 = vcmask 261312
        %5279 = vst.msk [vmem:[#allocation2] sm:$0xff] %vm5278, %v5273
        %5280 = vst.msk [vmem:[#allocation2 + $0x8] sm:$0xff] %vm5278, %v5275
        %v5281 = vld [vmem:[#allocation2] sm:$0xff]
        %v5282 = vld [vmem:[#allocation2 + $0x8] sm:$0xff]
        %v5283 = vpack.c.bf16 %v5282, %v5281
        %v5284 = vld [vmem:[%s3] sm:$0xf]
        %v5285 = vld [vmem:[%s3 + $0x4] sm:$0xf]
        %v5286 = vld [vmem:[%s3 + $0x8] sm:$0xf]
        %v5287 = vld [vmem:[%s3 + $0xc] sm:$0xf]
        %v5292 = vunpack.c.l.b16 %v5284
        %v5293 = vunpack.c.l.b16 %v5285
        %v5294 = vunpack.c.l.b16 %v5286
        %v5295 = vunpack.c.l.b16 %v5287
        %v5296 = vpack.c.b16 %v5293, %v5292
        %v5297 = vpack.c.b16 %v5295, %v5294
        %v5301 = vsel %vm216, %v5283, 0
        %5303 = vmatprep.subr.bf16.mxu0 0
        %5304 = vmatpush1.bf16.msra.mxu0 %v5296
        %5305 = vmatprep.subr.bf16.mxu0 0
        %5306 = vmatpush1.bf16.msra.mxu0 %v5297
        %5307 = vmatprep.subr.bf16.mxu0 0
        %5308 = vmatpush1.bf16.msra.mxu0 0
        %5309 = vmatprep.subr.bf16.mxu0 0
        %5310 = vmatpush1.bf16.msra.mxu0 0
        %5311 = vmatprep.subr.bf16.mxu0 0
        %5312 = vmatpush1.bf16.msra.mxu0 0
        %5313 = vmatprep.subr.bf16.mxu0 0
        %5314 = vmatpush1.bf16.msra.mxu0 0
        %5315 = vmatprep.subr.bf16.mxu0 0
        %5316 = vmatpush1.bf16.msra.mxu0 0
        %5317 = vmatprep.subr.bf16.mxu0 0
        %5318 = vmatpush1.bf16.msra.mxu0 0
        %5319 = vmatprep.subr.bf16.mxu0 0
        %5320 = vmatpush1.bf16.msra.mxu0 0
        %5321 = vmatprep.subr.bf16.mxu0 0
        %5322 = vmatpush1.bf16.msra.mxu0 0
        %5323 = vmatprep.subr.bf16.mxu0 0
        %5324 = vmatpush1.bf16.msra.mxu0 0
        %5325 = vmatprep.subr.bf16.mxu0 0
        %5326 = vmatpush1.bf16.msra.mxu0 0
        %5327 = vmatprep.subr.bf16.mxu0 0
        %5328 = vmatpush1.bf16.msra.mxu0 0
        %5329 = vmatprep.subr.bf16.mxu0 0
        %5330 = vmatpush1.bf16.msra.mxu0 0
        %5331 = vmatprep.subr.bf16.mxu0 0
        %5332 = vmatpush1.bf16.msra.mxu0 0
        %5333 = vmatprep.subr.bf16.mxu0 0
        %5334 = vmatpush1.bf16.msra.mxu0 0
        %5335 = vmatprep.mubr.bf16.mxu0 0
        %5336 = vmatmul.mubr.bf16.gmra.mrb[0].mxu0 %v5301
        %v5337 = vpop.f32.mrb[0].mxu0
        %v5338 = vadd.f32 0.0, %v5337
        %v5339 = vpop.f32.mrb[0].mxu0
        %v5340 = vpop.f32.mrb[0].mxu0
        %v5341 = vadd.f32 0.0, %v5340
        %v5342 = vpop.f32.mrb[0].mxu0
        %5343 = vdwg.mxu0
        %v5344 = vadd.f32 %v197, %v5338
        %v5345 = vadd.f32 %v198, %v5341
        %5346 = vst.msk [vmem:[%s190] sm:$0xff] %vm216, %v5344
        %5347 = vst.msk [vmem:[%s190 + $0x8] sm:$0xff] %vm216, %v5345
        %s5348 = sand.u32 %s115, 1
        %s5349 = scalar_lea.sflag [#allocation4], %s5348
        %s5350 = sand.u32 %s115, 1
        %s5351 = smul.addr %s5350, 16
        %s5352 = scalar_lea.vmem [#allocation3], %s5351
        // Predicated region
        $region37: #{tpu_custom_call.1} parent=35 // pred_check
          %p5353 = pneg %p125
        $region38: #{tpu_custom_call.1} parent=35 // pred_check_branch
          %5355 = sbr.rel (%p5353) target = $region40
        $region39: #{tpu_custom_call.1} parent=35 // pred_region
          %s5357 = ssub.s32 256, 256
          %5358 = vsyncadd %s5349, %s5357
          %s5359 = smul.addr %s18, 2
          %s5360 = smul.addr %s5359, 128
          %s5361 = scalar_lea.hbm %s4, %s5360
          %s5362 = sshll.u32 %s5352, 4
          %s5363 = int_to_ptr.vmem [resolvable:$true] %s5362
          %5368 = dma.vmem_to_hbm [thread:$0]  %s5363, 256, %s5361, %s5349, 128, 128, 8
        $region40: #{tpu_custom_call.1} parent=35 // pred_fallthru
          _
      $region36: #{tpu_custom_call.1} parent=5 // pred_fallthru
        _
      %p5369 = scmp.le.s32.totalorder 2, %s13
      // Predicated region
      $region41: #{tpu_custom_call.1} parent=5 // pred_check
        %p5370 = pneg %p5369
      $region42: #{tpu_custom_call.1} parent=5 // pred_check_branch
        %5372 = sbr.rel (%p5370) target = $region44
      $region43: #{tpu_custom_call.1} parent=5 // pred_region
        %s5373 = ssub.s32 %s13, 2
        // Predicated region
        $region45: #{tpu_custom_call.1} parent=43 // pred_check
          %p5374 = pneg %p131
        $region46: #{tpu_custom_call.1} parent=43 // pred_check_branch
          %5376 = sbr.rel (%p5374) target = $region48
        $region47: #{tpu_custom_call.1} parent=43 // pred_region
          %s5377 = sand.u32 %s116, 1
          %s5378 = scalar_lea.sflag [#allocation4], %s5377
          %s5379 = sand.u32 %s116, 1
          %s5380 = smul.addr %s5379, 16
          %s5381 = scalar_lea.vmem [#allocation3], %s5380
          %5382 = dma.done %s5378, 256
        $region48: #{tpu_custom_call.1} parent=43 // pred_fallthru
          _
      $region44: #{tpu_custom_call.1} parent=5 // pred_fallthru
        _
    $region6: #{tpu_custom_call.1} parent=1 // loop_footer
      %s17 = sadd.s32 1, %s13
    $region7: #{tpu_custom_call.1} parent=1 // loop_footer_branch
      %12 = sbr.rel target = $region3
    $region8: #{tpu_custom_call.1} parent=1 // loop_exit
      _
    %5383 = vsyncpa [#allocation4], 1
    %s5384 = scalar_lea.sflag [#allocation4], 1
    %5385 = vsyncpa %s5384, 1

</llo_original>
